<compile_context>
chip_gen: v7x
topology: tpu7x:2x2x1
jax: 0.10.0
libtpu: 0.0.40
codegen_flags: <defaults>
</compile_context>

<pallas_src>
import jax
import jax.numpy as jnp
from jax.experimental import pallas as pl
from jax.experimental.pallas import tpu as pltpu


def _round_up(x, m):
    return (x + m - 1) // m * m


# ----------------------------- Pallas kernel ------------------------------- #
def _transr_kernel(pos_r_ref, neg_r_ref,            # scalar-prefetch (SMEM) indices
                   ph_ref, pt_ref, nh_ref, nt_ref,  # (BB, E) entity tiles
                   proj_ref,                        # (T, R, E): VMEM-resident or HBM
                   out_ref,                         # (BB, 4*R) packed projections
                   pproj_buf, nproj_buf, sem):      # VMEM scratch + DMA sems
    BB, R, E = pproj_buf.shape
    base = pl.program_id(0) * BB

    # ---- gather the per-sample projection matrices into VMEM scratch ------
    # proj_ref is either the VMEM-resident full table (small relation vocab ->
    # on-chip copies, the table crossed HBM only once) or the raw HBM table.
    @pl.loop(0, BB)
    def _start(j):
        rp = pos_r_ref[base + j]
        rn = neg_r_ref[base + j]
        pltpu.make_async_copy(proj_ref.at[rp], pproj_buf.at[j], sem.at[0]).start()
        pltpu.make_async_copy(proj_ref.at[rn], nproj_buf.at[j], sem.at[1]).start()

    @pl.loop(0, BB)
    def _wait(j):
        # Every copy on a given semaphore moves the same number of bytes, so
        # one wait per issued copy drains the semaphore correctly.
        pltpu.make_async_copy(proj_ref.at[0], pproj_buf.at[j], sem.at[0]).wait()
        pltpu.make_async_copy(proj_ref.at[0], nproj_buf.at[j], sem.at[1]).wait()

    pproj = pproj_buf[...].astype(jnp.float32)      # (BB, R, E)
    nproj = nproj_buf[...].astype(jnp.float32)
    ph = ph_ref[...].astype(jnp.float32)            # (BB, E)
    pt = pt_ref[...].astype(jnp.float32)
    nh = nh_ref[...].astype(jnp.float32)
    nt = nt_ref[...].astype(jnp.float32)

    # TransR projection, fused per projection matrix: each gathered proj tile
    # is read once and feeds both head & tail reductions (VPU mul + XLU reduce).
    ph_p = jnp.sum(pproj * ph[:, None, :], axis=-1)  # (BB, R)
    pt_p = jnp.sum(pproj * pt[:, None, :], axis=-1)
    nh_p = jnp.sum(nproj * nh[:, None, :], axis=-1)
    nt_p = jnp.sum(nproj * nt[:, None, :], axis=-1)

    # Single lane-dense output slab (for R=32 this is exactly 128 lanes).
    packed = jnp.concatenate([ph_p, pt_p, nh_p, nt_p], axis=-1)   # (BB, 4*R)
    out_ref[...] = packed.astype(out_ref.dtype)


# ------------------------------- Wrapper ------------------------------------ #
def transr_forward(params, pos_h, pos_t, pos_r, neg_h, neg_t, neg_r,
                   *, l1_flag=True, batch_block=None, force_hbm_table=False):
    ent_emb = params["ent_embeddings"]    # (entity_total, E)
    rel_emb = params["rel_embeddings"]    # (relation_total, R)
    proj_emb = params["proj_embeddings"]  # (relation_total, R * E)

    E = ent_emb.shape[1]
    R = rel_emb.shape[1]
    T = proj_emb.shape[0]
    B = pos_h.shape[0]

    if batch_block is None:
        batch_block = min(128, _round_up(B, 8))
    BB = _round_up(batch_block, 8)
    B_pad = _round_up(B, BB)
    pad = B_pad - B

    # Entity-row gathers (rows of size E) are cheap glue — keep in plain JAX.
    ph_e = ent_emb[pos_h]
    pt_e = ent_emb[pos_t]
    nh_e = ent_emb[neg_h]
    nt_e = ent_emb[neg_t]
    pos_r_idx = pos_r.astype(jnp.int32)
    neg_r_idx = neg_r.astype(jnp.int32)
    if pad:
        pad2 = ((0, pad), (0, 0))
        ph_e = jnp.pad(ph_e, pad2)
        pt_e = jnp.pad(pt_e, pad2)
        nh_e = jnp.pad(nh_e, pad2)
        nt_e = jnp.pad(nt_e, pad2)
        pos_r_idx = jnp.pad(pos_r_idx, (0, pad))   # row 0 is a valid dummy index
        neg_r_idx = jnp.pad(neg_r_idx, (0, pad))

    # Free (contiguous) reshape; no per-sample (B, R, E) materialisation in HBM.
    proj_table = proj_emb.reshape(T, R, E)
    itemsize = proj_table.dtype.itemsize

    table_bytes = T * R * E * itemsize                          # whole proj table
    scratch_bytes = 2 * BB * R * E * itemsize                   # gather scratch
    tiles_bytes = 2 * (4 * BB * E * ph_e.dtype.itemsize         # entity tiles (x2 buf)
                       + BB * 4 * R * 4)                        # output slab (x2 buf)

    # Resident path: keep the whole proj table in VMEM (constant block index ->
    # fetched from HBM once, reused by every grid step / sample).  Fall back to
    # per-sample HBM gathers only when the table does not fit.
    resident = (not force_hbm_table) and \
        (2 * table_bytes + scratch_bytes + tiles_bytes) <= 40 * 1024 * 1024

    if resident:
        proj_spec = pl.BlockSpec((T, R, E), lambda i, pr, nr: (0, 0, 0))
        est = 2 * table_bytes + scratch_bytes + tiles_bytes
    else:
        proj_spec = pl.BlockSpec(memory_space=pl.ANY)
        est = scratch_bytes + tiles_bytes

    vmem_limit = int(min(max(32 * 1024 * 1024, est + est // 2), 64 * 1024 * 1024))

    grid = (B_pad // BB,)
    emb_spec = pl.BlockSpec((BB, E), lambda i, pr, nr: (i, 0))
    out_spec = pl.BlockSpec((BB, 4 * R), lambda i, pr, nr: (i, 0))

    slab = pl.pallas_call(
        _transr_kernel,
        out_shape=jax.ShapeDtypeStruct((B_pad, 4 * R), jnp.float32),
        grid_spec=pltpu.PrefetchScalarGridSpec(
            num_scalar_prefetch=2,
            grid=grid,
            in_specs=[emb_spec, emb_spec, emb_spec, emb_spec, proj_spec],
            out_specs=out_spec,
            scratch_shapes=[
                pltpu.VMEM((BB, R, E), proj_table.dtype),
                pltpu.VMEM((BB, R, E), proj_table.dtype),
                pltpu.SemaphoreType.DMA((2,)),
            ],
        ),
        compiler_params=pltpu.CompilerParams(
            dimension_semantics=("parallel",),
            vmem_limit_bytes=vmem_limit),
    )(pos_r_idx, neg_r_idx, ph_e, pt_e, nh_e, nt_e, proj_table)

    slab = slab[:B]
    ph_p = slab[:, 0 * R:1 * R]
    pt_p = slab[:, 1 * R:2 * R]
    nh_p = slab[:, 2 * R:3 * R]
    nt_p = slab[:, 3 * R:4 * R]

    # Translation score — tiny (B, R) elementwise + reduce; computed in the
    # wrapper from the packed slab (avoids narrow masked-store score outputs).
    pr_e = rel_emb[pos_r].astype(jnp.float32)
    nr_e = rel_emb[neg_r].astype(jnp.float32)
    pos_d = ph_p + pr_e - pt_p
    neg_d = nh_p + nr_e - nt_p
    if l1_flag:
        pos = jnp.sum(jnp.abs(pos_d), axis=1)
        neg = jnp.sum(jnp.abs(neg_d), axis=1)
    else:
        pos = jnp.sum(pos_d * pos_d, axis=1)
        neg = jnp.sum(neg_d * neg_d, axis=1)
    return pos, neg, ph_p, pt_p, nh_p, nt_p


# ---------------------- Deterministic parameter init ------------------------ #
def init_params(key, entity_total, relation_total, ent_size, rel_size):
    # TODO(synk): the original module loads pretrained TransE weights from a
    # pickle file; here we synthesise equivalent normalized embeddings instead.
    k_ent, k_rel, k_proj = jax.random.split(key, 3)
    ent_w = jax.random.normal(k_ent, (entity_total, ent_size), jnp.float32)
    ent_w = ent_w / jnp.linalg.norm(ent_w, axis=1, keepdims=True)
    rel_w = jax.random.normal(k_rel, (relation_total, rel_size), jnp.float32)
    rel_w = rel_w / jnp.linalg.norm(rel_w, axis=1, keepdims=True)
    # proj_weight: nn.init.eye_ on (rel_size, ent_size), flattened and tiled;
    # add a small per-relation perturbation so row gathers are testable.
    eye = jnp.eye(rel_size, ent_size, dtype=jnp.float32).reshape(-1)
    proj_w = jnp.tile(eye[None, :], (relation_total, 1))
    proj_w = proj_w + 0.01 * jax.random.normal(k_proj, proj_w.shape, jnp.float32)
    return {"ent_embeddings": ent_w,
            "rel_embeddings": rel_w,
            "proj_embeddings": proj_w}


# ---------------------------- Pure-JAX reference ----------------------------- #
def transr_forward_ref(params, pos_h, pos_t, pos_r, neg_h, neg_t, neg_r,
                       *, l1_flag=True):
    ent_emb = params["ent_embeddings"]
    rel_emb = params["rel_embeddings"]
    proj_emb = params["proj_embeddings"]
    E = ent_emb.shape[1]
    R = rel_emb.shape[1]

    def proj(x, p):
        return jnp.einsum("bre,be->br", p.reshape(-1, R, E), x)

    ph = proj(ent_emb[pos_h], proj_emb[pos_r])
    pt = proj(ent_emb[pos_t], proj_emb[pos_r])
    nh = proj(ent_emb[neg_h], proj_emb[neg_r])
    nt = proj(ent_emb[neg_t], proj_emb[neg_r])
    pr = rel_emb[pos_r]
    nr = rel_emb[neg_r]
    if l1_flag:
        pos = jnp.sum(jnp.abs(ph + pr - pt), axis=1)
        neg = jnp.sum(jnp.abs(nh + nr - nt), axis=1)
    else:
        pos = jnp.sum((ph + pr - pt) ** 2, axis=1)
        neg = jnp.sum((nh + nr - nt) ** 2, axis=1)
    return pos, neg, ph, pt, nh, nt


if __name__ == "__main__":
    ENTITY_TOTAL = 64
    RELATION_TOTAL = 16
    ENT_SIZE = 32
    REL_SIZE = 32          # 4 * R = 128 -> exactly lane-dense output slab
    BATCH = 24             # deliberately NOT a multiple of the tile (tests padding)
    BATCH_BLOCK = 16       # -> padded batch 32, grid = (2,)

    key = jax.random.PRNGKey(0)
    k_par, k_ph, k_pt, k_pr, k_nh, k_nt, k_nr = jax.random.split(key, 7)
    params = init_params(k_par, ENTITY_TOTAL, RELATION_TOTAL, ENT_SIZE, REL_SIZE)

    pos_h = jax.random.randint(k_ph, (BATCH,), 0, ENTITY_TOTAL, jnp.int32)
    pos_t = jax.random.randint(k_pt, (BATCH,), 0, ENTITY_TOTAL, jnp.int32)
    pos_r = jax.random.randint(k_pr, (BATCH,), 0, RELATION_TOTAL, jnp.int32)
    neg_h = jax.random.randint(k_nh, (BATCH,), 0, ENTITY_TOTAL, jnp.int32)
    neg_t = jax.random.randint(k_nt, (BATCH,), 0, ENTITY_TOTAL, jnp.int32)
    neg_r = jax.random.randint(k_nr, (BATCH,), 0, RELATION_TOTAL, jnp.int32)

    # Exercise both L1/L2 scoring and both table paths (VMEM-resident + HBM gather).
    for l1_flag in (True, False):
        for force_hbm in (False, True):
            outs = transr_forward(params, pos_h, pos_t, pos_r, neg_h, neg_t, neg_r,
                                  l1_flag=l1_flag, batch_block=BATCH_BLOCK,
                                  force_hbm_table=force_hbm)
            outs = jax.block_until_ready(outs)
            refs = transr_forward_ref(params, pos_h, pos_t, pos_r,
                                      neg_h, neg_t, neg_r, l1_flag=l1_flag)
            for name, o, r in zip(("pos", "neg", "ph_p", "pt_p", "nh_p", "nt_p"),
                                  outs, refs):
                assert o.shape == r.shape, (name, o.shape, r.shape)
                assert jnp.allclose(o, r, atol=1e-4, rtol=1e-4), (
                    name, l1_flag, force_hbm, float(jnp.max(jnp.abs(o - r))))

    print("KERNEL_OK")
</pallas_src>

<mosaic_0001>
module attributes {stable_mosaic.version = 11 : i64} {
  func.func @_transr_kernel(%arg0: i32, %arg1: memref<32xi32, #tpu.memory_space<smem>>, %arg2: memref<32xi32, #tpu.memory_space<smem>>, %arg3: memref<16x32xf32, #tpu.memory_space<vmem>>, %arg4: memref<16x32xf32, #tpu.memory_space<vmem>>, %arg5: memref<16x32xf32, #tpu.memory_space<vmem>>, %arg6: memref<16x32xf32, #tpu.memory_space<vmem>>, %arg7: memref<16x32x32xf32, #tpu.memory_space<vmem>>, %arg8: memref<16x128xf32, #tpu.memory_space<vmem>>, %arg9: memref<16x32x32xf32, #tpu.memory_space<vmem>>, %arg10: memref<16x32x32xf32, #tpu.memory_space<vmem>>, %arg11: memref<2x!tpu.dma_semaphore, #tpu.memory_space<semaphore_mem>>) attributes {dimension_semantics = [#tpu.dimension_semantics<parallel>], iteration_bounds = array<i64: 2>, scalar_prefetch = 2 : i64, scratch_operands = 3 : i64, tpu.core_type = #tpu.core_type<tc>, window_params = [{transform_indices = @transform_0, window_bounds = array<i64: 16, 32>}, {transform_indices = @transform_1, window_bounds = array<i64: 16, 32>}, {transform_indices = @transform_2, window_bounds = array<i64: 16, 32>}, {transform_indices = @transform_3, window_bounds = array<i64: 16, 32>}, {pipeline_mode = #tpu.pipeline_mode<synchronous>, transform_indices = @transform_4, window_bounds = array<i64: 16, 32, 32>}, {transform_indices = @transform_5, window_bounds = array<i64: 16, 128>}]} {
    %c16_i32 = arith.constant 16 : i32
    %0 = arith.muli %arg0, %c16_i32 : i32
    %c0_i32 = arith.constant 0 : i32
    %c16_i32_0 = arith.constant 16 : i32
    %1 = arith.addi %c0_i32, %c16_i32_0 : i32
    %c1_i32 = arith.constant 1 : i32
    scf.for %arg12 = %c0_i32 to %1 step %c1_i32  : i32 {
      %c1_i32_24 = arith.constant 1 : i32
      %27 = arith.muli %arg12, %c1_i32_24 : i32
      %c0_i32_25 = arith.constant 0 : i32
      %28 = arith.addi %c0_i32_25, %27 : i32
      %29 = arith.addi %0, %28 : i32
      %30 = arith.index_cast %29 : i32 to index
      %31 = memref.load %arg1[%30] : memref<32xi32, #tpu.memory_space<smem>>
      %32 = arith.addi %0, %28 : i32
      %33 = arith.index_cast %32 : i32 to index
      %34 = memref.load %arg2[%33] : memref<32xi32, #tpu.memory_space<smem>>
      %c0_i32_26 = arith.constant 0 : i32
      %c0_i32_27 = arith.constant 0 : i32
      %c0_i32_28 = arith.constant 0 : i32
      %35 = tpu.memref_slice %arg7[%31, %c0_i32_27, %c0_i32_28] : memref<16x32x32xf32, #tpu.memory_space<vmem>> -> memref<1x32x32xf32, #tpu.memory_space<vmem>>
      %36 = tpu.memref_squeeze %35 : memref<1x32x32xf32, #tpu.memory_space<vmem>> -> memref<32x32xf32, #tpu.memory_space<vmem>>
      %c0_i32_29 = arith.constant 0 : i32
      %c0_i32_30 = arith.constant 0 : i32
      %37 = tpu.memref_slice %arg9[%28, %c0_i32_29, %c0_i32_30] : memref<16x32x32xf32, #tpu.memory_space<vmem>> -> memref<1x32x32xf32, #tpu.memory_space<vmem>>
      %38 = tpu.memref_squeeze %37 : memref<1x32x32xf32, #tpu.memory_space<vmem>> -> memref<32x32xf32, #tpu.memory_space<vmem>>
      %39 = tpu.memref_slice %arg11[%c0_i32_26] : memref<2x!tpu.dma_semaphore, #tpu.memory_space<semaphore_mem>> -> memref<1x!tpu.dma_semaphore, #tpu.memory_space<semaphore_mem>>
      %40 = tpu.memref_squeeze %39 : memref<1x!tpu.dma_semaphore, #tpu.memory_space<semaphore_mem>> -> memref<!tpu.dma_semaphore, #tpu.memory_space<semaphore_mem>>
      tpu.enqueue_dma source(%36 : memref<32x32xf32, #tpu.memory_space<vmem>>) target(%38 : memref<32x32xf32, #tpu.memory_space<vmem>>) target_semaphore(%40 : memref<!tpu.dma_semaphore, #tpu.memory_space<semaphore_mem>>)
      %c1_i32_31 = arith.constant 1 : i32
      %c0_i32_32 = arith.constant 0 : i32
      %c0_i32_33 = arith.constant 0 : i32
      %41 = tpu.memref_slice %arg7[%34, %c0_i32_32, %c0_i32_33] : memref<16x32x32xf32, #tpu.memory_space<vmem>> -> memref<1x32x32xf32, #tpu.memory_space<vmem>>
      %42 = tpu.memref_squeeze %41 : memref<1x32x32xf32, #tpu.memory_space<vmem>> -> memref<32x32xf32, #tpu.memory_space<vmem>>
      %c0_i32_34 = arith.constant 0 : i32
      %c0_i32_35 = arith.constant 0 : i32
      %43 = tpu.memref_slice %arg10[%28, %c0_i32_34, %c0_i32_35] : memref<16x32x32xf32, #tpu.memory_space<vmem>> -> memref<1x32x32xf32, #tpu.memory_space<vmem>>
      %44 = tpu.memref_squeeze %43 : memref<1x32x32xf32, #tpu.memory_space<vmem>> -> memref<32x32xf32, #tpu.memory_space<vmem>>
      %45 = tpu.memref_slice %arg11[%c1_i32_31] : memref<2x!tpu.dma_semaphore, #tpu.memory_space<semaphore_mem>> -> memref<1x!tpu.dma_semaphore, #tpu.memory_space<semaphore_mem>>
      %46 = tpu.memref_squeeze %45 : memref<1x!tpu.dma_semaphore, #tpu.memory_space<semaphore_mem>> -> memref<!tpu.dma_semaphore, #tpu.memory_space<semaphore_mem>>
      tpu.enqueue_dma source(%42 : memref<32x32xf32, #tpu.memory_space<vmem>>) target(%44 : memref<32x32xf32, #tpu.memory_space<vmem>>) target_semaphore(%46 : memref<!tpu.dma_semaphore, #tpu.memory_space<semaphore_mem>>)
    }
    %c16_i32_1 = arith.constant 16 : i32
    %c0_i32_2 = arith.constant 0 : i32
    %c16_i32_3 = arith.constant 16 : i32
    %2 = arith.addi %c0_i32_2, %c16_i32_3 : i32
    %c1_i32_4 = arith.constant 1 : i32
    scf.for %arg12 = %c0_i32_2 to %2 step %c1_i32_4  : i32 {
      %c1_i32_24 = arith.constant 1 : i32
      %27 = arith.muli %arg12, %c1_i32_24 : i32
      %c0_i32_25 = arith.constant 0 : i32
      %28 = arith.addi %c0_i32_25, %27 : i32
      %c0_i32_26 = arith.constant 0 : i32
      %c0_i32_27 = arith.constant 0 : i32
      %c0_i32_28 = arith.constant 0 : i32
      %c0_i32_29 = arith.constant 0 : i32
      %29 = tpu.memref_slice %arg7[%c0_i32_26, %c0_i32_28, %c0_i32_29] : memref<16x32x32xf32, #tpu.memory_space<vmem>> -> memref<1x32x32xf32, #tpu.memory_space<vmem>>
      %30 = tpu.memref_squeeze %29 : memref<1x32x32xf32, #tpu.memory_space<vmem>> -> memref<32x32xf32, #tpu.memory_space<vmem>>
      %c0_i32_30 = arith.constant 0 : i32
      %c0_i32_31 = arith.constant 0 : i32
      %31 = tpu.memref_slice %arg9[%28, %c0_i32_30, %c0_i32_31] : memref<16x32x32xf32, #tpu.memory_space<vmem>> -> memref<1x32x32xf32, #tpu.memory_space<vmem>>
      %32 = tpu.memref_squeeze %31 : memref<1x32x32xf32, #tpu.memory_space<vmem>> -> memref<32x32xf32, #tpu.memory_space<vmem>>
      %33 = tpu.memref_slice %arg11[%c0_i32_27] : memref<2x!tpu.dma_semaphore, #tpu.memory_space<semaphore_mem>> -> memref<1x!tpu.dma_semaphore, #tpu.memory_space<semaphore_mem>>
      %34 = tpu.memref_squeeze %33 : memref<1x!tpu.dma_semaphore, #tpu.memory_space<semaphore_mem>> -> memref<!tpu.dma_semaphore, #tpu.memory_space<semaphore_mem>>
      tpu.wait_dma2 semaphore(%34 : memref<!tpu.dma_semaphore, #tpu.memory_space<semaphore_mem>>) src(%30 : memref<32x32xf32, #tpu.memory_space<vmem>>) dst(%32 : memref<32x32xf32, #tpu.memory_space<vmem>>)
      %c0_i32_32 = arith.constant 0 : i32
      %c1_i32_33 = arith.constant 1 : i32
      %c0_i32_34 = arith.constant 0 : i32
      %c0_i32_35 = arith.constant 0 : i32
      %35 = tpu.memref_slice %arg7[%c0_i32_32, %c0_i32_34, %c0_i32_35] : memref<16x32x32xf32, #tpu.memory_space<vmem>> -> memref<1x32x32xf32, #tpu.memory_space<vmem>>
      %36 = tpu.memref_squeeze %35 : memref<1x32x32xf32, #tpu.memory_space<vmem>> -> memref<32x32xf32, #tpu.memory_space<vmem>>
      %c0_i32_36 = arith.constant 0 : i32
      %c0_i32_37 = arith.constant 0 : i32
      %37 = tpu.memref_slice %arg10[%28, %c0_i32_36, %c0_i32_37] : memref<16x32x32xf32, #tpu.memory_space<vmem>> -> memref<1x32x32xf32, #tpu.memory_space<vmem>>
      %38 = tpu.memref_squeeze %37 : memref<1x32x32xf32, #tpu.memory_space<vmem>> -> memref<32x32xf32, #tpu.memory_space<vmem>>
      %39 = tpu.memref_slice %arg11[%c1_i32_33] : memref<2x!tpu.dma_semaphore, #tpu.memory_space<semaphore_mem>> -> memref<1x!tpu.dma_semaphore, #tpu.memory_space<semaphore_mem>>
      %40 = tpu.memref_squeeze %39 : memref<1x!tpu.dma_semaphore, #tpu.memory_space<semaphore_mem>> -> memref<!tpu.dma_semaphore, #tpu.memory_space<semaphore_mem>>
      tpu.wait_dma2 semaphore(%40 : memref<!tpu.dma_semaphore, #tpu.memory_space<semaphore_mem>>) src(%36 : memref<32x32xf32, #tpu.memory_space<vmem>>) dst(%38 : memref<32x32xf32, #tpu.memory_space<vmem>>)
    }
    %c16_i32_5 = arith.constant 16 : i32
    %c0 = arith.constant 0 : index
    %c0_6 = arith.constant 0 : index
    %c0_7 = arith.constant 0 : index
    %3 = vector.load %arg9[%c0, %c0_6, %c0_7] : memref<16x32x32xf32, #tpu.memory_space<vmem>>, vector<16x32x32xf32>
    %c0_8 = arith.constant 0 : index
    %c0_9 = arith.constant 0 : index
    %c0_10 = arith.constant 0 : index
    %4 = vector.load %arg10[%c0_8, %c0_9, %c0_10] : memref<16x32x32xf32, #tpu.memory_space<vmem>>, vector<16x32x32xf32>
    %c0_11 = arith.constant 0 : index
    %c0_12 = arith.constant 0 : index
    %5 = vector.load %arg3[%c0_11, %c0_12] : memref<16x32xf32, #tpu.memory_space<vmem>>, vector<16x32xf32>
    %c0_13 = arith.constant 0 : index
    %c0_14 = arith.constant 0 : index
    %6 = vector.load %arg4[%c0_13, %c0_14] : memref<16x32xf32, #tpu.memory_space<vmem>>, vector<16x32xf32>
    %c0_15 = arith.constant 0 : index
    %c0_16 = arith.constant 0 : index
    %7 = vector.load %arg5[%c0_15, %c0_16] : memref<16x32xf32, #tpu.memory_space<vmem>>, vector<16x32xf32>
    %c0_17 = arith.constant 0 : index
    %c0_18 = arith.constant 0 : index
    %8 = vector.load %arg6[%c0_17, %c0_18] : memref<16x32xf32, #tpu.memory_space<vmem>>, vector<16x32xf32>
    %9 = vector.shape_cast %5 : vector<16x32xf32> to vector<16x1x32xf32>
    %10 = vector.broadcast %9 : vector<16x1x32xf32> to vector<16x32x32xf32>
    %11 = arith.mulf %3, %10 : vector<16x32x32xf32>
    %cst = arith.constant dense<0.000000e+00> : vector<16x32xf32>
    %12 = vector.multi_reduction <add>, %11, %cst [2] : vector<16x32x32xf32> to vector<16x32xf32>
    %13 = vector.shape_cast %6 : vector<16x32xf32> to vector<16x1x32xf32>
    %14 = vector.broadcast %13 : vector<16x1x32xf32> to vector<16x32x32xf32>
    %15 = arith.mulf %3, %14 : vector<16x32x32xf32>
    %cst_19 = arith.constant dense<0.000000e+00> : vector<16x32xf32>
    %16 = vector.multi_reduction <add>, %15, %cst_19 [2] : vector<16x32x32xf32> to vector<16x32xf32>
    %17 = vector.shape_cast %7 : vector<16x32xf32> to vector<16x1x32xf32>
    %18 = vector.broadcast %17 : vector<16x1x32xf32> to vector<16x32x32xf32>
    %19 = arith.mulf %4, %18 : vector<16x32x32xf32>
    %cst_20 = arith.constant dense<0.000000e+00> : vector<16x32xf32>
    %20 = vector.multi_reduction <add>, %19, %cst_20 [2] : vector<16x32x32xf32> to vector<16x32xf32>
    %21 = vector.shape_cast %8 : vector<16x32xf32> to vector<16x1x32xf32>
    %22 = vector.broadcast %21 : vector<16x1x32xf32> to vector<16x32x32xf32>
    %23 = arith.mulf %4, %22 : vector<16x32x32xf32>
    %cst_21 = arith.constant dense<0.000000e+00> : vector<16x32xf32>
    %24 = vector.multi_reduction <add>, %23, %cst_21 [2] : vector<16x32x32xf32> to vector<16x32xf32>
    %25 = tpu.concatenate %12, %16, %20, %24 in 1 : vector<16x32xf32>, vector<16x32xf32>, vector<16x32xf32>, vector<16x32xf32> -> vector<16x128xf32>
    %c0_22 = arith.constant 0 : index
    %c0_23 = arith.constant 0 : index
    %26 = vector.load %arg8[%c0_22, %c0_23] : memref<16x128xf32, #tpu.memory_space<vmem>>, vector<16x128xf32>
    tpu.vector_store %arg8[%c0_22, %c0_23], %25 {strides = array<i32>} : memref<16x128xf32, #tpu.memory_space<vmem>>, vector<16x128xf32>,
    return
  }
  func.func @transform_0(%arg0: i32, %arg1: memref<32xi32, #tpu.memory_space<smem>>, %arg2: memref<32xi32, #tpu.memory_space<smem>>) -> (i32, i32) {
    %c0_i32 = arith.constant 0 : i32
    %c0_i32_0 = arith.constant 0 : i32
    return %arg0, %c0_i32 : i32, i32
  }
  func.func @transform_1(%arg0: i32, %arg1: memref<32xi32, #tpu.memory_space<smem>>, %arg2: memref<32xi32, #tpu.memory_space<smem>>) -> (i32, i32) {
    %c0_i32 = arith.constant 0 : i32
    %c0_i32_0 = arith.constant 0 : i32
    return %arg0, %c0_i32 : i32, i32
  }
  func.func @transform_2(%arg0: i32, %arg1: memref<32xi32, #tpu.memory_space<smem>>, %arg2: memref<32xi32, #tpu.memory_space<smem>>) -> (i32, i32) {
    %c0_i32 = arith.constant 0 : i32
    %c0_i32_0 = arith.constant 0 : i32
    return %arg0, %c0_i32 : i32, i32
  }
  func.func @transform_3(%arg0: i32, %arg1: memref<32xi32, #tpu.memory_space<smem>>, %arg2: memref<32xi32, #tpu.memory_space<smem>>) -> (i32, i32) {
    %c0_i32 = arith.constant 0 : i32
    %c0_i32_0 = arith.constant 0 : i32
    return %arg0, %c0_i32 : i32, i32
  }
  func.func @transform_4(%arg0: i32, %arg1: memref<32xi32, #tpu.memory_space<smem>>, %arg2: memref<32xi32, #tpu.memory_space<smem>>) -> (i32, i32, i32) {
    %c0_i32 = arith.constant 0 : i32
    %c0_i32_0 = arith.constant 0 : i32
    %c0_i32_1 = arith.constant 0 : i32
    %c0_i32_2 = arith.constant 0 : i32
    return %c0_i32, %c0_i32_0, %c0_i32_1 : i32, i32, i32
  }
  func.func @transform_5(%arg0: i32, %arg1: memref<32xi32, #tpu.memory_space<smem>>, %arg2: memref<32xi32, #tpu.memory_space<smem>>) -> (i32, i32) {
    %c0_i32 = arith.constant 0 : i32
    %c0_i32_0 = arith.constant 0 : i32
    return %arg0, %c0_i32 : i32, i32
  }
}

</mosaic_0001>

<llo_original>
// kernel: tpu_custom_call.1
$region0: #{tpu_custom_call.1}
  #allocation0 [shape = 'u32[]', space=smem, size = 0x4, offset = 0x4, fixed_abs, tag = 'smem constant byte address 0x4 - core index']
  #allocation1 [shape = 'u32[144,128]{1,0:T(1,128)}', space=vmem, size = 0x12000, scoped, tag = 'internal scratch']
  #allocation2 [shape = 'f32[16,32,32]{2,1,0:T(8,128)}', space=vmem, size = 0x40000, scoped, tag = 'scratch operand']
  #allocation3 [shape = 'f32[16,32,32]{2,1,0:T(8,128)}', space=vmem, size = 0x40000, scoped, tag = 'scratch operand']
  #allocation4 [shape = 's32[2]{0}', space=sflag, size = 0x8, scoped, tag = 'scratch operand']
  #allocation5 [shape = 's32[1]{0}', space=sflag, size = 0x4, scoped, tag = 'scoped memory for tpu_custom_call.1']
  #allocation6 [shape = 'u8[512]{0}', space=smem, size = 0x200, scoped, tag = 'prefetched SMEM operand 0']
  #allocation7 [shape = 'u8[512]{0}', space=smem, size = 0x200, scoped, tag = 'prefetched SMEM operand 1']
  #allocation18 [shape = 's32[]', space=sflag, size = 0x4, offset = 0, fixed_abs, tag = 'sflag constant byte address 0x0 - dummy sync flag']
  #allocation19 [shape = 's32[]', space=sflag, size = 0x4, offset = 0, fixed_abs, tag = 'sflag constant byte address 0x0 - dummy sync flag']
  %s0 = inlined_call_operand.hbm [shape: s32[32], index: 0, kind: input, shape index: {}]
  %s1 = inlined_call_operand.vmem [shape: s32[32], index: 1, kind: input, shape index: {}]
  %s2 = inlined_call_operand.hbm [shape: f32[32,32], index: 2, kind: input, shape index: {}]
  %s3 = inlined_call_operand.hbm [shape: f32[32,32], index: 3, kind: input, shape index: {}]
  %s4 = inlined_call_operand.hbm [shape: f32[32,32], index: 4, kind: input, shape index: {}]
  %s5 = inlined_call_operand.hbm [shape: f32[32,32], index: 5, kind: input, shape index: {}]
  %s6 = inlined_call_operand.hbm [shape: f32[16,32,32], index: 6, kind: input, shape index: {}]
  %s7 = inlined_call_operand.hbm [shape: f32[32,128], index: 7, kind: output, shape index: {}]
  %s8 = sld [smem:[#allocation0]]
  $region155: #{tpu_custom_call.1} parent=0
    _
  %s10 = ssub.s32 1, %s8
  %s11 = scalar_select 0, %s10, %s8
  %13 = dma.hbm_to_smem %s0, 16, [#allocation6], [#allocation5]
  %s14 = sshll.u32 %s1, 4
  %s15 = int_to_ptr.vmem [resolvable:$true] %s14
  %17 = dma.vmem_to_smem %s15, 16, [#allocation7], [#allocation5]
  %18 = dma.done [#allocation5], 32
  %19 = sfence
  $region1: #{tpu_custom_call.1} parent=0
    #allocation8 [shape = 'u8[16384]{0}', space=vmem, size = 0x4000, scoped, tag = 'input window, operand 2']
    #allocation9 [shape = 's32[2]{0}', space=sflag, size = 0x8, scoped, tag = 'scoped memory for tpu_custom_call.1']
    #allocation10 [shape = 's32[2]{0}', space=sflag, size = 0x8, scoped, tag = 'scoped memory for tpu_custom_call.1']
    #allocation11 [shape = 'u8[16384]{0}', space=vmem, size = 0x4000, scoped, tag = 'input window, operand 3']
    #allocation12 [shape = 's32[2]{0}', space=sflag, size = 0x8, scoped, tag = 'scoped memory for tpu_custom_call.1']
    #allocation13 [shape = 'u8[16384]{0}', space=vmem, size = 0x4000, scoped, tag = 'input window, operand 4']
    #allocation14 [shape = 'u8[16384]{0}', space=vmem, size = 0x4000, scoped, tag = 'input window, operand 5']
    #allocation15 [shape = 's32[2]{0}', space=sflag, size = 0x8, scoped, tag = 'scoped memory for tpu_custom_call.1']
    #allocation16 [shape = 'u8[262144]{0}', space=vmem, size = 0x40000, scoped, tag = 'input window, operand 6, single buffered']
    #allocation17 [shape = 'u8[16384]{0}', space=vmem, size = 0x4000, scoped, tag = 'output window, operand 0']
    %20 = vsyncpa [#allocation9], 0
    %s21 = scalar_lea.sflag [#allocation9], 1
    %22 = vsyncpa %s21, 0
    %23 = vsyncpa [#allocation12], 0
    %s24 = scalar_lea.sflag [#allocation12], 1
    %25 = vsyncpa %s24, 0
    %26 = vsyncpa [#allocation15], 0
    %s27 = scalar_lea.sflag [#allocation15], 1
    %28 = vsyncpa %s27, 0
    %29 = vsyncpa [#allocation10], 0
    %s30 = scalar_lea.sflag [#allocation10], 1
    %31 = vsyncpa %s30, 0
    loop: start=0, step=1, limit=4
    $region2: #{tpu_custom_call.1} parent=1 // loop_pre_header
      _
    $region3: #{tpu_custom_call.1} parent=1 // loop_header
      %s33 = sphi 0, %s37
      %p34 = scmp.ge.s32.totalorder %s33, 4
      %s43 = sphi 0, %s45
      %s46 = sphi 0, %s43
      %s47 = sphi 0, %s46
      %s63 = sphi 0, %s47
      %s69 = sphi 0, %s71
      %s72 = sphi 0, %s69
      %s73 = sphi 0, %s72
      %s89 = sphi 0, %s73
      %s95 = sphi 0, %s97
      %s98 = sphi 0, %s95
      %s99 = sphi 0, %s98
      %s115 = sphi 0, %s99
      %s121 = sphi 0, %s123
      %s124 = sphi 0, %s121
      %s125 = sphi 0, %s124
      %s141 = sphi 0, %s125
      %s145 = sphi 0, %s145
      %s147 = sphi 0, %s145
      %s148 = sphi 0, %s147
      %s162 = sphi 0, %s148
      %s168 = sphi 0, %s170
      %s171 = sphi 0, %s168
      %s172 = sphi 0, %s171
      %s188 = sphi 0, %s172
    $region4: #{tpu_custom_call.1} parent=1 // loop_header_branch
      %36 = sbr.rel (%p34) target = $region8
    $region5: #{tpu_custom_call.1} parent=1 // loop_body
      %s38 = ssub.s32 %s33, 1
      %s39 = ssub.s32 %s33, 2
      %s40 = sadd.s32 %s33, 1
      %s41 = ssub.s32 %s33, %s40
      %p42 = scmp.eq.s32.totalorder %s41, 0
      %s44 = sadd.s32 %s43, 1
      %s45 = scalar_select %p42, %s43, %s44
      %p48 = pneg %p42
      %p49 = scmp.eq.s32.totalorder %s33, 1
      %p50 = por %p48, %p49
      %p51 = scmp.ne.s32.totalorder %s43, %s46
      %p52 = scmp.eq.s32.totalorder %s33, 0
      %p53 = por %p51, %p52
      %p54 = scmp.ne.s32.totalorder %s43, %s46
      %p55 = scmp.eq.s32.totalorder %s38, 1
      %p56 = por %p54, %p55
      %p57 = scmp.ne.s32.totalorder %s46, %s47
      %p58 = scmp.eq.s32.totalorder %s38, 0
      %p59 = por %p57, %p58
      %p60 = scmp.ne.s32.totalorder %s46, %s47
      %p61 = scmp.eq.s32.totalorder %s39, 1
      %p62 = por %p60, %p61
      %p64 = scmp.ne.s32.totalorder %s47, %s63
      %p65 = scmp.eq.s32.totalorder %s39, 0
      %p66 = por %p64, %p65
      %s67 = ssub.s32 %s33, %s40
      %p68 = scmp.eq.s32.totalorder %s67, 0
      %s70 = sadd.s32 %s69, 1
      %s71 = scalar_select %p68, %s69, %s70
      %p74 = pneg %p68
      %p75 = scmp.eq.s32.totalorder %s33, 1
      %p76 = por %p74, %p75
      %p77 = scmp.ne.s32.totalorder %s69, %s72
      %p78 = scmp.eq.s32.totalorder %s33, 0
      %p79 = por %p77, %p78
      %p80 = scmp.ne.s32.totalorder %s69, %s72
      %p81 = scmp.eq.s32.totalorder %s38, 1
      %p82 = por %p80, %p81
      %p83 = scmp.ne.s32.totalorder %s72, %s73
      %p84 = scmp.eq.s32.totalorder %s38, 0
      %p85 = por %p83, %p84
      %p86 = scmp.ne.s32.totalorder %s72, %s73
      %p87 = scmp.eq.s32.totalorder %s39, 1
      %p88 = por %p86, %p87
      %p90 = scmp.ne.s32.totalorder %s73, %s89
      %p91 = scmp.eq.s32.totalorder %s39, 0
      %p92 = por %p90, %p91
      %s93 = ssub.s32 %s33, %s40
      %p94 = scmp.eq.s32.totalorder %s93, 0
      %s96 = sadd.s32 %s95, 1
      %s97 = scalar_select %p94, %s95, %s96
      %p100 = pneg %p94
      %p101 = scmp.eq.s32.totalorder %s33, 1
      %p102 = por %p100, %p101
      %p103 = scmp.ne.s32.totalorder %s95, %s98
      %p104 = scmp.eq.s32.totalorder %s33, 0
      %p105 = por %p103, %p104
      %p106 = scmp.ne.s32.totalorder %s95, %s98
      %p107 = scmp.eq.s32.totalorder %s38, 1
      %p108 = por %p106, %p107
      %p109 = scmp.ne.s32.totalorder %s98, %s99
      %p110 = scmp.eq.s32.totalorder %s38, 0
      %p111 = por %p109, %p110
      %p112 = scmp.ne.s32.totalorder %s98, %s99
      %p113 = scmp.eq.s32.totalorder %s39, 1
      %p114 = por %p112, %p113
      %p116 = scmp.ne.s32.totalorder %s99, %s115
      %p117 = scmp.eq.s32.totalorder %s39, 0
      %p118 = por %p116, %p117
      %s119 = ssub.s32 %s33, %s40
      %p120 = scmp.eq.s32.totalorder %s119, 0
      %s122 = sadd.s32 %s121, 1
      %s123 = scalar_select %p120, %s121, %s122
      %p126 = pneg %p120
      %p127 = scmp.eq.s32.totalorder %s33, 1
      %p128 = por %p126, %p127
      %p129 = scmp.ne.s32.totalorder %s121, %s124
      %p130 = scmp.eq.s32.totalorder %s33, 0
      %p131 = por %p129, %p130
      %p132 = scmp.ne.s32.totalorder %s121, %s124
      %p133 = scmp.eq.s32.totalorder %s38, 1
      %p134 = por %p132, %p133
      %p135 = scmp.ne.s32.totalorder %s124, %s125
      %p136 = scmp.eq.s32.totalorder %s38, 0
      %p137 = por %p135, %p136
      %p138 = scmp.ne.s32.totalorder %s124, %s125
      %p139 = scmp.eq.s32.totalorder %s39, 1
      %p140 = por %p138, %p139
      %p142 = scmp.ne.s32.totalorder %s125, %s141
      %p143 = scmp.eq.s32.totalorder %s39, 0
      %p144 = por %p142, %p143
      %s146 = sadd.s32 %s145, 1
      %p149 = scmp.eq.s32.totalorder %s33, 1
      %p150 = scmp.ne.s32.totalorder %s145, %s147
      %p151 = scmp.eq.s32.totalorder %s33, 0
      %p152 = por %p150, %p151
      %p153 = scmp.ne.s32.totalorder %s145, %s147
      %p154 = scmp.eq.s32.totalorder %s38, 1
      %p155 = por %p153, %p154
      %p156 = scmp.ne.s32.totalorder %s147, %s148
      %p157 = scmp.eq.s32.totalorder %s38, 0
      %p158 = por %p156, %p157
      %p159 = scmp.ne.s32.totalorder %s147, %s148
      %p160 = scmp.eq.s32.totalorder %s39, 1
      %p161 = por %p159, %p160
      %p163 = scmp.ne.s32.totalorder %s148, %s162
      %p164 = scmp.eq.s32.totalorder %s39, 0
      %p165 = por %p163, %p164
      %s166 = ssub.s32 %s33, %s40
      %p167 = scmp.eq.s32.totalorder %s166, 0
      %s169 = sadd.s32 %s168, 1
      %s170 = scalar_select %p167, %s168, %s169
      %p173 = pneg %p167
      %p174 = scmp.eq.s32.totalorder %s33, 1
      %p175 = por %p173, %p174
      %p176 = scmp.ne.s32.totalorder %s168, %s171
      %p177 = scmp.eq.s32.totalorder %s33, 0
      %p178 = por %p176, %p177
      %p179 = scmp.ne.s32.totalorder %s168, %s171
      %p180 = scmp.eq.s32.totalorder %s38, 1
      %p181 = por %p179, %p180
      %p182 = scmp.ne.s32.totalorder %s171, %s172
      %p183 = scmp.eq.s32.totalorder %s38, 0
      %p184 = por %p182, %p183
      %p185 = scmp.ne.s32.totalorder %s171, %s172
      %p186 = scmp.eq.s32.totalorder %s39, 1
      %p187 = por %p185, %p186
      %p189 = scmp.ne.s32.totalorder %s172, %s188
      %p190 = scmp.eq.s32.totalorder %s39, 0
      %p191 = por %p189, %p190
      %p192 = scmp.le.s32.totalorder 1, %s33
      %p193 = scmp.lt.s32.totalorder %s33, 3
      %p194 = pnand %p192, %p193
      %p195 = pneg %p194
      // Predicated region
      $region9: #{tpu_custom_call.1} parent=5 // pred_check
        _
      $region10: #{tpu_custom_call.1} parent=5 // pred_check_branch
        %197 = sbr.rel (%p194) target = $region12
      $region11: #{tpu_custom_call.1} parent=5 // pred_region
        %s198 = ssub.s32 %s33, 1
        // Predicated region
        $region13: #{tpu_custom_call.1} parent=11 // pred_check
          %p199 = pneg %p158
        $region14: #{tpu_custom_call.1} parent=11 // pred_check_branch
          %201 = sbr.rel (%p199) target = $region16
        $region15: #{tpu_custom_call.1} parent=11 // pred_region
          %s203 = ssub.s32 8192, 8192
          %204 = vsyncadd [#allocation15], %s203
          %s205 = sshll.u32 [#allocation16], 4
          %s206 = int_to_ptr.vmem [resolvable:$true] %s205
          %211 = dma.hbm_to_vmem [thread:$0]  %s6, 8192, %s206, [#allocation15], 128, 128, 8
        $region16: #{tpu_custom_call.1} parent=11 // pred_fallthru
          _
      $region12: #{tpu_custom_call.1} parent=5 // pred_fallthru
        _
      %p212 = scmp.lt.s32.totalorder %s33, 2
      // Predicated region
      $region17: #{tpu_custom_call.1} parent=5 // pred_check
        %p213 = pneg %p212
      $region18: #{tpu_custom_call.1} parent=5 // pred_check_branch
        %215 = sbr.rel (%p213) target = $region20
      $region19: #{tpu_custom_call.1} parent=5 // pred_region
        // Predicated region
        $region21: #{tpu_custom_call.1} parent=19 // pred_check
          %p216 = pneg %p53
        $region22: #{tpu_custom_call.1} parent=19 // pred_check_branch
          %218 = sbr.rel (%p216) target = $region24
        $region23: #{tpu_custom_call.1} parent=19 // pred_region
          %s219 = sand.u32 %s43, 1
          %s220 = scalar_lea.sflag [#allocation9], %s219
          %s221 = sand.u32 %s43, 1
          %s222 = smul.addr %s221, 16
          %s223 = scalar_lea.vmem [#allocation8], %s222
          %s224 = smul.u32 2, %s33
          %s226 = ssub.s32 256, 256
          %227 = vsyncadd %s220, %s226
          %s228 = smul.addr %s224, 128
          %s229 = scalar_lea.hbm %s2, %s228
          %s230 = sshll.u32 %s223, 4
          %s231 = int_to_ptr.vmem [resolvable:$true] %s230
          %236 = dma.hbm_to_vmem [thread:$0]  %s229, 256, %s231, %s220, 128, 128, 8
        $region24: #{tpu_custom_call.1} parent=19 // pred_fallthru
          _
        // Predicated region
        $region25: #{tpu_custom_call.1} parent=19 // pred_check
          %p237 = pneg %p79
        $region26: #{tpu_custom_call.1} parent=19 // pred_check_branch
          %239 = sbr.rel (%p237) target = $region28
        $region27: #{tpu_custom_call.1} parent=19 // pred_region
          %s240 = sand.u32 %s33, 1
          %s241 = scalar_lea.sflag [#allocation12], %s240
          %s242 = sand.u32 %s69, 1
          %s243 = smul.addr %s242, 16
          %s244 = scalar_lea.vmem [#allocation11], %s243
          %s245 = smul.u32 2, %s33
          %s247 = ssub.s32 256, 256
          %248 = vsyncadd %s241, %s247
          %s249 = smul.addr %s245, 128
          %s250 = scalar_lea.hbm %s3, %s249
          %s251 = sshll.u32 %s244, 4
          %s252 = int_to_ptr.vmem [resolvable:$true] %s251
          %257 = dma.hbm_to_vmem [thread:$0]  %s250, 256, %s252, %s241, 128, 128, 8
        $region28: #{tpu_custom_call.1} parent=19 // pred_fallthru
          _
        // Predicated region
        $region29: #{tpu_custom_call.1} parent=19 // pred_check
          %p258 = pneg %p105
        $region30: #{tpu_custom_call.1} parent=19 // pred_check_branch
          %260 = sbr.rel (%p258) target = $region32
        $region31: #{tpu_custom_call.1} parent=19 // pred_region
          %s261 = sand.u32 %s33, 1
          %s262 = scalar_lea.sflag [#allocation12], %s261
          %s263 = sand.u32 %s95, 1
          %s264 = smul.addr %s263, 16
          %s265 = scalar_lea.vmem [#allocation13], %s264
          %s266 = smul.u32 2, %s33
          %s268 = ssub.s32 256, 256
          %269 = vsyncadd %s262, %s268
          %s270 = smul.addr %s266, 128
          %s271 = scalar_lea.hbm %s4, %s270
          %s272 = sshll.u32 %s265, 4
          %s273 = int_to_ptr.vmem [resolvable:$true] %s272
          %278 = dma.hbm_to_vmem [thread:$0]  %s271, 256, %s273, %s262, 128, 128, 8
        $region32: #{tpu_custom_call.1} parent=19 // pred_fallthru
          _
        // Predicated region
        $region33: #{tpu_custom_call.1} parent=19 // pred_check
          %p279 = pneg %p131
        $region34: #{tpu_custom_call.1} parent=19 // pred_check_branch
          %281 = sbr.rel (%p279) target = $region36
        $region35: #{tpu_custom_call.1} parent=19 // pred_region
          %s282 = sand.u32 %s33, 1
          %s283 = scalar_lea.sflag [#allocation15], %s282
          %s284 = sand.u32 %s121, 1
          %s285 = smul.addr %s284, 16
          %s286 = scalar_lea.vmem [#allocation14], %s285
          %s287 = smul.u32 2, %s33
          %s289 = ssub.s32 256, 256
          %290 = vsyncadd %s283, %s289
          %s291 = smul.addr %s287, 128
          %s292 = scalar_lea.hbm %s5, %s291
          %s293 = sshll.u32 %s286, 4
          %s294 = int_to_ptr.vmem [resolvable:$true] %s293
          %299 = dma.hbm_to_vmem [thread:$0]  %s292, 256, %s294, %s283, 128, 128, 8
        $region36: #{tpu_custom_call.1} parent=19 // pred_fallthru
          _
      $region20: #{tpu_custom_call.1} parent=5 // pred_fallthru
        _
      %p300 = scmp.le.s32.totalorder 1, %s33
      %p301 = scmp.lt.s32.totalorder %s33, 3
      %p302 = pnand %p300, %p301
      %p303 = pneg %p302
      // Predicated region
      $region37: #{tpu_custom_call.1} parent=5 // pred_check
        _
      $region38: #{tpu_custom_call.1} parent=5 // pred_check_branch
        %305 = sbr.rel (%p302) target = $region40
      $region39: #{tpu_custom_call.1} parent=5 // pred_region
        %s306 = ssub.s32 %s33, 1
        %s307 = sand.u32 %s46, 1
        %s308 = scalar_lea.sflag [#allocation9], %s307
        %s309 = sand.u32 %s46, 1
        %s310 = smul.addr %s309, 16
        %s311 = scalar_lea.vmem [#allocation8], %s310
        // Predicated region
        $region41: #{tpu_custom_call.1} parent=39 // pred_check
          %p312 = pneg %p59
        $region42: #{tpu_custom_call.1} parent=39 // pred_check_branch
          %314 = sbr.rel (%p312) target = $region44
        $region43: #{tpu_custom_call.1} parent=39 // pred_region
          %315 = dma.done %s308, 256
        $region44: #{tpu_custom_call.1} parent=39 // pred_fallthru
          _
        %s316 = sand.u32 %s38, 1
        %s317 = scalar_lea.sflag [#allocation12], %s316
        %s318 = sand.u32 %s72, 1
        %s319 = smul.addr %s318, 16
        %s320 = scalar_lea.vmem [#allocation11], %s319
        // Predicated region
        $region45: #{tpu_custom_call.1} parent=39 // pred_check
          %p321 = pneg %p85
        $region46: #{tpu_custom_call.1} parent=39 // pred_check_branch
          %323 = sbr.rel (%p321) target = $region48
        $region47: #{tpu_custom_call.1} parent=39 // pred_region
          %324 = dma.done %s317, 256
        $region48: #{tpu_custom_call.1} parent=39 // pred_fallthru
          _
        %s325 = sand.u32 %s38, 1
        %s326 = scalar_lea.sflag [#allocation12], %s325
        %s327 = sand.u32 %s98, 1
        %s328 = smul.addr %s327, 16
        %s329 = scalar_lea.vmem [#allocation13], %s328
        // Predicated region
        $region49: #{tpu_custom_call.1} parent=39 // pred_check
          %p330 = pneg %p111
        $region50: #{tpu_custom_call.1} parent=39 // pred_check_branch
          %332 = sbr.rel (%p330) target = $region52
        $region51: #{tpu_custom_call.1} parent=39 // pred_region
          %333 = dma.done %s326, 256
        $region52: #{tpu_custom_call.1} parent=39 // pred_fallthru
          _
        %s334 = sand.u32 %s38, 1
        %s335 = scalar_lea.sflag [#allocation15], %s334
        %s336 = sand.u32 %s124, 1
        %s337 = smul.addr %s336, 16
        %s338 = scalar_lea.vmem [#allocation14], %s337
        // Predicated region
        $region53: #{tpu_custom_call.1} parent=39 // pred_check
          %p339 = pneg %p137
        $region54: #{tpu_custom_call.1} parent=39 // pred_check_branch
          %341 = sbr.rel (%p339) target = $region56
        $region55: #{tpu_custom_call.1} parent=39 // pred_region
          %342 = dma.done %s335, 256
        $region56: #{tpu_custom_call.1} parent=39 // pred_fallthru
          _
        // Predicated region
        $region57: #{tpu_custom_call.1} parent=39 // pred_check
          %p343 = pneg %p158
        $region58: #{tpu_custom_call.1} parent=39 // pred_check_branch
          %345 = sbr.rel (%p343) target = $region60
        $region59: #{tpu_custom_call.1} parent=39 // pred_region
          %346 = dma.done [#allocation15], 8192
        $region60: #{tpu_custom_call.1} parent=39 // pred_fallthru
          _
        %s347 = sand.u32 %s46, 1
        %s348 = scalar_lea.sflag [#allocation9], %s347
        %s349 = sand.u32 %s46, 1
        %s350 = smul.addr %s349, 16
        %s351 = scalar_lea.vmem [#allocation8], %s350
        %p352 = pneg %p59
        %p353 = pneg %p56
        %s354 = sand.u32 %s38, 1
        %s355 = scalar_lea.sflag [#allocation12], %s354
        %s356 = sand.u32 %s72, 1
        %s357 = smul.addr %s356, 16
        %s358 = scalar_lea.vmem [#allocation11], %s357
        %p359 = pneg %p85
        %p360 = pneg %p82
        %s361 = sand.u32 %s38, 1
        %s362 = scalar_lea.sflag [#allocation12], %s361
        %s363 = sand.u32 %s98, 1
        %s364 = smul.addr %s363, 16
        %s365 = scalar_lea.vmem [#allocation13], %s364
        %p366 = pneg %p111
        %p367 = pneg %p108
        %s368 = sand.u32 %s38, 1
        %s369 = scalar_lea.sflag [#allocation15], %s368
        %s370 = sand.u32 %s124, 1
        %s371 = smul.addr %s370, 16
        %s372 = scalar_lea.vmem [#allocation14], %s371
        %p373 = pneg %p137
        %p374 = pneg %p134
        %p375 = pneg %p158
        %p376 = pneg %p155
        %p377 = pneg %p184
        %p378 = pneg %p181
        %s379 = sand.u32 %s171, 1
        %s380 = scalar_lea.sflag [#allocation10], %s379
        %s381 = sand.u32 %s171, 1
        %s382 = smul.addr %s381, 16
        %s383 = scalar_lea.vmem [#allocation17], %s382
        %s384 = smul.u32 2, %s38
        %s385 = smul.u32 2, %s38
        %s386 = smul.u32 2, %s38
        %s387 = smul.u32 2, %s38
        %s388 = smul.u32 2, %s38
        %s389 = smul.u32 %s38, 16
        loop: start=0, step=1, limit=16
        $region61: #{tpu_custom_call.1} parent=39 // loop_pre_header
          _
        $region62: #{tpu_custom_call.1} parent=39 // loop_header
          %s391 = sphi 0, %s395
          %p392 = scmp.ge.s32.totalorder %s391, 16
        $region63: #{tpu_custom_call.1} parent=39 // loop_header_branch
          %394 = sbr.rel (%p392) target = $region67
        $region64: #{tpu_custom_call.1} parent=39 // loop_body
          %s396 = sadd.s32 %s389, %s391
          %s397 = sld [smem:[#allocation6 + %s396]]
          %s398 = sld [smem:[#allocation7 + %s396]]
          %s399 = smul.u32 %s397, 32
          %s400 = scalar_lea.vmem [#allocation16], %s399
          %s401 = smul.u32 %s391, 32
          %s402 = scalar_lea.vmem [#allocation2], %s401
          %p404 = scmp.lt.u32.totalorder 32, 8
          %p405 = pneg %p404
          // Predicated region
          $region68: #{tpu_custom_call.1} parent=64 // pred_check
            _
          $region69: #{tpu_custom_call.1} parent=64 // pred_check_branch
            %407 = sbr.rel (%p404) target = $region71
          $region70: #{tpu_custom_call.1} parent=64 // pred_region
            %s422 = sand.u32 32, 7
            %p423 = scmp.eq.s32.totalorder %s422, 0
            // Predicated region
            $region83: #{tpu_custom_call.1} parent=70 // pred_check
              %p424 = pneg %p423
            $region84: #{tpu_custom_call.1} parent=70 // pred_check_branch
              %426 = sbr.rel (%p424) target = $region86
            $region85: #{tpu_custom_call.1} parent=70 // pred_region
              loop: start=0, step=1, limit=1
              $region87: #{tpu_custom_call.1} parent=85 // loop_pre_header
                _
              $region88: #{tpu_custom_call.1} parent=85 // loop_header
                %s428 = sphi 0, %s432
                %p429 = scmp.ge.s32.totalorder %s428, 1
                %s433 = sphi %s400, %s400
                %s434 = sphi %s402, %s402
              $region89: #{tpu_custom_call.1} parent=85 // loop_header_branch
                %431 = sbr.rel (%p429) target = $region93
              $region90: #{tpu_custom_call.1} parent=85 // loop_body
                %v435 = vld [vmem:[%s433] sm:$0xff]
                %436 = vst [vmem:[%s434] sm:$0xff] %v435
                %v437 = vld [vmem:[%s433 + $0x8] sm:$0xff]
                %438 = vst [vmem:[%s434 + $0x8] sm:$0xff] %v437
                %v439 = vld [vmem:[%s433 + $0x10] sm:$0xff]
                %440 = vst [vmem:[%s434 + $0x10] sm:$0xff] %v439
                %v441 = vld [vmem:[%s433 + $0x18] sm:$0xff]
                %442 = vst [vmem:[%s434 + $0x18] sm:$0xff] %v441
              $region91: #{tpu_custom_call.1} parent=85 // loop_footer
                %s432 = sadd.s32 1, %s428
              $region92: #{tpu_custom_call.1} parent=85 // loop_footer_branch
                %427 = sbr.rel target = $region88
              $region93: #{tpu_custom_call.1} parent=85 // loop_exit
                _
            $region86: #{tpu_custom_call.1} parent=70 // pred_fallthru
              _
            %p443 = pneg %p423
            // Predicated region
            $region94: #{tpu_custom_call.1} parent=70 // pred_check
              _
            $region95: #{tpu_custom_call.1} parent=70 // pred_check_branch
              %445 = sbr.rel (%p423) target = $region97
            $region96: #{tpu_custom_call.1} parent=70 // pred_region
              %s446 = sand.u32 32, 7
            $region97: #{tpu_custom_call.1} parent=70 // pred_fallthru
              _
          $region71: #{tpu_custom_call.1} parent=64 // pred_fallthru
            _
          // Predicated region
          $region72: #{tpu_custom_call.1} parent=64 // pred_check
            %p408 = pneg %p404
          $region73: #{tpu_custom_call.1} parent=64 // pred_check_branch
            %410 = sbr.rel (%p408) target = $region75
          $region74: #{tpu_custom_call.1} parent=64 // pred_region
            %s411 = sshllo.u32 0, 32
            loop: start=0, step=1, limit=1
            $region76: #{tpu_custom_call.1} parent=74 // loop_pre_header
              _
            $region77: #{tpu_custom_call.1} parent=74 // loop_header
              %s413 = sphi 0, %s417
              %p414 = scmp.ge.s32.totalorder %s413, 1
              %s418 = sphi %s400, %s400
              %s419 = sphi %s402, %s402
            $region78: #{tpu_custom_call.1} parent=74 // loop_header_branch
              %416 = sbr.rel (%p414) target = $region82
            $region79: #{tpu_custom_call.1} parent=74 // loop_body
              %v420 = vld [vmem:[%s418] sm:%s411]
              %421 = vst [vmem:[%s419] sm:%s411] %v420
            $region80: #{tpu_custom_call.1} parent=74 // loop_footer
              %s417 = sadd.s32 1, %s413
            $region81: #{tpu_custom_call.1} parent=74 // loop_footer_branch
              %412 = sbr.rel target = $region77
            $region82: #{tpu_custom_call.1} parent=74 // loop_exit
              _
          $region75: #{tpu_custom_call.1} parent=64 // pred_fallthru
            _
          // Predicated region
          $region98: #{tpu_custom_call.1} parent=64 // pred_check
            _
          $region99: #{tpu_custom_call.1} parent=64 // pred_check_branch
            %449 = sbr.rel (0) target = $region101
          $region100: #{tpu_custom_call.1} parent=64 // pred_region
            %450 = vsyncadd [#allocation4], 512
          $region101: #{tpu_custom_call.1} parent=64 // pred_fallthru
            _
          %s451 = smul.u32 %s398, 32
          %s452 = scalar_lea.vmem [#allocation16], %s451
          %s453 = scalar_lea.vmem [#allocation3], %s401
          %s454 = scalar_lea.sflag [#allocation4], 1
          %p456 = scmp.lt.u32.totalorder 32, 8
          %p457 = pneg %p456
          // Predicated region
          $region102: #{tpu_custom_call.1} parent=64 // pred_check
            _
          $region103: #{tpu_custom_call.1} parent=64 // pred_check_branch
            %459 = sbr.rel (%p456) target = $region105
          $region104: #{tpu_custom_call.1} parent=64 // pred_region
            %s474 = sand.u32 32, 7
            %p475 = scmp.eq.s32.totalorder %s474, 0
            // Predicated region
            $region117: #{tpu_custom_call.1} parent=104 // pred_check
              %p476 = pneg %p475
            $region118: #{tpu_custom_call.1} parent=104 // pred_check_branch
              %478 = sbr.rel (%p476) target = $region120
            $region119: #{tpu_custom_call.1} parent=104 // pred_region
              loop: start=0, step=1, limit=1
              $region121: #{tpu_custom_call.1} parent=119 // loop_pre_header
                _
              $region122: #{tpu_custom_call.1} parent=119 // loop_header
                %s480 = sphi 0, %s484
                %p481 = scmp.ge.s32.totalorder %s480, 1
                %s485 = sphi %s452, %s452
                %s486 = sphi %s453, %s453
              $region123: #{tpu_custom_call.1} parent=119 // loop_header_branch
                %483 = sbr.rel (%p481) target = $region127
              $region124: #{tpu_custom_call.1} parent=119 // loop_body
                %v487 = vld [vmem:[%s485] sm:$0xff]
                %488 = vst [vmem:[%s486] sm:$0xff] %v487
                %v489 = vld [vmem:[%s485 + $0x8] sm:$0xff]
                %490 = vst [vmem:[%s486 + $0x8] sm:$0xff] %v489
                %v491 = vld [vmem:[%s485 + $0x10] sm:$0xff]
                %492 = vst [vmem:[%s486 + $0x10] sm:$0xff] %v491
                %v493 = vld [vmem:[%s485 + $0x18] sm:$0xff]
                %494 = vst [vmem:[%s486 + $0x18] sm:$0xff] %v493
              $region125: #{tpu_custom_call.1} parent=119 // loop_footer
                %s484 = sadd.s32 1, %s480
              $region126: #{tpu_custom_call.1} parent=119 // loop_footer_branch
                %479 = sbr.rel target = $region122
              $region127: #{tpu_custom_call.1} parent=119 // loop_exit
                _
            $region120: #{tpu_custom_call.1} parent=104 // pred_fallthru
              _
            %p495 = pneg %p475
            // Predicated region
            $region128: #{tpu_custom_call.1} parent=104 // pred_check
              _
            $region129: #{tpu_custom_call.1} parent=104 // pred_check_branch
              %497 = sbr.rel (%p475) target = $region131
            $region130: #{tpu_custom_call.1} parent=104 // pred_region
              %s498 = sand.u32 32, 7
            $region131: #{tpu_custom_call.1} parent=104 // pred_fallthru
              _
          $region105: #{tpu_custom_call.1} parent=64 // pred_fallthru
            _
          // Predicated region
          $region106: #{tpu_custom_call.1} parent=64 // pred_check
            %p460 = pneg %p456
          $region107: #{tpu_custom_call.1} parent=64 // pred_check_branch
            %462 = sbr.rel (%p460) target = $region109
          $region108: #{tpu_custom_call.1} parent=64 // pred_region
            %s463 = sshllo.u32 0, 32
            loop: start=0, step=1, limit=1
            $region110: #{tpu_custom_call.1} parent=108 // loop_pre_header
              _
            $region111: #{tpu_custom_call.1} parent=108 // loop_header
              %s465 = sphi 0, %s469
              %p466 = scmp.ge.s32.totalorder %s465, 1
              %s470 = sphi %s452, %s452
              %s471 = sphi %s453, %s453
            $region112: #{tpu_custom_call.1} parent=108 // loop_header_branch
              %468 = sbr.rel (%p466) target = $region116
            $region113: #{tpu_custom_call.1} parent=108 // loop_body
              %v472 = vld [vmem:[%s470] sm:%s463]
              %473 = vst [vmem:[%s471] sm:%s463] %v472
            $region114: #{tpu_custom_call.1} parent=108 // loop_footer
              %s469 = sadd.s32 1, %s465
            $region115: #{tpu_custom_call.1} parent=108 // loop_footer_branch
              %464 = sbr.rel target = $region111
            $region116: #{tpu_custom_call.1} parent=108 // loop_exit
              _
          $region109: #{tpu_custom_call.1} parent=64 // pred_fallthru
            _
          // Predicated region
          $region132: #{tpu_custom_call.1} parent=64 // pred_check
            _
          $region133: #{tpu_custom_call.1} parent=64 // pred_check_branch
            %501 = sbr.rel (0) target = $region135
          $region134: #{tpu_custom_call.1} parent=64 // pred_region
            %502 = vsyncadd %s454, 512
          $region135: #{tpu_custom_call.1} parent=64 // pred_fallthru
            _
        $region65: #{tpu_custom_call.1} parent=39 // loop_footer
          %s395 = sadd.s32 1, %s391
        $region66: #{tpu_custom_call.1} parent=39 // loop_footer_branch
          %390 = sbr.rel target = $region62
        $region67: #{tpu_custom_call.1} parent=39 // loop_exit
          _
        loop: start=0, step=1, limit=16
        $region136: #{tpu_custom_call.1} parent=39 // loop_pre_header
          _
        $region137: #{tpu_custom_call.1} parent=39 // loop_header
          %s504 = sphi 0, %s508
          %p505 = scmp.ge.s32.totalorder %s504, 16
        $region138: #{tpu_custom_call.1} parent=39 // loop_header_branch
          %507 = sbr.rel (%p505) target = $region142
        $region139: #{tpu_custom_call.1} parent=39 // loop_body
          %s509 = smul.u32 32, 1
          %s510 = sshll.u32 %s509, 4
          %511 = dma.done [#allocation4], %s510
          %s512 = scalar_lea.sflag [#allocation4], 1
          %s513 = sshll.u32 %s509, 4
          %514 = dma.done %s512, %s513
        $region140: #{tpu_custom_call.1} parent=39 // loop_footer
          %s508 = sadd.s32 1, %s504
        $region141: #{tpu_custom_call.1} parent=39 // loop_footer_branch
          %503 = sbr.rel target = $region137
        $region142: #{tpu_custom_call.1} parent=39 // loop_exit
          _
        %v515 = vld [vmem:[#allocation2] sm:$0xff]
        %v516 = vld [vmem:[#allocation2 + $0x8] sm:$0xff]
        %v517 = vld [vmem:[#allocation2 + $0x10] sm:$0xff]
        %v518 = vld [vmem:[#allocation2 + $0x18] sm:$0xff]
        %v519 = vld [vmem:[#allocation2 + $0x20] sm:$0xff]
        %v520 = vld [vmem:[#allocation2 + $0x28] sm:$0xff]
        %v521 = vld [vmem:[#allocation2 + $0x30] sm:$0xff]
        %v522 = vld [vmem:[#allocation2 + $0x38] sm:$0xff]
        %v523 = vld [vmem:[#allocation2 + $0x40] sm:$0xff]
        %v524 = vld [vmem:[#allocation2 + $0x48] sm:$0xff]
        %v525 = vld [vmem:[#allocation2 + $0x50] sm:$0xff]
        %v526 = vld [vmem:[#allocation2 + $0x58] sm:$0xff]
        %v527 = vld [vmem:[#allocation2 + $0x60] sm:$0xff]
        %v528 = vld [vmem:[#allocation2 + $0x68] sm:$0xff]
        %v529 = vld [vmem:[#allocation2 + $0x70] sm:$0xff]
        %v530 = vld [vmem:[#allocation2 + $0x78] sm:$0xff]
        %v531 = vld [vmem:[#allocation2 + $0x80] sm:$0xff]
        %v532 = vld [vmem:[#allocation2 + $0x88] sm:$0xff]
        %v533 = vld [vmem:[#allocation2 + $0x90] sm:$0xff]
        %v534 = vld [vmem:[#allocation2 + $0x98] sm:$0xff]
        %v535 = vld [vmem:[#allocation2 + $0xa0] sm:$0xff]
        %v536 = vld [vmem:[#allocation2 + $0xa8] sm:$0xff]
        %v537 = vld [vmem:[#allocation2 + $0xb0] sm:$0xff]
        %v538 = vld [vmem:[#allocation2 + $0xb8] sm:$0xff]
        %v539 = vld [vmem:[#allocation2 + $0xc0] sm:$0xff]
        %v540 = vld [vmem:[#allocation2 + $0xc8] sm:$0xff]
        %v541 = vld [vmem:[#allocation2 + $0xd0] sm:$0xff]
        %v542 = vld [vmem:[#allocation2 + $0xd8] sm:$0xff]
        %v543 = vld [vmem:[#allocation2 + $0xe0] sm:$0xff]
        %v544 = vld [vmem:[#allocation2 + $0xe8] sm:$0xff]
        %v545 = vld [vmem:[#allocation2 + $0xf0] sm:$0xff]
        %v546 = vld [vmem:[#allocation2 + $0xf8] sm:$0xff]
        %v547 = vld [vmem:[#allocation2 + $0x100] sm:$0xff]
        %v548 = vld [vmem:[#allocation2 + $0x108] sm:$0xff]
        %v549 = vld [vmem:[#allocation2 + $0x110] sm:$0xff]
        %v550 = vld [vmem:[#allocation2 + $0x118] sm:$0xff]
        %v551 = vld [vmem:[#allocation2 + $0x120] sm:$0xff]
        %v552 = vld [vmem:[#allocation2 + $0x128] sm:$0xff]
        %v553 = vld [vmem:[#allocation2 + $0x130] sm:$0xff]
        %v554 = vld [vmem:[#allocation2 + $0x138] sm:$0xff]
        %v555 = vld [vmem:[#allocation2 + $0x140] sm:$0xff]
        %v556 = vld [vmem:[#allocation2 + $0x148] sm:$0xff]
        %v557 = vld [vmem:[#allocation2 + $0x150] sm:$0xff]
        %v558 = vld [vmem:[#allocation2 + $0x158] sm:$0xff]
        %v559 = vld [vmem:[#allocation2 + $0x160] sm:$0xff]
        %v560 = vld [vmem:[#allocation2 + $0x168] sm:$0xff]
        %v561 = vld [vmem:[#allocation2 + $0x170] sm:$0xff]
        %v562 = vld [vmem:[#allocation2 + $0x178] sm:$0xff]
        %v563 = vld [vmem:[#allocation2 + $0x180] sm:$0xff]
        %v564 = vld [vmem:[#allocation2 + $0x188] sm:$0xff]
        %v565 = vld [vmem:[#allocation2 + $0x190] sm:$0xff]
        %v566 = vld [vmem:[#allocation2 + $0x198] sm:$0xff]
        %v567 = vld [vmem:[#allocation2 + $0x1a0] sm:$0xff]
        %v568 = vld [vmem:[#allocation2 + $0x1a8] sm:$0xff]
        %v569 = vld [vmem:[#allocation2 + $0x1b0] sm:$0xff]
        %v570 = vld [vmem:[#allocation2 + $0x1b8] sm:$0xff]
        %v571 = vld [vmem:[#allocation2 + $0x1c0] sm:$0xff]
        %v572 = vld [vmem:[#allocation2 + $0x1c8] sm:$0xff]
        %v573 = vld [vmem:[#allocation2 + $0x1d0] sm:$0xff]
        %v574 = vld [vmem:[#allocation2 + $0x1d8] sm:$0xff]
        %v575 = vld [vmem:[#allocation2 + $0x1e0] sm:$0xff]
        %v576 = vld [vmem:[#allocation2 + $0x1e8] sm:$0xff]
        %v577 = vld [vmem:[#allocation2 + $0x1f0] sm:$0xff]
        %v578 = vld [vmem:[#allocation2 + $0x1f8] sm:$0xff]
        %v579 = vld [vmem:[#allocation3] sm:$0xff]
        %v580 = vld [vmem:[#allocation3 + $0x8] sm:$0xff]
        %v581 = vld [vmem:[#allocation3 + $0x10] sm:$0xff]
        %v582 = vld [vmem:[#allocation3 + $0x18] sm:$0xff]
        %v583 = vld [vmem:[#allocation3 + $0x20] sm:$0xff]
        %v584 = vld [vmem:[#allocation3 + $0x28] sm:$0xff]
        %v585 = vld [vmem:[#allocation3 + $0x30] sm:$0xff]
        %v586 = vld [vmem:[#allocation3 + $0x38] sm:$0xff]
        %v587 = vld [vmem:[#allocation3 + $0x40] sm:$0xff]
        %v588 = vld [vmem:[#allocation3 + $0x48] sm:$0xff]
        %v589 = vld [vmem:[#allocation3 + $0x50] sm:$0xff]
        %v590 = vld [vmem:[#allocation3 + $0x58] sm:$0xff]
        %v591 = vld [vmem:[#allocation3 + $0x60] sm:$0xff]
        %v592 = vld [vmem:[#allocation3 + $0x68] sm:$0xff]
        %v593 = vld [vmem:[#allocation3 + $0x70] sm:$0xff]
        %v594 = vld [vmem:[#allocation3 + $0x78] sm:$0xff]
        %v595 = vld [vmem:[#allocation3 + $0x80] sm:$0xff]
        %v596 = vld [vmem:[#allocation3 + $0x88] sm:$0xff]
        %v597 = vld [vmem:[#allocation3 + $0x90] sm:$0xff]
        %v598 = vld [vmem:[#allocation3 + $0x98] sm:$0xff]
        %v599 = vld [vmem:[#allocation3 + $0xa0] sm:$0xff]
        %v600 = vld [vmem:[#allocation3 + $0xa8] sm:$0xff]
        %v601 = vld [vmem:[#allocation3 + $0xb0] sm:$0xff]
        %v602 = vld [vmem:[#allocation3 + $0xb8] sm:$0xff]
        %v603 = vld [vmem:[#allocation3 + $0xc0] sm:$0xff]
        %v604 = vld [vmem:[#allocation3 + $0xc8] sm:$0xff]
        %v605 = vld [vmem:[#allocation3 + $0xd0] sm:$0xff]
        %v606 = vld [vmem:[#allocation3 + $0xd8] sm:$0xff]
        %v607 = vld [vmem:[#allocation3 + $0xe0] sm:$0xff]
        %v608 = vld [vmem:[#allocation3 + $0xe8] sm:$0xff]
        %v609 = vld [vmem:[#allocation3 + $0xf0] sm:$0xff]
        %v610 = vld [vmem:[#allocation3 + $0xf8] sm:$0xff]
        %v611 = vld [vmem:[#allocation3 + $0x100] sm:$0xff]
        %v612 = vld [vmem:[#allocation3 + $0x108] sm:$0xff]
        %v613 = vld [vmem:[#allocation3 + $0x110] sm:$0xff]
        %v614 = vld [vmem:[#allocation3 + $0x118] sm:$0xff]
        %v615 = vld [vmem:[#allocation3 + $0x120] sm:$0xff]
        %v616 = vld [vmem:[#allocation3 + $0x128] sm:$0xff]
        %v617 = vld [vmem:[#allocation3 + $0x130] sm:$0xff]
        %v618 = vld [vmem:[#allocation3 + $0x138] sm:$0xff]
        %v619 = vld [vmem:[#allocation3 + $0x140] sm:$0xff]
        %v620 = vld [vmem:[#allocation3 + $0x148] sm:$0xff]
        %v621 = vld [vmem:[#allocation3 + $0x150] sm:$0xff]
        %v622 = vld [vmem:[#allocation3 + $0x158] sm:$0xff]
        %v623 = vld [vmem:[#allocation3 + $0x160] sm:$0xff]
        %v624 = vld [vmem:[#allocation3 + $0x168] sm:$0xff]
        %v625 = vld [vmem:[#allocation3 + $0x170] sm:$0xff]
        %v626 = vld [vmem:[#allocation3 + $0x178] sm:$0xff]
        %v627 = vld [vmem:[#allocation3 + $0x180] sm:$0xff]
        %v628 = vld [vmem:[#allocation3 + $0x188] sm:$0xff]
        %v629 = vld [vmem:[#allocation3 + $0x190] sm:$0xff]
        %v630 = vld [vmem:[#allocation3 + $0x198] sm:$0xff]
        %v631 = vld [vmem:[#allocation3 + $0x1a0] sm:$0xff]
        %v632 = vld [vmem:[#allocation3 + $0x1a8] sm:$0xff]
        %v633 = vld [vmem:[#allocation3 + $0x1b0] sm:$0xff]
        %v634 = vld [vmem:[#allocation3 + $0x1b8] sm:$0xff]
        %v635 = vld [vmem:[#allocation3 + $0x1c0] sm:$0xff]
        %v636 = vld [vmem:[#allocation3 + $0x1c8] sm:$0xff]
        %v637 = vld [vmem:[#allocation3 + $0x1d0] sm:$0xff]
        %v638 = vld [vmem:[#allocation3 + $0x1d8] sm:$0xff]
        %v639 = vld [vmem:[#allocation3 + $0x1e0] sm:$0xff]
        %v640 = vld [vmem:[#allocation3 + $0x1e8] sm:$0xff]
        %v641 = vld [vmem:[#allocation3 + $0x1f0] sm:$0xff]
        %v642 = vld [vmem:[#allocation3 + $0x1f8] sm:$0xff]
        %v643 = vld [vmem:[%s311] sm:$0xff]
        %v644 = vld [vmem:[%s311 + $0x8] sm:$0xff]
        %v645 = vld [vmem:[%s320] sm:$0xff]
        %v646 = vld [vmem:[%s320 + $0x8] sm:$0xff]
        %v647 = vld [vmem:[%s329] sm:$0xff]
        %v648 = vld [vmem:[%s329 + $0x8] sm:$0xff]
        %v649 = vld [vmem:[%s338] sm:$0xff]
        %v650 = vld [vmem:[%s338 + $0x8] sm:$0xff]
        %v653 = vcombine.high %v643, %v643
        %v655 = vunpack.c.l.s4 1966171168
        %v656 = vunpack.c.0.s8 %v655
        %v657 = vlaneseq
        %v658 = vshrl.u32 %v657, 7
        %v659 = vsub.s32 %v656, %v658
        %v660 = vrot.slane %v643, %v659
        %v662 = vunpack.c.l.s4 1966171168
        %v663 = vunpack.c.0.s8 %v662
        %v664 = vlaneseq
        %v665 = vshrl.u32 %v664, 7
        %v666 = vsub.s32 %v663, %v665
        %v667 = vrot.slane %v653, %v666
        %v668 = vcombine.high %v660, %v660
        %v669 = vcombine.high %v667, %v667
        %v671 = vunpack.c.l.s4 1966171168
        %v672 = vunpack.c.0.s8 %v671
        %v673 = vlaneseq
        %v674 = vshrl.u32 %v673, 7
        %v675 = vsub.s32 %v672, %v674
        %v676 = vrot.slane %v660, %v675
        %v678 = vunpack.c.l.s4 1966171168
        %v679 = vunpack.c.0.s8 %v678
        %v680 = vlaneseq
        %v681 = vshrl.u32 %v680, 7
        %v682 = vsub.s32 %v679, %v681
        %v683 = vrot.slane %v667, %v682
        %v685 = vunpack.c.l.s4 1966171168
        %v686 = vunpack.c.0.s8 %v685
        %v687 = vlaneseq
        %v688 = vshrl.u32 %v687, 7
        %v689 = vsub.s32 %v686, %v688
        %v690 = vrot.slane %v668, %v689
        %v692 = vunpack.c.l.s4 1966171168
        %v693 = vunpack.c.0.s8 %v692
        %v694 = vlaneseq
        %v695 = vshrl.u32 %v694, 7
        %v696 = vsub.s32 %v693, %v695
        %v697 = vrot.slane %v669, %v696
        %v698 = vcombine.high %v676, %v676
        %v699 = vcombine.high %v683, %v683
        %v700 = vcombine.high %v690, %v690
        %v701 = vcombine.high %v697, %v697
        %v702 = vcombine.high %v644, %v644
        %v704 = vunpack.c.l.s4 1966171168
        %v705 = vunpack.c.0.s8 %v704
        %v706 = vlaneseq
        %v707 = vshrl.u32 %v706, 7
        %v708 = vsub.s32 %v705, %v707
        %v709 = vrot.slane %v644, %v708
        %v711 = vunpack.c.l.s4 1966171168
        %v712 = vunpack.c.0.s8 %v711
        %v713 = vlaneseq
        %v714 = vshrl.u32 %v713, 7
        %v715 = vsub.s32 %v712, %v714
        %v716 = vrot.slane %v702, %v715
        %v717 = vcombine.high %v709, %v709
        %v718 = vcombine.high %v716, %v716
        %v720 = vunpack.c.l.s4 1966171168
        %v721 = vunpack.c.0.s8 %v720
        %v722 = vlaneseq
        %v723 = vshrl.u32 %v722, 7
        %v724 = vsub.s32 %v721, %v723
        %v725 = vrot.slane %v709, %v724
        %v727 = vunpack.c.l.s4 1966171168
        %v728 = vunpack.c.0.s8 %v727
        %v729 = vlaneseq
        %v730 = vshrl.u32 %v729, 7
        %v731 = vsub.s32 %v728, %v730
        %v732 = vrot.slane %v716, %v731
        %v734 = vunpack.c.l.s4 1966171168
        %v735 = vunpack.c.0.s8 %v734
        %v736 = vlaneseq
        %v737 = vshrl.u32 %v736, 7
        %v738 = vsub.s32 %v735, %v737
        %v739 = vrot.slane %v717, %v738
        %v741 = vunpack.c.l.s4 1966171168
        %v742 = vunpack.c.0.s8 %v741
        %v743 = vlaneseq
        %v744 = vshrl.u32 %v743, 7
        %v745 = vsub.s32 %v742, %v744
        %v746 = vrot.slane %v718, %v745
        %v747 = vcombine.high %v725, %v725
        %v748 = vcombine.high %v732, %v732
        %v749 = vcombine.high %v739, %v739
        %v750 = vcombine.high %v746, %v746
        %v751 = vlaneseq
        %v752 = vshrl.u32 %v751, 7
        %v753 = vsub.s32 0, %v752
        %v754 = vrot.slane %v676, %v753
        %v755 = vlaneseq
        %v756 = vshrl.u32 %v755, 7
        %v757 = vsub.s32 0, %v756
        %v758 = vrot.slane %v690, %v757
        %v759 = vlaneseq
        %v760 = vshrl.u32 %v759, 7
        %v761 = vsub.s32 0, %v760
        %v762 = vrot.slane %v698, %v761
        %v763 = vlaneseq
        %v764 = vshrl.u32 %v763, 7
        %v765 = vsub.s32 0, %v764
        %v766 = vrot.slane %v700, %v765
        %v767 = vlaneseq
        %v768 = vshrl.u32 %v767, 7
        %v769 = vsub.s32 0, %v768
        %v770 = vrot.slane %v683, %v769
        %v771 = vlaneseq
        %v772 = vshrl.u32 %v771, 7
        %v773 = vsub.s32 0, %v772
        %v774 = vrot.slane %v697, %v773
        %v775 = vlaneseq
        %v776 = vshrl.u32 %v775, 7
        %v777 = vsub.s32 0, %v776
        %v778 = vrot.slane %v699, %v777
        %v779 = vlaneseq
        %v780 = vshrl.u32 %v779, 7
        %v781 = vsub.s32 0, %v780
        %v782 = vrot.slane %v701, %v781
        %v783 = vlaneseq
        %v784 = vshrl.u32 %v783, 7
        %v785 = vsub.s32 0, %v784
        %v786 = vrot.slane %v725, %v785
        %v787 = vlaneseq
        %v788 = vshrl.u32 %v787, 7
        %v789 = vsub.s32 0, %v788
        %v790 = vrot.slane %v739, %v789
        %v791 = vlaneseq
        %v792 = vshrl.u32 %v791, 7
        %v793 = vsub.s32 0, %v792
        %v794 = vrot.slane %v747, %v793
        %v795 = vlaneseq
        %v796 = vshrl.u32 %v795, 7
        %v797 = vsub.s32 0, %v796
        %v798 = vrot.slane %v749, %v797
        %v799 = vlaneseq
        %v800 = vshrl.u32 %v799, 7
        %v801 = vsub.s32 0, %v800
        %v802 = vrot.slane %v732, %v801
        %v803 = vlaneseq
        %v804 = vshrl.u32 %v803, 7
        %v805 = vsub.s32 0, %v804
        %v806 = vrot.slane %v746, %v805
        %v807 = vlaneseq
        %v808 = vshrl.u32 %v807, 7
        %v809 = vsub.s32 0, %v808
        %v810 = vrot.slane %v748, %v809
        %v811 = vlaneseq
        %v812 = vshrl.u32 %v811, 7
        %v813 = vsub.s32 0, %v812
        %v814 = vrot.slane %v750, %v813
        %v831 = vmul.f32 %v515, %v754
        %v832 = vmul.f32 %v516, %v754
        %v833 = vmul.f32 %v517, %v754
        %v834 = vmul.f32 %v518, %v754
        %v835 = vmul.f32 %v519, %v758
        %v836 = vmul.f32 %v520, %v758
        %v837 = vmul.f32 %v521, %v758
        %v838 = vmul.f32 %v522, %v758
        %v839 = vmul.f32 %v523, %v762
        %v840 = vmul.f32 %v524, %v762
        %v841 = vmul.f32 %v525, %v762
        %v842 = vmul.f32 %v526, %v762
        %v843 = vmul.f32 %v527, %v766
        %v844 = vmul.f32 %v528, %v766
        %v845 = vmul.f32 %v529, %v766
        %v846 = vmul.f32 %v530, %v766
        %v847 = vmul.f32 %v531, %v770
        %v848 = vmul.f32 %v532, %v770
        %v849 = vmul.f32 %v533, %v770
        %v850 = vmul.f32 %v534, %v770
        %v851 = vmul.f32 %v535, %v774
        %v852 = vmul.f32 %v536, %v774
        %v853 = vmul.f32 %v537, %v774
        %v854 = vmul.f32 %v538, %v774
        %v855 = vmul.f32 %v539, %v778
        %v856 = vmul.f32 %v540, %v778
        %v857 = vmul.f32 %v541, %v778
        %v858 = vmul.f32 %v542, %v778
        %v859 = vmul.f32 %v543, %v782
        %v860 = vmul.f32 %v544, %v782
        %v861 = vmul.f32 %v545, %v782
        %v862 = vmul.f32 %v546, %v782
        %v863 = vmul.f32 %v547, %v786
        %v864 = vmul.f32 %v548, %v786
        %v865 = vmul.f32 %v549, %v786
        %v866 = vmul.f32 %v550, %v786
        %v867 = vmul.f32 %v551, %v790
        %v868 = vmul.f32 %v552, %v790
        %v869 = vmul.f32 %v553, %v790
        %v870 = vmul.f32 %v554, %v790
        %v871 = vmul.f32 %v555, %v794
        %v872 = vmul.f32 %v556, %v794
        %v873 = vmul.f32 %v557, %v794
        %v874 = vmul.f32 %v558, %v794
        %v875 = vmul.f32 %v559, %v798
        %v876 = vmul.f32 %v560, %v798
        %v877 = vmul.f32 %v561, %v798
        %v878 = vmul.f32 %v562, %v798
        %v879 = vmul.f32 %v563, %v802
        %v880 = vmul.f32 %v564, %v802
        %v881 = vmul.f32 %v565, %v802
        %v882 = vmul.f32 %v566, %v802
        %v883 = vmul.f32 %v567, %v806
        %v884 = vmul.f32 %v568, %v806
        %v885 = vmul.f32 %v569, %v806
        %v886 = vmul.f32 %v570, %v806
        %v887 = vmul.f32 %v571, %v810
        %v888 = vmul.f32 %v572, %v810
        %v889 = vmul.f32 %v573, %v810
        %v890 = vmul.f32 %v574, %v810
        %v891 = vmul.f32 %v575, %v814
        %v892 = vmul.f32 %v576, %v814
        %v893 = vmul.f32 %v577, %v814
        %v894 = vmul.f32 %v578, %v814
        %vm895 = vcmask 261120
        %v896 = vsel %vm895, %v831, 0.0
        %897 = vadd.xlane.f32.xlu0 %v896
        %v898 = vpop.xlane.xlu0 %897
        %v899 = vsel %vm895, %v832, 0.0
        %900 = vadd.xlane.f32.xlu0 %v899
        %v901 = vpop.xlane.xlu0 %900
        %v902 = vsel %vm895, %v833, 0.0
        %903 = vadd.xlane.f32.xlu0 %v902
        %v904 = vpop.xlane.xlu0 %903
        %v905 = vsel %vm895, %v834, 0.0
        %906 = vadd.xlane.f32.xlu0 %v905
        %v907 = vpop.xlane.xlu0 %906
        %v908 = vsel %vm895, %v835, 0.0
        %909 = vadd.xlane.f32.xlu0 %v908
        %v910 = vpop.xlane.xlu0 %909
        %v911 = vsel %vm895, %v836, 0.0
        %912 = vadd.xlane.f32.xlu0 %v911
        %v913 = vpop.xlane.xlu0 %912
        %v914 = vsel %vm895, %v837, 0.0
        %915 = vadd.xlane.f32.xlu0 %v914
        %v916 = vpop.xlane.xlu0 %915
        %v917 = vsel %vm895, %v838, 0.0
        %918 = vadd.xlane.f32.xlu0 %v917
        %v919 = vpop.xlane.xlu0 %918
        %v920 = vsel %vm895, %v839, 0.0
        %921 = vadd.xlane.f32.xlu0 %v920
        %v922 = vpop.xlane.xlu0 %921
        %v923 = vsel %vm895, %v840, 0.0
        %924 = vadd.xlane.f32.xlu0 %v923
        %v925 = vpop.xlane.xlu0 %924
        %v926 = vsel %vm895, %v841, 0.0
        %927 = vadd.xlane.f32.xlu0 %v926
        %v928 = vpop.xlane.xlu0 %927
        %v929 = vsel %vm895, %v842, 0.0
        %930 = vadd.xlane.f32.xlu0 %v929
        %v931 = vpop.xlane.xlu0 %930
        %v932 = vsel %vm895, %v843, 0.0
        %933 = vadd.xlane.f32.xlu0 %v932
        %v934 = vpop.xlane.xlu0 %933
        %v935 = vsel %vm895, %v844, 0.0
        %936 = vadd.xlane.f32.xlu0 %v935
        %v937 = vpop.xlane.xlu0 %936
        %v938 = vsel %vm895, %v845, 0.0
        %939 = vadd.xlane.f32.xlu0 %v938
        %v940 = vpop.xlane.xlu0 %939
        %v941 = vsel %vm895, %v846, 0.0
        %942 = vadd.xlane.f32.xlu0 %v941
        %v943 = vpop.xlane.xlu0 %942
        %v944 = vsel %vm895, %v847, 0.0
        %945 = vadd.xlane.f32.xlu0 %v944
        %v946 = vpop.xlane.xlu0 %945
        %v947 = vsel %vm895, %v848, 0.0
        %948 = vadd.xlane.f32.xlu0 %v947
        %v949 = vpop.xlane.xlu0 %948
        %v950 = vsel %vm895, %v849, 0.0
        %951 = vadd.xlane.f32.xlu0 %v950
        %v952 = vpop.xlane.xlu0 %951
        %v953 = vsel %vm895, %v850, 0.0
        %954 = vadd.xlane.f32.xlu0 %v953
        %v955 = vpop.xlane.xlu0 %954
        %v956 = vsel %vm895, %v851, 0.0
        %957 = vadd.xlane.f32.xlu0 %v956
        %v958 = vpop.xlane.xlu0 %957
        %v959 = vsel %vm895, %v852, 0.0
        %960 = vadd.xlane.f32.xlu0 %v959
        %v961 = vpop.xlane.xlu0 %960
        %v962 = vsel %vm895, %v853, 0.0
        %963 = vadd.xlane.f32.xlu0 %v962
        %v964 = vpop.xlane.xlu0 %963
        %v965 = vsel %vm895, %v854, 0.0
        %966 = vadd.xlane.f32.xlu0 %v965
        %v967 = vpop.xlane.xlu0 %966
        %v968 = vsel %vm895, %v855, 0.0
        %969 = vadd.xlane.f32.xlu0 %v968
        %v970 = vpop.xlane.xlu0 %969
        %v971 = vsel %vm895, %v856, 0.0
        %972 = vadd.xlane.f32.xlu0 %v971
        %v973 = vpop.xlane.xlu0 %972
        %v974 = vsel %vm895, %v857, 0.0
        %975 = vadd.xlane.f32.xlu0 %v974
        %v976 = vpop.xlane.xlu0 %975
        %v977 = vsel %vm895, %v858, 0.0
        %978 = vadd.xlane.f32.xlu0 %v977
        %v979 = vpop.xlane.xlu0 %978
        %v980 = vsel %vm895, %v859, 0.0
        %981 = vadd.xlane.f32.xlu0 %v980
        %v982 = vpop.xlane.xlu0 %981
        %v983 = vsel %vm895, %v860, 0.0
        %984 = vadd.xlane.f32.xlu0 %v983
        %v985 = vpop.xlane.xlu0 %984
        %v986 = vsel %vm895, %v861, 0.0
        %987 = vadd.xlane.f32.xlu0 %v986
        %v988 = vpop.xlane.xlu0 %987
        %v989 = vsel %vm895, %v862, 0.0
        %990 = vadd.xlane.f32.xlu0 %v989
        %v991 = vpop.xlane.xlu0 %990
        %v992 = vsel %vm895, %v863, 0.0
        %993 = vadd.xlane.f32.xlu0 %v992
        %v994 = vpop.xlane.xlu0 %993
        %v995 = vsel %vm895, %v864, 0.0
        %996 = vadd.xlane.f32.xlu0 %v995
        %v997 = vpop.xlane.xlu0 %996
        %v998 = vsel %vm895, %v865, 0.0
        %999 = vadd.xlane.f32.xlu0 %v998
        %v1000 = vpop.xlane.xlu0 %999
        %v1001 = vsel %vm895, %v866, 0.0
        %1002 = vadd.xlane.f32.xlu0 %v1001
        %v1003 = vpop.xlane.xlu0 %1002
        %v1004 = vsel %vm895, %v867, 0.0
        %1005 = vadd.xlane.f32.xlu0 %v1004
        %v1006 = vpop.xlane.xlu0 %1005
        %v1007 = vsel %vm895, %v868, 0.0
        %1008 = vadd.xlane.f32.xlu0 %v1007
        %v1009 = vpop.xlane.xlu0 %1008
        %v1010 = vsel %vm895, %v869, 0.0
        %1011 = vadd.xlane.f32.xlu0 %v1010
        %v1012 = vpop.xlane.xlu0 %1011
        %v1013 = vsel %vm895, %v870, 0.0
        %1014 = vadd.xlane.f32.xlu0 %v1013
        %v1015 = vpop.xlane.xlu0 %1014
        %v1016 = vsel %vm895, %v871, 0.0
        %1017 = vadd.xlane.f32.xlu0 %v1016
        %v1018 = vpop.xlane.xlu0 %1017
        %v1019 = vsel %vm895, %v872, 0.0
        %1020 = vadd.xlane.f32.xlu0 %v1019
        %v1021 = vpop.xlane.xlu0 %1020
        %v1022 = vsel %vm895, %v873, 0.0
        %1023 = vadd.xlane.f32.xlu0 %v1022
        %v1024 = vpop.xlane.xlu0 %1023
        %v1025 = vsel %vm895, %v874, 0.0
        %1026 = vadd.xlane.f32.xlu0 %v1025
        %v1027 = vpop.xlane.xlu0 %1026
        %v1028 = vsel %vm895, %v875, 0.0
        %1029 = vadd.xlane.f32.xlu0 %v1028
        %v1030 = vpop.xlane.xlu0 %1029
        %v1031 = vsel %vm895, %v876, 0.0
        %1032 = vadd.xlane.f32.xlu0 %v1031
        %v1033 = vpop.xlane.xlu0 %1032
        %v1034 = vsel %vm895, %v877, 0.0
        %1035 = vadd.xlane.f32.xlu0 %v1034
        %v1036 = vpop.xlane.xlu0 %1035
        %v1037 = vsel %vm895, %v878, 0.0
        %1038 = vadd.xlane.f32.xlu0 %v1037
        %v1039 = vpop.xlane.xlu0 %1038
        %v1040 = vsel %vm895, %v879, 0.0
        %1041 = vadd.xlane.f32.xlu0 %v1040
        %v1042 = vpop.xlane.xlu0 %1041
        %v1043 = vsel %vm895, %v880, 0.0
        %1044 = vadd.xlane.f32.xlu0 %v1043
        %v1045 = vpop.xlane.xlu0 %1044
        %v1046 = vsel %vm895, %v881, 0.0
        %1047 = vadd.xlane.f32.xlu0 %v1046
        %v1048 = vpop.xlane.xlu0 %1047
        %v1049 = vsel %vm895, %v882, 0.0
        %1050 = vadd.xlane.f32.xlu0 %v1049
        %v1051 = vpop.xlane.xlu0 %1050
        %v1052 = vsel %vm895, %v883, 0.0
        %1053 = vadd.xlane.f32.xlu0 %v1052
        %v1054 = vpop.xlane.xlu0 %1053
        %v1055 = vsel %vm895, %v884, 0.0
        %1056 = vadd.xlane.f32.xlu0 %v1055
        %v1057 = vpop.xlane.xlu0 %1056
        %v1058 = vsel %vm895, %v885, 0.0
        %1059 = vadd.xlane.f32.xlu0 %v1058
        %v1060 = vpop.xlane.xlu0 %1059
        %v1061 = vsel %vm895, %v886, 0.0
        %1062 = vadd.xlane.f32.xlu0 %v1061
        %v1063 = vpop.xlane.xlu0 %1062
        %v1064 = vsel %vm895, %v887, 0.0
        %1065 = vadd.xlane.f32.xlu0 %v1064
        %v1066 = vpop.xlane.xlu0 %1065
        %v1067 = vsel %vm895, %v888, 0.0
        %1068 = vadd.xlane.f32.xlu0 %v1067
        %v1069 = vpop.xlane.xlu0 %1068
        %v1070 = vsel %vm895, %v889, 0.0
        %1071 = vadd.xlane.f32.xlu0 %v1070
        %v1072 = vpop.xlane.xlu0 %1071
        %v1073 = vsel %vm895, %v890, 0.0
        %1074 = vadd.xlane.f32.xlu0 %v1073
        %v1075 = vpop.xlane.xlu0 %1074
        %v1076 = vsel %vm895, %v891, 0.0
        %1077 = vadd.xlane.f32.xlu0 %v1076
        %v1078 = vpop.xlane.xlu0 %1077
        %v1079 = vsel %vm895, %v892, 0.0
        %1080 = vadd.xlane.f32.xlu0 %v1079
        %v1081 = vpop.xlane.xlu0 %1080
        %v1082 = vsel %vm895, %v893, 0.0
        %1083 = vadd.xlane.f32.xlu0 %v1082
        %v1084 = vpop.xlane.xlu0 %1083
        %v1085 = vsel %vm895, %v894, 0.0
        %1086 = vadd.xlane.f32.xlu0 %v1085
        %v1087 = vpop.xlane.xlu0 %1086
        %v1090 = vcombine.high %v645, %v645
        %v1092 = vunpack.c.l.s4 1966171168
        %v1093 = vunpack.c.0.s8 %v1092
        %v1094 = vlaneseq
        %v1095 = vshrl.u32 %v1094, 7
        %v1096 = vsub.s32 %v1093, %v1095
        %v1097 = vrot.slane %v645, %v1096
        %v1099 = vunpack.c.l.s4 1966171168
        %v1100 = vunpack.c.0.s8 %v1099
        %v1101 = vlaneseq
        %v1102 = vshrl.u32 %v1101, 7
        %v1103 = vsub.s32 %v1100, %v1102
        %v1104 = vrot.slane %v1090, %v1103
        %v1105 = vcombine.high %v1097, %v1097
        %v1106 = vcombine.high %v1104, %v1104
        %v1108 = vunpack.c.l.s4 1966171168
        %v1109 = vunpack.c.0.s8 %v1108
        %v1110 = vlaneseq
        %v1111 = vshrl.u32 %v1110, 7
        %v1112 = vsub.s32 %v1109, %v1111
        %v1113 = vrot.slane %v1097, %v1112
        %v1115 = vunpack.c.l.s4 1966171168
        %v1116 = vunpack.c.0.s8 %v1115
        %v1117 = vlaneseq
        %v1118 = vshrl.u32 %v1117, 7
        %v1119 = vsub.s32 %v1116, %v1118
        %v1120 = vrot.slane %v1104, %v1119
        %v1122 = vunpack.c.l.s4 1966171168
        %v1123 = vunpack.c.0.s8 %v1122
        %v1124 = vlaneseq
        %v1125 = vshrl.u32 %v1124, 7
        %v1126 = vsub.s32 %v1123, %v1125
        %v1127 = vrot.slane %v1105, %v1126
        %v1129 = vunpack.c.l.s4 1966171168
        %v1130 = vunpack.c.0.s8 %v1129
        %v1131 = vlaneseq
        %v1132 = vshrl.u32 %v1131, 7
        %v1133 = vsub.s32 %v1130, %v1132
        %v1134 = vrot.slane %v1106, %v1133
        %v1135 = vcombine.high %v1113, %v1113
        %v1136 = vcombine.high %v1120, %v1120
        %v1137 = vcombine.high %v1127, %v1127
        %v1138 = vcombine.high %v1134, %v1134
        %v1139 = vcombine.high %v646, %v646
        %v1141 = vunpack.c.l.s4 1966171168
        %v1142 = vunpack.c.0.s8 %v1141
        %v1143 = vlaneseq
        %v1144 = vshrl.u32 %v1143, 7
        %v1145 = vsub.s32 %v1142, %v1144
        %v1146 = vrot.slane %v646, %v1145
        %v1148 = vunpack.c.l.s4 1966171168
        %v1149 = vunpack.c.0.s8 %v1148
        %v1150 = vlaneseq
        %v1151 = vshrl.u32 %v1150, 7
        %v1152 = vsub.s32 %v1149, %v1151
        %v1153 = vrot.slane %v1139, %v1152
        %v1154 = vcombine.high %v1146, %v1146
        %v1155 = vcombine.high %v1153, %v1153
        %v1157 = vunpack.c.l.s4 1966171168
        %v1158 = vunpack.c.0.s8 %v1157
        %v1159 = vlaneseq
        %v1160 = vshrl.u32 %v1159, 7
        %v1161 = vsub.s32 %v1158, %v1160
        %v1162 = vrot.slane %v1146, %v1161
        %v1164 = vunpack.c.l.s4 1966171168
        %v1165 = vunpack.c.0.s8 %v1164
        %v1166 = vlaneseq
        %v1167 = vshrl.u32 %v1166, 7
        %v1168 = vsub.s32 %v1165, %v1167
        %v1169 = vrot.slane %v1153, %v1168
        %v1171 = vunpack.c.l.s4 1966171168
        %v1172 = vunpack.c.0.s8 %v1171
        %v1173 = vlaneseq
        %v1174 = vshrl.u32 %v1173, 7
        %v1175 = vsub.s32 %v1172, %v1174
        %v1176 = vrot.slane %v1154, %v1175
        %v1178 = vunpack.c.l.s4 1966171168
        %v1179 = vunpack.c.0.s8 %v1178
        %v1180 = vlaneseq
        %v1181 = vshrl.u32 %v1180, 7
        %v1182 = vsub.s32 %v1179, %v1181
        %v1183 = vrot.slane %v1155, %v1182
        %v1184 = vcombine.high %v1162, %v1162
        %v1185 = vcombine.high %v1169, %v1169
        %v1186 = vcombine.high %v1176, %v1176
        %v1187 = vcombine.high %v1183, %v1183
        %v1188 = vlaneseq
        %v1189 = vshrl.u32 %v1188, 7
        %v1190 = vsub.s32 0, %v1189
        %v1191 = vrot.slane %v1113, %v1190
        %v1192 = vlaneseq
        %v1193 = vshrl.u32 %v1192, 7
        %v1194 = vsub.s32 0, %v1193
        %v1195 = vrot.slane %v1127, %v1194
        %v1196 = vlaneseq
        %v1197 = vshrl.u32 %v1196, 7
        %v1198 = vsub.s32 0, %v1197
        %v1199 = vrot.slane %v1135, %v1198
        %v1200 = vlaneseq
        %v1201 = vshrl.u32 %v1200, 7
        %v1202 = vsub.s32 0, %v1201
        %v1203 = vrot.slane %v1137, %v1202
        %v1204 = vlaneseq
        %v1205 = vshrl.u32 %v1204, 7
        %v1206 = vsub.s32 0, %v1205
        %v1207 = vrot.slane %v1120, %v1206
        %v1208 = vlaneseq
        %v1209 = vshrl.u32 %v1208, 7
        %v1210 = vsub.s32 0, %v1209
        %v1211 = vrot.slane %v1134, %v1210
        %v1212 = vlaneseq
        %v1213 = vshrl.u32 %v1212, 7
        %v1214 = vsub.s32 0, %v1213
        %v1215 = vrot.slane %v1136, %v1214
        %v1216 = vlaneseq
        %v1217 = vshrl.u32 %v1216, 7
        %v1218 = vsub.s32 0, %v1217
        %v1219 = vrot.slane %v1138, %v1218
        %v1220 = vlaneseq
        %v1221 = vshrl.u32 %v1220, 7
        %v1222 = vsub.s32 0, %v1221
        %v1223 = vrot.slane %v1162, %v1222
        %v1224 = vlaneseq
        %v1225 = vshrl.u32 %v1224, 7
        %v1226 = vsub.s32 0, %v1225
        %v1227 = vrot.slane %v1176, %v1226
        %v1228 = vlaneseq
        %v1229 = vshrl.u32 %v1228, 7
        %v1230 = vsub.s32 0, %v1229
        %v1231 = vrot.slane %v1184, %v1230
        %v1232 = vlaneseq
        %v1233 = vshrl.u32 %v1232, 7
        %v1234 = vsub.s32 0, %v1233
        %v1235 = vrot.slane %v1186, %v1234
        %v1236 = vlaneseq
        %v1237 = vshrl.u32 %v1236, 7
        %v1238 = vsub.s32 0, %v1237
        %v1239 = vrot.slane %v1169, %v1238
        %v1240 = vlaneseq
        %v1241 = vshrl.u32 %v1240, 7
        %v1242 = vsub.s32 0, %v1241
        %v1243 = vrot.slane %v1183, %v1242
        %v1244 = vlaneseq
        %v1245 = vshrl.u32 %v1244, 7
        %v1246 = vsub.s32 0, %v1245
        %v1247 = vrot.slane %v1185, %v1246
        %v1248 = vlaneseq
        %v1249 = vshrl.u32 %v1248, 7
        %v1250 = vsub.s32 0, %v1249
        %v1251 = vrot.slane %v1187, %v1250
        %v1268 = vmul.f32 %v515, %v1191
        %v1269 = vmul.f32 %v516, %v1191
        %v1270 = vmul.f32 %v517, %v1191
        %v1271 = vmul.f32 %v518, %v1191
        %v1272 = vmul.f32 %v519, %v1195
        %v1273 = vmul.f32 %v520, %v1195
        %v1274 = vmul.f32 %v521, %v1195
        %v1275 = vmul.f32 %v522, %v1195
        %v1276 = vmul.f32 %v523, %v1199
        %v1277 = vmul.f32 %v524, %v1199
        %v1278 = vmul.f32 %v525, %v1199
        %v1279 = vmul.f32 %v526, %v1199
        %v1280 = vmul.f32 %v527, %v1203
        %v1281 = vmul.f32 %v528, %v1203
        %v1282 = vmul.f32 %v529, %v1203
        %v1283 = vmul.f32 %v530, %v1203
        %v1284 = vmul.f32 %v531, %v1207
        %v1285 = vmul.f32 %v532, %v1207
        %v1286 = vmul.f32 %v533, %v1207
        %v1287 = vmul.f32 %v534, %v1207
        %v1288 = vmul.f32 %v535, %v1211
        %v1289 = vmul.f32 %v536, %v1211
        %v1290 = vmul.f32 %v537, %v1211
        %v1291 = vmul.f32 %v538, %v1211
        %v1292 = vmul.f32 %v539, %v1215
        %v1293 = vmul.f32 %v540, %v1215
        %v1294 = vmul.f32 %v541, %v1215
        %v1295 = vmul.f32 %v542, %v1215
        %v1296 = vmul.f32 %v543, %v1219
        %v1297 = vmul.f32 %v544, %v1219
        %v1298 = vmul.f32 %v545, %v1219
        %v1299 = vmul.f32 %v546, %v1219
        %v1300 = vmul.f32 %v547, %v1223
        %v1301 = vmul.f32 %v548, %v1223
        %v1302 = vmul.f32 %v549, %v1223
        %v1303 = vmul.f32 %v550, %v1223
        %v1304 = vmul.f32 %v551, %v1227
        %v1305 = vmul.f32 %v552, %v1227
        %v1306 = vmul.f32 %v553, %v1227
        %v1307 = vmul.f32 %v554, %v1227
        %v1308 = vmul.f32 %v555, %v1231
        %v1309 = vmul.f32 %v556, %v1231
        %v1310 = vmul.f32 %v557, %v1231
        %v1311 = vmul.f32 %v558, %v1231
        %v1312 = vmul.f32 %v559, %v1235
        %v1313 = vmul.f32 %v560, %v1235
        %v1314 = vmul.f32 %v561, %v1235
        %v1315 = vmul.f32 %v562, %v1235
        %v1316 = vmul.f32 %v563, %v1239
        %v1317 = vmul.f32 %v564, %v1239
        %v1318 = vmul.f32 %v565, %v1239
        %v1319 = vmul.f32 %v566, %v1239
        %v1320 = vmul.f32 %v567, %v1243
        %v1321 = vmul.f32 %v568, %v1243
        %v1322 = vmul.f32 %v569, %v1243
        %v1323 = vmul.f32 %v570, %v1243
        %v1324 = vmul.f32 %v571, %v1247
        %v1325 = vmul.f32 %v572, %v1247
        %v1326 = vmul.f32 %v573, %v1247
        %v1327 = vmul.f32 %v574, %v1247
        %v1328 = vmul.f32 %v575, %v1251
        %v1329 = vmul.f32 %v576, %v1251
        %v1330 = vmul.f32 %v577, %v1251
        %v1331 = vmul.f32 %v578, %v1251
        %v1332 = vsel %vm895, %v1268, 0.0
        %1333 = vadd.xlane.f32.xlu0 %v1332
        %v1334 = vpop.xlane.xlu0 %1333
        %v1335 = vsel %vm895, %v1269, 0.0
        %1336 = vadd.xlane.f32.xlu0 %v1335
        %v1337 = vpop.xlane.xlu0 %1336
        %v1338 = vsel %vm895, %v1270, 0.0
        %1339 = vadd.xlane.f32.xlu0 %v1338
        %v1340 = vpop.xlane.xlu0 %1339
        %v1341 = vsel %vm895, %v1271, 0.0
        %1342 = vadd.xlane.f32.xlu0 %v1341
        %v1343 = vpop.xlane.xlu0 %1342
        %v1344 = vsel %vm895, %v1272, 0.0
        %1345 = vadd.xlane.f32.xlu0 %v1344
        %v1346 = vpop.xlane.xlu0 %1345
        %v1347 = vsel %vm895, %v1273, 0.0
        %1348 = vadd.xlane.f32.xlu0 %v1347
        %v1349 = vpop.xlane.xlu0 %1348
        %v1350 = vsel %vm895, %v1274, 0.0
        %1351 = vadd.xlane.f32.xlu0 %v1350
        %v1352 = vpop.xlane.xlu0 %1351
        %v1353 = vsel %vm895, %v1275, 0.0
        %1354 = vadd.xlane.f32.xlu0 %v1353
        %v1355 = vpop.xlane.xlu0 %1354
        %v1356 = vsel %vm895, %v1276, 0.0
        %1357 = vadd.xlane.f32.xlu0 %v1356
        %v1358 = vpop.xlane.xlu0 %1357
        %v1359 = vsel %vm895, %v1277, 0.0
        %1360 = vadd.xlane.f32.xlu0 %v1359
        %v1361 = vpop.xlane.xlu0 %1360
        %v1362 = vsel %vm895, %v1278, 0.0
        %1363 = vadd.xlane.f32.xlu0 %v1362
        %v1364 = vpop.xlane.xlu0 %1363
        %v1365 = vsel %vm895, %v1279, 0.0
        %1366 = vadd.xlane.f32.xlu0 %v1365
        %v1367 = vpop.xlane.xlu0 %1366
        %v1368 = vsel %vm895, %v1280, 0.0
        %1369 = vadd.xlane.f32.xlu0 %v1368
        %v1370 = vpop.xlane.xlu0 %1369
        %v1371 = vsel %vm895, %v1281, 0.0
        %1372 = vadd.xlane.f32.xlu0 %v1371
        %v1373 = vpop.xlane.xlu0 %1372
        %v1374 = vsel %vm895, %v1282, 0.0
        %1375 = vadd.xlane.f32.xlu0 %v1374
        %v1376 = vpop.xlane.xlu0 %1375
        %v1377 = vsel %vm895, %v1283, 0.0
        %1378 = vadd.xlane.f32.xlu0 %v1377
        %v1379 = vpop.xlane.xlu0 %1378
        %v1380 = vsel %vm895, %v1284, 0.0
        %1381 = vadd.xlane.f32.xlu0 %v1380
        %v1382 = vpop.xlane.xlu0 %1381
        %v1383 = vsel %vm895, %v1285, 0.0
        %1384 = vadd.xlane.f32.xlu0 %v1383
        %v1385 = vpop.xlane.xlu0 %1384
        %v1386 = vsel %vm895, %v1286, 0.0
        %1387 = vadd.xlane.f32.xlu0 %v1386
        %v1388 = vpop.xlane.xlu0 %1387
        %v1389 = vsel %vm895, %v1287, 0.0
        %1390 = vadd.xlane.f32.xlu0 %v1389
        %v1391 = vpop.xlane.xlu0 %1390
        %v1392 = vsel %vm895, %v1288, 0.0
        %1393 = vadd.xlane.f32.xlu0 %v1392
        %v1394 = vpop.xlane.xlu0 %1393
        %v1395 = vsel %vm895, %v1289, 0.0
        %1396 = vadd.xlane.f32.xlu0 %v1395
        %v1397 = vpop.xlane.xlu0 %1396
        %v1398 = vsel %vm895, %v1290, 0.0
        %1399 = vadd.xlane.f32.xlu0 %v1398
        %v1400 = vpop.xlane.xlu0 %1399
        %v1401 = vsel %vm895, %v1291, 0.0
        %1402 = vadd.xlane.f32.xlu0 %v1401
        %v1403 = vpop.xlane.xlu0 %1402
        %v1404 = vsel %vm895, %v1292, 0.0
        %1405 = vadd.xlane.f32.xlu0 %v1404
        %v1406 = vpop.xlane.xlu0 %1405
        %v1407 = vsel %vm895, %v1293, 0.0
        %1408 = vadd.xlane.f32.xlu0 %v1407
        %v1409 = vpop.xlane.xlu0 %1408
        %v1410 = vsel %vm895, %v1294, 0.0
        %1411 = vadd.xlane.f32.xlu0 %v1410
        %v1412 = vpop.xlane.xlu0 %1411
        %v1413 = vsel %vm895, %v1295, 0.0
        %1414 = vadd.xlane.f32.xlu0 %v1413
        %v1415 = vpop.xlane.xlu0 %1414
        %v1416 = vsel %vm895, %v1296, 0.0
        %1417 = vadd.xlane.f32.xlu0 %v1416
        %v1418 = vpop.xlane.xlu0 %1417
        %v1419 = vsel %vm895, %v1297, 0.0
        %1420 = vadd.xlane.f32.xlu0 %v1419
        %v1421 = vpop.xlane.xlu0 %1420
        %v1422 = vsel %vm895, %v1298, 0.0
        %1423 = vadd.xlane.f32.xlu0 %v1422
        %v1424 = vpop.xlane.xlu0 %1423
        %v1425 = vsel %vm895, %v1299, 0.0
        %1426 = vadd.xlane.f32.xlu0 %v1425
        %v1427 = vpop.xlane.xlu0 %1426
        %v1428 = vsel %vm895, %v1300, 0.0
        %1429 = vadd.xlane.f32.xlu0 %v1428
        %v1430 = vpop.xlane.xlu0 %1429
        %v1431 = vsel %vm895, %v1301, 0.0
        %1432 = vadd.xlane.f32.xlu0 %v1431
        %v1433 = vpop.xlane.xlu0 %1432
        %v1434 = vsel %vm895, %v1302, 0.0
        %1435 = vadd.xlane.f32.xlu0 %v1434
        %v1436 = vpop.xlane.xlu0 %1435
        %v1437 = vsel %vm895, %v1303, 0.0
        %1438 = vadd.xlane.f32.xlu0 %v1437
        %v1439 = vpop.xlane.xlu0 %1438
        %v1440 = vsel %vm895, %v1304, 0.0
        %1441 = vadd.xlane.f32.xlu0 %v1440
        %v1442 = vpop.xlane.xlu0 %1441
        %v1443 = vsel %vm895, %v1305, 0.0
        %1444 = vadd.xlane.f32.xlu0 %v1443
        %v1445 = vpop.xlane.xlu0 %1444
        %v1446 = vsel %vm895, %v1306, 0.0
        %1447 = vadd.xlane.f32.xlu0 %v1446
        %v1448 = vpop.xlane.xlu0 %1447
        %v1449 = vsel %vm895, %v1307, 0.0
        %1450 = vadd.xlane.f32.xlu0 %v1449
        %v1451 = vpop.xlane.xlu0 %1450
        %v1452 = vsel %vm895, %v1308, 0.0
        %1453 = vadd.xlane.f32.xlu0 %v1452
        %v1454 = vpop.xlane.xlu0 %1453
        %v1455 = vsel %vm895, %v1309, 0.0
        %1456 = vadd.xlane.f32.xlu0 %v1455
        %v1457 = vpop.xlane.xlu0 %1456
        %v1458 = vsel %vm895, %v1310, 0.0
        %1459 = vadd.xlane.f32.xlu0 %v1458
        %v1460 = vpop.xlane.xlu0 %1459
        %v1461 = vsel %vm895, %v1311, 0.0
        %1462 = vadd.xlane.f32.xlu0 %v1461
        %v1463 = vpop.xlane.xlu0 %1462
        %v1464 = vsel %vm895, %v1312, 0.0
        %1465 = vadd.xlane.f32.xlu0 %v1464
        %v1466 = vpop.xlane.xlu0 %1465
        %v1467 = vsel %vm895, %v1313, 0.0
        %1468 = vadd.xlane.f32.xlu0 %v1467
        %v1469 = vpop.xlane.xlu0 %1468
        %v1470 = vsel %vm895, %v1314, 0.0
        %1471 = vadd.xlane.f32.xlu0 %v1470
        %v1472 = vpop.xlane.xlu0 %1471
        %v1473 = vsel %vm895, %v1315, 0.0
        %1474 = vadd.xlane.f32.xlu0 %v1473
        %v1475 = vpop.xlane.xlu0 %1474
        %v1476 = vsel %vm895, %v1316, 0.0
        %1477 = vadd.xlane.f32.xlu0 %v1476
        %v1478 = vpop.xlane.xlu0 %1477
        %v1479 = vsel %vm895, %v1317, 0.0
        %1480 = vadd.xlane.f32.xlu0 %v1479
        %v1481 = vpop.xlane.xlu0 %1480
        %v1482 = vsel %vm895, %v1318, 0.0
        %1483 = vadd.xlane.f32.xlu0 %v1482
        %v1484 = vpop.xlane.xlu0 %1483
        %v1485 = vsel %vm895, %v1319, 0.0
        %1486 = vadd.xlane.f32.xlu0 %v1485
        %v1487 = vpop.xlane.xlu0 %1486
        %v1488 = vsel %vm895, %v1320, 0.0
        %1489 = vadd.xlane.f32.xlu0 %v1488
        %v1490 = vpop.xlane.xlu0 %1489
        %v1491 = vsel %vm895, %v1321, 0.0
        %1492 = vadd.xlane.f32.xlu0 %v1491
        %v1493 = vpop.xlane.xlu0 %1492
        %v1494 = vsel %vm895, %v1322, 0.0
        %1495 = vadd.xlane.f32.xlu0 %v1494
        %v1496 = vpop.xlane.xlu0 %1495
        %v1497 = vsel %vm895, %v1323, 0.0
        %1498 = vadd.xlane.f32.xlu0 %v1497
        %v1499 = vpop.xlane.xlu0 %1498
        %v1500 = vsel %vm895, %v1324, 0.0
        %1501 = vadd.xlane.f32.xlu0 %v1500
        %v1502 = vpop.xlane.xlu0 %1501
        %v1503 = vsel %vm895, %v1325, 0.0
        %1504 = vadd.xlane.f32.xlu0 %v1503
        %v1505 = vpop.xlane.xlu0 %1504
        %v1506 = vsel %vm895, %v1326, 0.0
        %1507 = vadd.xlane.f32.xlu0 %v1506
        %v1508 = vpop.xlane.xlu0 %1507
        %v1509 = vsel %vm895, %v1327, 0.0
        %1510 = vadd.xlane.f32.xlu0 %v1509
        %v1511 = vpop.xlane.xlu0 %1510
        %v1512 = vsel %vm895, %v1328, 0.0
        %1513 = vadd.xlane.f32.xlu0 %v1512
        %v1514 = vpop.xlane.xlu0 %1513
        %v1515 = vsel %vm895, %v1329, 0.0
        %1516 = vadd.xlane.f32.xlu0 %v1515
        %v1517 = vpop.xlane.xlu0 %1516
        %v1518 = vsel %vm895, %v1330, 0.0
        %1519 = vadd.xlane.f32.xlu0 %v1518
        %v1520 = vpop.xlane.xlu0 %1519
        %v1521 = vsel %vm895, %v1331, 0.0
        %1522 = vadd.xlane.f32.xlu0 %v1521
        %v1523 = vpop.xlane.xlu0 %1522
        %v1526 = vcombine.high %v647, %v647
        %v1528 = vunpack.c.l.s4 1966171168
        %v1529 = vunpack.c.0.s8 %v1528
        %v1530 = vlaneseq
        %v1531 = vshrl.u32 %v1530, 7
        %v1532 = vsub.s32 %v1529, %v1531
        %v1533 = vrot.slane %v647, %v1532
        %v1535 = vunpack.c.l.s4 1966171168
        %v1536 = vunpack.c.0.s8 %v1535
        %v1537 = vlaneseq
        %v1538 = vshrl.u32 %v1537, 7
        %v1539 = vsub.s32 %v1536, %v1538
        %v1540 = vrot.slane %v1526, %v1539
        %v1541 = vcombine.high %v1533, %v1533
        %v1542 = vcombine.high %v1540, %v1540
        %v1544 = vunpack.c.l.s4 1966171168
        %v1545 = vunpack.c.0.s8 %v1544
        %v1546 = vlaneseq
        %v1547 = vshrl.u32 %v1546, 7
        %v1548 = vsub.s32 %v1545, %v1547
        %v1549 = vrot.slane %v1533, %v1548
        %v1551 = vunpack.c.l.s4 1966171168
        %v1552 = vunpack.c.0.s8 %v1551
        %v1553 = vlaneseq
        %v1554 = vshrl.u32 %v1553, 7
        %v1555 = vsub.s32 %v1552, %v1554
        %v1556 = vrot.slane %v1540, %v1555
        %v1558 = vunpack.c.l.s4 1966171168
        %v1559 = vunpack.c.0.s8 %v1558
        %v1560 = vlaneseq
        %v1561 = vshrl.u32 %v1560, 7
        %v1562 = vsub.s32 %v1559, %v1561
        %v1563 = vrot.slane %v1541, %v1562
        %v1565 = vunpack.c.l.s4 1966171168
        %v1566 = vunpack.c.0.s8 %v1565
        %v1567 = vlaneseq
        %v1568 = vshrl.u32 %v1567, 7
        %v1569 = vsub.s32 %v1566, %v1568
        %v1570 = vrot.slane %v1542, %v1569
        %v1571 = vcombine.high %v1549, %v1549
        %v1572 = vcombine.high %v1556, %v1556
        %v1573 = vcombine.high %v1563, %v1563
        %v1574 = vcombine.high %v1570, %v1570
        %v1575 = vcombine.high %v648, %v648
        %v1577 = vunpack.c.l.s4 1966171168
        %v1578 = vunpack.c.0.s8 %v1577
        %v1579 = vlaneseq
        %v1580 = vshrl.u32 %v1579, 7
        %v1581 = vsub.s32 %v1578, %v1580
        %v1582 = vrot.slane %v648, %v1581
        %v1584 = vunpack.c.l.s4 1966171168
        %v1585 = vunpack.c.0.s8 %v1584
        %v1586 = vlaneseq
        %v1587 = vshrl.u32 %v1586, 7
        %v1588 = vsub.s32 %v1585, %v1587
        %v1589 = vrot.slane %v1575, %v1588
        %v1590 = vcombine.high %v1582, %v1582
        %v1591 = vcombine.high %v1589, %v1589
        %v1593 = vunpack.c.l.s4 1966171168
        %v1594 = vunpack.c.0.s8 %v1593
        %v1595 = vlaneseq
        %v1596 = vshrl.u32 %v1595, 7
        %v1597 = vsub.s32 %v1594, %v1596
        %v1598 = vrot.slane %v1582, %v1597
        %v1600 = vunpack.c.l.s4 1966171168
        %v1601 = vunpack.c.0.s8 %v1600
        %v1602 = vlaneseq
        %v1603 = vshrl.u32 %v1602, 7
        %v1604 = vsub.s32 %v1601, %v1603
        %v1605 = vrot.slane %v1589, %v1604
        %v1607 = vunpack.c.l.s4 1966171168
        %v1608 = vunpack.c.0.s8 %v1607
        %v1609 = vlaneseq
        %v1610 = vshrl.u32 %v1609, 7
        %v1611 = vsub.s32 %v1608, %v1610
        %v1612 = vrot.slane %v1590, %v1611
        %v1614 = vunpack.c.l.s4 1966171168
        %v1615 = vunpack.c.0.s8 %v1614
        %v1616 = vlaneseq
        %v1617 = vshrl.u32 %v1616, 7
        %v1618 = vsub.s32 %v1615, %v1617
        %v1619 = vrot.slane %v1591, %v1618
        %v1620 = vcombine.high %v1598, %v1598
        %v1621 = vcombine.high %v1605, %v1605
        %v1622 = vcombine.high %v1612, %v1612
        %v1623 = vcombine.high %v1619, %v1619
        %v1624 = vlaneseq
        %v1625 = vshrl.u32 %v1624, 7
        %v1626 = vsub.s32 0, %v1625
        %v1627 = vrot.slane %v1549, %v1626
        %v1628 = vlaneseq
        %v1629 = vshrl.u32 %v1628, 7
        %v1630 = vsub.s32 0, %v1629
        %v1631 = vrot.slane %v1563, %v1630
        %v1632 = vlaneseq
        %v1633 = vshrl.u32 %v1632, 7
        %v1634 = vsub.s32 0, %v1633
        %v1635 = vrot.slane %v1571, %v1634
        %v1636 = vlaneseq
        %v1637 = vshrl.u32 %v1636, 7
        %v1638 = vsub.s32 0, %v1637
        %v1639 = vrot.slane %v1573, %v1638
        %v1640 = vlaneseq
        %v1641 = vshrl.u32 %v1640, 7
        %v1642 = vsub.s32 0, %v1641
        %v1643 = vrot.slane %v1556, %v1642
        %v1644 = vlaneseq
        %v1645 = vshrl.u32 %v1644, 7
        %v1646 = vsub.s32 0, %v1645
        %v1647 = vrot.slane %v1570, %v1646
        %v1648 = vlaneseq
        %v1649 = vshrl.u32 %v1648, 7
        %v1650 = vsub.s32 0, %v1649
        %v1651 = vrot.slane %v1572, %v1650
        %v1652 = vlaneseq
        %v1653 = vshrl.u32 %v1652, 7
        %v1654 = vsub.s32 0, %v1653
        %v1655 = vrot.slane %v1574, %v1654
        %v1656 = vlaneseq
        %v1657 = vshrl.u32 %v1656, 7
        %v1658 = vsub.s32 0, %v1657
        %v1659 = vrot.slane %v1598, %v1658
        %v1660 = vlaneseq
        %v1661 = vshrl.u32 %v1660, 7
        %v1662 = vsub.s32 0, %v1661
        %v1663 = vrot.slane %v1612, %v1662
        %v1664 = vlaneseq
        %v1665 = vshrl.u32 %v1664, 7
        %v1666 = vsub.s32 0, %v1665
        %v1667 = vrot.slane %v1620, %v1666
        %v1668 = vlaneseq
        %v1669 = vshrl.u32 %v1668, 7
        %v1670 = vsub.s32 0, %v1669
        %v1671 = vrot.slane %v1622, %v1670
        %v1672 = vlaneseq
        %v1673 = vshrl.u32 %v1672, 7
        %v1674 = vsub.s32 0, %v1673
        %v1675 = vrot.slane %v1605, %v1674
        %v1676 = vlaneseq
        %v1677 = vshrl.u32 %v1676, 7
        %v1678 = vsub.s32 0, %v1677
        %v1679 = vrot.slane %v1619, %v1678
        %v1680 = vlaneseq
        %v1681 = vshrl.u32 %v1680, 7
        %v1682 = vsub.s32 0, %v1681
        %v1683 = vrot.slane %v1621, %v1682
        %v1684 = vlaneseq
        %v1685 = vshrl.u32 %v1684, 7
        %v1686 = vsub.s32 0, %v1685
        %v1687 = vrot.slane %v1623, %v1686
        %v1704 = vmul.f32 %v579, %v1627
        %v1705 = vmul.f32 %v580, %v1627
        %v1706 = vmul.f32 %v581, %v1627
        %v1707 = vmul.f32 %v582, %v1627
        %v1708 = vmul.f32 %v583, %v1631
        %v1709 = vmul.f32 %v584, %v1631
        %v1710 = vmul.f32 %v585, %v1631
        %v1711 = vmul.f32 %v586, %v1631
        %v1712 = vmul.f32 %v587, %v1635
        %v1713 = vmul.f32 %v588, %v1635
        %v1714 = vmul.f32 %v589, %v1635
        %v1715 = vmul.f32 %v590, %v1635
        %v1716 = vmul.f32 %v591, %v1639
        %v1717 = vmul.f32 %v592, %v1639
        %v1718 = vmul.f32 %v593, %v1639
        %v1719 = vmul.f32 %v594, %v1639
        %v1720 = vmul.f32 %v595, %v1643
        %v1721 = vmul.f32 %v596, %v1643
        %v1722 = vmul.f32 %v597, %v1643
        %v1723 = vmul.f32 %v598, %v1643
        %v1724 = vmul.f32 %v599, %v1647
        %v1725 = vmul.f32 %v600, %v1647
        %v1726 = vmul.f32 %v601, %v1647
        %v1727 = vmul.f32 %v602, %v1647
        %v1728 = vmul.f32 %v603, %v1651
        %v1729 = vmul.f32 %v604, %v1651
        %v1730 = vmul.f32 %v605, %v1651
        %v1731 = vmul.f32 %v606, %v1651
        %v1732 = vmul.f32 %v607, %v1655
        %v1733 = vmul.f32 %v608, %v1655
        %v1734 = vmul.f32 %v609, %v1655
        %v1735 = vmul.f32 %v610, %v1655
        %v1736 = vmul.f32 %v611, %v1659
        %v1737 = vmul.f32 %v612, %v1659
        %v1738 = vmul.f32 %v613, %v1659
        %v1739 = vmul.f32 %v614, %v1659
        %v1740 = vmul.f32 %v615, %v1663
        %v1741 = vmul.f32 %v616, %v1663
        %v1742 = vmul.f32 %v617, %v1663
        %v1743 = vmul.f32 %v618, %v1663
        %v1744 = vmul.f32 %v619, %v1667
        %v1745 = vmul.f32 %v620, %v1667
        %v1746 = vmul.f32 %v621, %v1667
        %v1747 = vmul.f32 %v622, %v1667
        %v1748 = vmul.f32 %v623, %v1671
        %v1749 = vmul.f32 %v624, %v1671
        %v1750 = vmul.f32 %v625, %v1671
        %v1751 = vmul.f32 %v626, %v1671
        %v1752 = vmul.f32 %v627, %v1675
        %v1753 = vmul.f32 %v628, %v1675
        %v1754 = vmul.f32 %v629, %v1675
        %v1755 = vmul.f32 %v630, %v1675
        %v1756 = vmul.f32 %v631, %v1679
        %v1757 = vmul.f32 %v632, %v1679
        %v1758 = vmul.f32 %v633, %v1679
        %v1759 = vmul.f32 %v634, %v1679
        %v1760 = vmul.f32 %v635, %v1683
        %v1761 = vmul.f32 %v636, %v1683
        %v1762 = vmul.f32 %v637, %v1683
        %v1763 = vmul.f32 %v638, %v1683
        %v1764 = vmul.f32 %v639, %v1687
        %v1765 = vmul.f32 %v640, %v1687
        %v1766 = vmul.f32 %v641, %v1687
        %v1767 = vmul.f32 %v642, %v1687
        %v1768 = vsel %vm895, %v1704, 0.0
        %1769 = vadd.xlane.f32.xlu0 %v1768
        %v1770 = vpop.xlane.xlu0 %1769
        %v1771 = vsel %vm895, %v1705, 0.0
        %1772 = vadd.xlane.f32.xlu0 %v1771
        %v1773 = vpop.xlane.xlu0 %1772
        %v1774 = vsel %vm895, %v1706, 0.0
        %1775 = vadd.xlane.f32.xlu0 %v1774
        %v1776 = vpop.xlane.xlu0 %1775
        %v1777 = vsel %vm895, %v1707, 0.0
        %1778 = vadd.xlane.f32.xlu0 %v1777
        %v1779 = vpop.xlane.xlu0 %1778
        %v1780 = vsel %vm895, %v1708, 0.0
        %1781 = vadd.xlane.f32.xlu0 %v1780
        %v1782 = vpop.xlane.xlu0 %1781
        %v1783 = vsel %vm895, %v1709, 0.0
        %1784 = vadd.xlane.f32.xlu0 %v1783
        %v1785 = vpop.xlane.xlu0 %1784
        %v1786 = vsel %vm895, %v1710, 0.0
        %1787 = vadd.xlane.f32.xlu0 %v1786
        %v1788 = vpop.xlane.xlu0 %1787
        %v1789 = vsel %vm895, %v1711, 0.0
        %1790 = vadd.xlane.f32.xlu0 %v1789
        %v1791 = vpop.xlane.xlu0 %1790
        %v1792 = vsel %vm895, %v1712, 0.0
        %1793 = vadd.xlane.f32.xlu0 %v1792
        %v1794 = vpop.xlane.xlu0 %1793
        %v1795 = vsel %vm895, %v1713, 0.0
        %1796 = vadd.xlane.f32.xlu0 %v1795
        %v1797 = vpop.xlane.xlu0 %1796
        %v1798 = vsel %vm895, %v1714, 0.0
        %1799 = vadd.xlane.f32.xlu0 %v1798
        %v1800 = vpop.xlane.xlu0 %1799
        %v1801 = vsel %vm895, %v1715, 0.0
        %1802 = vadd.xlane.f32.xlu0 %v1801
        %v1803 = vpop.xlane.xlu0 %1802
        %v1804 = vsel %vm895, %v1716, 0.0
        %1805 = vadd.xlane.f32.xlu0 %v1804
        %v1806 = vpop.xlane.xlu0 %1805
        %v1807 = vsel %vm895, %v1717, 0.0
        %1808 = vadd.xlane.f32.xlu0 %v1807
        %v1809 = vpop.xlane.xlu0 %1808
        %v1810 = vsel %vm895, %v1718, 0.0
        %1811 = vadd.xlane.f32.xlu0 %v1810
        %v1812 = vpop.xlane.xlu0 %1811
        %v1813 = vsel %vm895, %v1719, 0.0
        %1814 = vadd.xlane.f32.xlu0 %v1813
        %v1815 = vpop.xlane.xlu0 %1814
        %v1816 = vsel %vm895, %v1720, 0.0
        %1817 = vadd.xlane.f32.xlu0 %v1816
        %v1818 = vpop.xlane.xlu0 %1817
        %v1819 = vsel %vm895, %v1721, 0.0
        %1820 = vadd.xlane.f32.xlu0 %v1819
        %v1821 = vpop.xlane.xlu0 %1820
        %v1822 = vsel %vm895, %v1722, 0.0
        %1823 = vadd.xlane.f32.xlu0 %v1822
        %v1824 = vpop.xlane.xlu0 %1823
        %v1825 = vsel %vm895, %v1723, 0.0
        %1826 = vadd.xlane.f32.xlu0 %v1825
        %v1827 = vpop.xlane.xlu0 %1826
        %v1828 = vsel %vm895, %v1724, 0.0
        %1829 = vadd.xlane.f32.xlu0 %v1828
        %v1830 = vpop.xlane.xlu0 %1829
        %v1831 = vsel %vm895, %v1725, 0.0
        %1832 = vadd.xlane.f32.xlu0 %v1831
        %v1833 = vpop.xlane.xlu0 %1832
        %v1834 = vsel %vm895, %v1726, 0.0
        %1835 = vadd.xlane.f32.xlu0 %v1834
        %v1836 = vpop.xlane.xlu0 %1835
        %v1837 = vsel %vm895, %v1727, 0.0
        %1838 = vadd.xlane.f32.xlu0 %v1837
        %v1839 = vpop.xlane.xlu0 %1838
        %v1840 = vsel %vm895, %v1728, 0.0
        %1841 = vadd.xlane.f32.xlu0 %v1840
        %v1842 = vpop.xlane.xlu0 %1841
        %v1843 = vsel %vm895, %v1729, 0.0
        %1844 = vadd.xlane.f32.xlu0 %v1843
        %v1845 = vpop.xlane.xlu0 %1844
        %v1846 = vsel %vm895, %v1730, 0.0
        %1847 = vadd.xlane.f32.xlu0 %v1846
        %v1848 = vpop.xlane.xlu0 %1847
        %v1849 = vsel %vm895, %v1731, 0.0
        %1850 = vadd.xlane.f32.xlu0 %v1849
        %v1851 = vpop.xlane.xlu0 %1850
        %v1852 = vsel %vm895, %v1732, 0.0
        %1853 = vadd.xlane.f32.xlu0 %v1852
        %v1854 = vpop.xlane.xlu0 %1853
        %v1855 = vsel %vm895, %v1733, 0.0
        %1856 = vadd.xlane.f32.xlu0 %v1855
        %v1857 = vpop.xlane.xlu0 %1856
        %v1858 = vsel %vm895, %v1734, 0.0
        %1859 = vadd.xlane.f32.xlu0 %v1858
        %v1860 = vpop.xlane.xlu0 %1859
        %v1861 = vsel %vm895, %v1735, 0.0
        %1862 = vadd.xlane.f32.xlu0 %v1861
        %v1863 = vpop.xlane.xlu0 %1862
        %v1864 = vsel %vm895, %v1736, 0.0
        %1865 = vadd.xlane.f32.xlu0 %v1864
        %v1866 = vpop.xlane.xlu0 %1865
        %v1867 = vsel %vm895, %v1737, 0.0
        %1868 = vadd.xlane.f32.xlu0 %v1867
        %v1869 = vpop.xlane.xlu0 %1868
        %v1870 = vsel %vm895, %v1738, 0.0
        %1871 = vadd.xlane.f32.xlu0 %v1870
        %v1872 = vpop.xlane.xlu0 %1871
        %v1873 = vsel %vm895, %v1739, 0.0
        %1874 = vadd.xlane.f32.xlu0 %v1873
        %v1875 = vpop.xlane.xlu0 %1874
        %v1876 = vsel %vm895, %v1740, 0.0
        %1877 = vadd.xlane.f32.xlu0 %v1876
        %v1878 = vpop.xlane.xlu0 %1877
        %v1879 = vsel %vm895, %v1741, 0.0
        %1880 = vadd.xlane.f32.xlu0 %v1879
        %v1881 = vpop.xlane.xlu0 %1880
        %v1882 = vsel %vm895, %v1742, 0.0
        %1883 = vadd.xlane.f32.xlu0 %v1882
        %v1884 = vpop.xlane.xlu0 %1883
        %v1885 = vsel %vm895, %v1743, 0.0
        %1886 = vadd.xlane.f32.xlu0 %v1885
        %v1887 = vpop.xlane.xlu0 %1886
        %v1888 = vsel %vm895, %v1744, 0.0
        %1889 = vadd.xlane.f32.xlu0 %v1888
        %v1890 = vpop.xlane.xlu0 %1889
        %v1891 = vsel %vm895, %v1745, 0.0
        %1892 = vadd.xlane.f32.xlu0 %v1891
        %v1893 = vpop.xlane.xlu0 %1892
        %v1894 = vsel %vm895, %v1746, 0.0
        %1895 = vadd.xlane.f32.xlu0 %v1894
        %v1896 = vpop.xlane.xlu0 %1895
        %v1897 = vsel %vm895, %v1747, 0.0
        %1898 = vadd.xlane.f32.xlu0 %v1897
        %v1899 = vpop.xlane.xlu0 %1898
        %v1900 = vsel %vm895, %v1748, 0.0
        %1901 = vadd.xlane.f32.xlu0 %v1900
        %v1902 = vpop.xlane.xlu0 %1901
        %v1903 = vsel %vm895, %v1749, 0.0
        %1904 = vadd.xlane.f32.xlu0 %v1903
        %v1905 = vpop.xlane.xlu0 %1904
        %v1906 = vsel %vm895, %v1750, 0.0
        %1907 = vadd.xlane.f32.xlu0 %v1906
        %v1908 = vpop.xlane.xlu0 %1907
        %v1909 = vsel %vm895, %v1751, 0.0
        %1910 = vadd.xlane.f32.xlu0 %v1909
        %v1911 = vpop.xlane.xlu0 %1910
        %v1912 = vsel %vm895, %v1752, 0.0
        %1913 = vadd.xlane.f32.xlu0 %v1912
        %v1914 = vpop.xlane.xlu0 %1913
        %v1915 = vsel %vm895, %v1753, 0.0
        %1916 = vadd.xlane.f32.xlu0 %v1915
        %v1917 = vpop.xlane.xlu0 %1916
        %v1918 = vsel %vm895, %v1754, 0.0
        %1919 = vadd.xlane.f32.xlu0 %v1918
        %v1920 = vpop.xlane.xlu0 %1919
        %v1921 = vsel %vm895, %v1755, 0.0
        %1922 = vadd.xlane.f32.xlu0 %v1921
        %v1923 = vpop.xlane.xlu0 %1922
        %v1924 = vsel %vm895, %v1756, 0.0
        %1925 = vadd.xlane.f32.xlu0 %v1924
        %v1926 = vpop.xlane.xlu0 %1925
        %v1927 = vsel %vm895, %v1757, 0.0
        %1928 = vadd.xlane.f32.xlu0 %v1927
        %v1929 = vpop.xlane.xlu0 %1928
        %v1930 = vsel %vm895, %v1758, 0.0
        %1931 = vadd.xlane.f32.xlu0 %v1930
        %v1932 = vpop.xlane.xlu0 %1931
        %v1933 = vsel %vm895, %v1759, 0.0
        %1934 = vadd.xlane.f32.xlu0 %v1933
        %v1935 = vpop.xlane.xlu0 %1934
        %v1936 = vsel %vm895, %v1760, 0.0
        %1937 = vadd.xlane.f32.xlu0 %v1936
        %v1938 = vpop.xlane.xlu0 %1937
        %v1939 = vsel %vm895, %v1761, 0.0
        %1940 = vadd.xlane.f32.xlu0 %v1939
        %v1941 = vpop.xlane.xlu0 %1940
        %v1942 = vsel %vm895, %v1762, 0.0
        %1943 = vadd.xlane.f32.xlu0 %v1942
        %v1944 = vpop.xlane.xlu0 %1943
        %v1945 = vsel %vm895, %v1763, 0.0
        %1946 = vadd.xlane.f32.xlu0 %v1945
        %v1947 = vpop.xlane.xlu0 %1946
        %v1948 = vsel %vm895, %v1764, 0.0
        %1949 = vadd.xlane.f32.xlu0 %v1948
        %v1950 = vpop.xlane.xlu0 %1949
        %v1951 = vsel %vm895, %v1765, 0.0
        %1952 = vadd.xlane.f32.xlu0 %v1951
        %v1953 = vpop.xlane.xlu0 %1952
        %v1954 = vsel %vm895, %v1766, 0.0
        %1955 = vadd.xlane.f32.xlu0 %v1954
        %v1956 = vpop.xlane.xlu0 %1955
        %v1957 = vsel %vm895, %v1767, 0.0
        %1958 = vadd.xlane.f32.xlu0 %v1957
        %v1959 = vpop.xlane.xlu0 %1958
        %v1962 = vcombine.high %v649, %v649
        %v1964 = vunpack.c.l.s4 1966171168
        %v1965 = vunpack.c.0.s8 %v1964
        %v1966 = vlaneseq
        %v1967 = vshrl.u32 %v1966, 7
        %v1968 = vsub.s32 %v1965, %v1967
        %v1969 = vrot.slane %v649, %v1968
        %v1971 = vunpack.c.l.s4 1966171168
        %v1972 = vunpack.c.0.s8 %v1971
        %v1973 = vlaneseq
        %v1974 = vshrl.u32 %v1973, 7
        %v1975 = vsub.s32 %v1972, %v1974
        %v1976 = vrot.slane %v1962, %v1975
        %v1977 = vcombine.high %v1969, %v1969
        %v1978 = vcombine.high %v1976, %v1976
        %v1980 = vunpack.c.l.s4 1966171168
        %v1981 = vunpack.c.0.s8 %v1980
        %v1982 = vlaneseq
        %v1983 = vshrl.u32 %v1982, 7
        %v1984 = vsub.s32 %v1981, %v1983
        %v1985 = vrot.slane %v1969, %v1984
        %v1987 = vunpack.c.l.s4 1966171168
        %v1988 = vunpack.c.0.s8 %v1987
        %v1989 = vlaneseq
        %v1990 = vshrl.u32 %v1989, 7
        %v1991 = vsub.s32 %v1988, %v1990
        %v1992 = vrot.slane %v1976, %v1991
        %v1994 = vunpack.c.l.s4 1966171168
        %v1995 = vunpack.c.0.s8 %v1994
        %v1996 = vlaneseq
        %v1997 = vshrl.u32 %v1996, 7
        %v1998 = vsub.s32 %v1995, %v1997
        %v1999 = vrot.slane %v1977, %v1998
        %v2001 = vunpack.c.l.s4 1966171168
        %v2002 = vunpack.c.0.s8 %v2001
        %v2003 = vlaneseq
        %v2004 = vshrl.u32 %v2003, 7
        %v2005 = vsub.s32 %v2002, %v2004
        %v2006 = vrot.slane %v1978, %v2005
        %v2007 = vcombine.high %v1985, %v1985
        %v2008 = vcombine.high %v1992, %v1992
        %v2009 = vcombine.high %v1999, %v1999
        %v2010 = vcombine.high %v2006, %v2006
        %v2011 = vcombine.high %v650, %v650
        %v2013 = vunpack.c.l.s4 1966171168
        %v2014 = vunpack.c.0.s8 %v2013
        %v2015 = vlaneseq
        %v2016 = vshrl.u32 %v2015, 7
        %v2017 = vsub.s32 %v2014, %v2016
        %v2018 = vrot.slane %v650, %v2017
        %v2020 = vunpack.c.l.s4 1966171168
        %v2021 = vunpack.c.0.s8 %v2020
        %v2022 = vlaneseq
        %v2023 = vshrl.u32 %v2022, 7
        %v2024 = vsub.s32 %v2021, %v2023
        %v2025 = vrot.slane %v2011, %v2024
        %v2026 = vcombine.high %v2018, %v2018
        %v2027 = vcombine.high %v2025, %v2025
        %v2029 = vunpack.c.l.s4 1966171168
        %v2030 = vunpack.c.0.s8 %v2029
        %v2031 = vlaneseq
        %v2032 = vshrl.u32 %v2031, 7
        %v2033 = vsub.s32 %v2030, %v2032
        %v2034 = vrot.slane %v2018, %v2033
        %v2036 = vunpack.c.l.s4 1966171168
        %v2037 = vunpack.c.0.s8 %v2036
        %v2038 = vlaneseq
        %v2039 = vshrl.u32 %v2038, 7
        %v2040 = vsub.s32 %v2037, %v2039
        %v2041 = vrot.slane %v2025, %v2040
        %v2043 = vunpack.c.l.s4 1966171168
        %v2044 = vunpack.c.0.s8 %v2043
        %v2045 = vlaneseq
        %v2046 = vshrl.u32 %v2045, 7
        %v2047 = vsub.s32 %v2044, %v2046
        %v2048 = vrot.slane %v2026, %v2047
        %v2050 = vunpack.c.l.s4 1966171168
        %v2051 = vunpack.c.0.s8 %v2050
        %v2052 = vlaneseq
        %v2053 = vshrl.u32 %v2052, 7
        %v2054 = vsub.s32 %v2051, %v2053
        %v2055 = vrot.slane %v2027, %v2054
        %v2056 = vcombine.high %v2034, %v2034
        %v2057 = vcombine.high %v2041, %v2041
        %v2058 = vcombine.high %v2048, %v2048
        %v2059 = vcombine.high %v2055, %v2055
        %v2060 = vlaneseq
        %v2061 = vshrl.u32 %v2060, 7
        %v2062 = vsub.s32 0, %v2061
        %v2063 = vrot.slane %v1985, %v2062
        %v2064 = vlaneseq
        %v2065 = vshrl.u32 %v2064, 7
        %v2066 = vsub.s32 0, %v2065
        %v2067 = vrot.slane %v1999, %v2066
        %v2068 = vlaneseq
        %v2069 = vshrl.u32 %v2068, 7
        %v2070 = vsub.s32 0, %v2069
        %v2071 = vrot.slane %v2007, %v2070
        %v2072 = vlaneseq
        %v2073 = vshrl.u32 %v2072, 7
        %v2074 = vsub.s32 0, %v2073
        %v2075 = vrot.slane %v2009, %v2074
        %v2076 = vlaneseq
        %v2077 = vshrl.u32 %v2076, 7
        %v2078 = vsub.s32 0, %v2077
        %v2079 = vrot.slane %v1992, %v2078
        %v2080 = vlaneseq
        %v2081 = vshrl.u32 %v2080, 7
        %v2082 = vsub.s32 0, %v2081
        %v2083 = vrot.slane %v2006, %v2082
        %v2084 = vlaneseq
        %v2085 = vshrl.u32 %v2084, 7
        %v2086 = vsub.s32 0, %v2085
        %v2087 = vrot.slane %v2008, %v2086
        %v2088 = vlaneseq
        %v2089 = vshrl.u32 %v2088, 7
        %v2090 = vsub.s32 0, %v2089
        %v2091 = vrot.slane %v2010, %v2090
        %v2092 = vlaneseq
        %v2093 = vshrl.u32 %v2092, 7
        %v2094 = vsub.s32 0, %v2093
        %v2095 = vrot.slane %v2034, %v2094
        %v2096 = vlaneseq
        %v2097 = vshrl.u32 %v2096, 7
        %v2098 = vsub.s32 0, %v2097
        %v2099 = vrot.slane %v2048, %v2098
        %v2100 = vlaneseq
        %v2101 = vshrl.u32 %v2100, 7
        %v2102 = vsub.s32 0, %v2101
        %v2103 = vrot.slane %v2056, %v2102
        %v2104 = vlaneseq
        %v2105 = vshrl.u32 %v2104, 7
        %v2106 = vsub.s32 0, %v2105
        %v2107 = vrot.slane %v2058, %v2106
        %v2108 = vlaneseq
        %v2109 = vshrl.u32 %v2108, 7
        %v2110 = vsub.s32 0, %v2109
        %v2111 = vrot.slane %v2041, %v2110
        %v2112 = vlaneseq
        %v2113 = vshrl.u32 %v2112, 7
        %v2114 = vsub.s32 0, %v2113
        %v2115 = vrot.slane %v2055, %v2114
        %v2116 = vlaneseq
        %v2117 = vshrl.u32 %v2116, 7
        %v2118 = vsub.s32 0, %v2117
        %v2119 = vrot.slane %v2057, %v2118
        %v2120 = vlaneseq
        %v2121 = vshrl.u32 %v2120, 7
        %v2122 = vsub.s32 0, %v2121
        %v2123 = vrot.slane %v2059, %v2122
        %v2140 = vmul.f32 %v579, %v2063
        %v2141 = vmul.f32 %v580, %v2063
        %v2142 = vmul.f32 %v581, %v2063
        %v2143 = vmul.f32 %v582, %v2063
        %v2144 = vmul.f32 %v583, %v2067
        %v2145 = vmul.f32 %v584, %v2067
        %v2146 = vmul.f32 %v585, %v2067
        %v2147 = vmul.f32 %v586, %v2067
        %v2148 = vmul.f32 %v587, %v2071
        %v2149 = vmul.f32 %v588, %v2071
        %v2150 = vmul.f32 %v589, %v2071
        %v2151 = vmul.f32 %v590, %v2071
        %v2152 = vmul.f32 %v591, %v2075
        %v2153 = vmul.f32 %v592, %v2075
        %v2154 = vmul.f32 %v593, %v2075
        %v2155 = vmul.f32 %v594, %v2075
        %v2156 = vmul.f32 %v595, %v2079
        %v2157 = vmul.f32 %v596, %v2079
        %v2158 = vmul.f32 %v597, %v2079
        %v2159 = vmul.f32 %v598, %v2079
        %v2160 = vmul.f32 %v599, %v2083
        %v2161 = vmul.f32 %v600, %v2083
        %v2162 = vmul.f32 %v601, %v2083
        %v2163 = vmul.f32 %v602, %v2083
        %v2164 = vmul.f32 %v603, %v2087
        %v2165 = vmul.f32 %v604, %v2087
        %v2166 = vmul.f32 %v605, %v2087
        %v2167 = vmul.f32 %v606, %v2087
        %v2168 = vmul.f32 %v607, %v2091
        %v2169 = vmul.f32 %v608, %v2091
        %v2170 = vmul.f32 %v609, %v2091
        %v2171 = vmul.f32 %v610, %v2091
        %v2172 = vmul.f32 %v611, %v2095
        %v2173 = vmul.f32 %v612, %v2095
        %v2174 = vmul.f32 %v613, %v2095
        %v2175 = vmul.f32 %v614, %v2095
        %v2176 = vmul.f32 %v615, %v2099
        %v2177 = vmul.f32 %v616, %v2099
        %v2178 = vmul.f32 %v617, %v2099
        %v2179 = vmul.f32 %v618, %v2099
        %v2180 = vmul.f32 %v619, %v2103
        %v2181 = vmul.f32 %v620, %v2103
        %v2182 = vmul.f32 %v621, %v2103
        %v2183 = vmul.f32 %v622, %v2103
        %v2184 = vmul.f32 %v623, %v2107
        %v2185 = vmul.f32 %v624, %v2107
        %v2186 = vmul.f32 %v625, %v2107
        %v2187 = vmul.f32 %v626, %v2107
        %v2188 = vmul.f32 %v627, %v2111
        %v2189 = vmul.f32 %v628, %v2111
        %v2190 = vmul.f32 %v629, %v2111
        %v2191 = vmul.f32 %v630, %v2111
        %v2192 = vmul.f32 %v631, %v2115
        %v2193 = vmul.f32 %v632, %v2115
        %v2194 = vmul.f32 %v633, %v2115
        %v2195 = vmul.f32 %v634, %v2115
        %v2196 = vmul.f32 %v635, %v2119
        %v2197 = vmul.f32 %v636, %v2119
        %v2198 = vmul.f32 %v637, %v2119
        %v2199 = vmul.f32 %v638, %v2119
        %v2200 = vmul.f32 %v639, %v2123
        %v2201 = vmul.f32 %v640, %v2123
        %v2202 = vmul.f32 %v641, %v2123
        %v2203 = vmul.f32 %v642, %v2123
        %v2204 = vsel %vm895, %v2140, 0.0
        %2205 = vadd.xlane.f32.xlu0 %v2204
        %v2206 = vpop.xlane.xlu0 %2205
        %v2207 = vsel %vm895, %v2141, 0.0
        %2208 = vadd.xlane.f32.xlu0 %v2207
        %v2209 = vpop.xlane.xlu0 %2208
        %v2210 = vsel %vm895, %v2142, 0.0
        %2211 = vadd.xlane.f32.xlu0 %v2210
        %v2212 = vpop.xlane.xlu0 %2211
        %v2213 = vsel %vm895, %v2143, 0.0
        %2214 = vadd.xlane.f32.xlu0 %v2213
        %v2215 = vpop.xlane.xlu0 %2214
        %v2216 = vsel %vm895, %v2144, 0.0
        %2217 = vadd.xlane.f32.xlu0 %v2216
        %v2218 = vpop.xlane.xlu0 %2217
        %v2219 = vsel %vm895, %v2145, 0.0
        %2220 = vadd.xlane.f32.xlu0 %v2219
        %v2221 = vpop.xlane.xlu0 %2220
        %v2222 = vsel %vm895, %v2146, 0.0
        %2223 = vadd.xlane.f32.xlu0 %v2222
        %v2224 = vpop.xlane.xlu0 %2223
        %v2225 = vsel %vm895, %v2147, 0.0
        %2226 = vadd.xlane.f32.xlu0 %v2225
        %v2227 = vpop.xlane.xlu0 %2226
        %v2228 = vsel %vm895, %v2148, 0.0
        %2229 = vadd.xlane.f32.xlu0 %v2228
        %v2230 = vpop.xlane.xlu0 %2229
        %v2231 = vsel %vm895, %v2149, 0.0
        %2232 = vadd.xlane.f32.xlu0 %v2231
        %v2233 = vpop.xlane.xlu0 %2232
        %v2234 = vsel %vm895, %v2150, 0.0
        %2235 = vadd.xlane.f32.xlu0 %v2234
        %v2236 = vpop.xlane.xlu0 %2235
        %v2237 = vsel %vm895, %v2151, 0.0
        %2238 = vadd.xlane.f32.xlu0 %v2237
        %v2239 = vpop.xlane.xlu0 %2238
        %v2240 = vsel %vm895, %v2152, 0.0
        %2241 = vadd.xlane.f32.xlu0 %v2240
        %v2242 = vpop.xlane.xlu0 %2241
        %v2243 = vsel %vm895, %v2153, 0.0
        %2244 = vadd.xlane.f32.xlu0 %v2243
        %v2245 = vpop.xlane.xlu0 %2244
        %v2246 = vsel %vm895, %v2154, 0.0
        %2247 = vadd.xlane.f32.xlu0 %v2246
        %v2248 = vpop.xlane.xlu0 %2247
        %v2249 = vsel %vm895, %v2155, 0.0
        %2250 = vadd.xlane.f32.xlu0 %v2249
        %v2251 = vpop.xlane.xlu0 %2250
        %v2252 = vsel %vm895, %v2156, 0.0
        %2253 = vadd.xlane.f32.xlu0 %v2252
        %v2254 = vpop.xlane.xlu0 %2253
        %v2255 = vsel %vm895, %v2157, 0.0
        %2256 = vadd.xlane.f32.xlu0 %v2255
        %v2257 = vpop.xlane.xlu0 %2256
        %v2258 = vsel %vm895, %v2158, 0.0
        %2259 = vadd.xlane.f32.xlu0 %v2258
        %v2260 = vpop.xlane.xlu0 %2259
        %v2261 = vsel %vm895, %v2159, 0.0
        %2262 = vadd.xlane.f32.xlu0 %v2261
        %v2263 = vpop.xlane.xlu0 %2262
        %v2264 = vsel %vm895, %v2160, 0.0
        %2265 = vadd.xlane.f32.xlu0 %v2264
        %v2266 = vpop.xlane.xlu0 %2265
        %v2267 = vsel %vm895, %v2161, 0.0
        %2268 = vadd.xlane.f32.xlu0 %v2267
        %v2269 = vpop.xlane.xlu0 %2268
        %v2270 = vsel %vm895, %v2162, 0.0
        %2271 = vadd.xlane.f32.xlu0 %v2270
        %v2272 = vpop.xlane.xlu0 %2271
        %v2273 = vsel %vm895, %v2163, 0.0
        %2274 = vadd.xlane.f32.xlu0 %v2273
        %v2275 = vpop.xlane.xlu0 %2274
        %v2276 = vsel %vm895, %v2164, 0.0
        %2277 = vadd.xlane.f32.xlu0 %v2276
        %v2278 = vpop.xlane.xlu0 %2277
        %v2279 = vsel %vm895, %v2165, 0.0
        %2280 = vadd.xlane.f32.xlu0 %v2279
        %v2281 = vpop.xlane.xlu0 %2280
        %v2282 = vsel %vm895, %v2166, 0.0
        %2283 = vadd.xlane.f32.xlu0 %v2282
        %v2284 = vpop.xlane.xlu0 %2283
        %v2285 = vsel %vm895, %v2167, 0.0
        %2286 = vadd.xlane.f32.xlu0 %v2285
        %v2287 = vpop.xlane.xlu0 %2286
        %v2288 = vsel %vm895, %v2168, 0.0
        %2289 = vadd.xlane.f32.xlu0 %v2288
        %v2290 = vpop.xlane.xlu0 %2289
        %v2291 = vsel %vm895, %v2169, 0.0
        %2292 = vadd.xlane.f32.xlu0 %v2291
        %v2293 = vpop.xlane.xlu0 %2292
        %v2294 = vsel %vm895, %v2170, 0.0
        %2295 = vadd.xlane.f32.xlu0 %v2294
        %v2296 = vpop.xlane.xlu0 %2295
        %v2297 = vsel %vm895, %v2171, 0.0
        %2298 = vadd.xlane.f32.xlu0 %v2297
        %v2299 = vpop.xlane.xlu0 %2298
        %v2300 = vsel %vm895, %v2172, 0.0
        %2301 = vadd.xlane.f32.xlu0 %v2300
        %v2302 = vpop.xlane.xlu0 %2301
        %v2303 = vsel %vm895, %v2173, 0.0
        %2304 = vadd.xlane.f32.xlu0 %v2303
        %v2305 = vpop.xlane.xlu0 %2304
        %v2306 = vsel %vm895, %v2174, 0.0
        %2307 = vadd.xlane.f32.xlu0 %v2306
        %v2308 = vpop.xlane.xlu0 %2307
        %v2309 = vsel %vm895, %v2175, 0.0
        %2310 = vadd.xlane.f32.xlu0 %v2309
        %v2311 = vpop.xlane.xlu0 %2310
        %v2312 = vsel %vm895, %v2176, 0.0
        %2313 = vadd.xlane.f32.xlu0 %v2312
        %v2314 = vpop.xlane.xlu0 %2313
        %v2315 = vsel %vm895, %v2177, 0.0
        %2316 = vadd.xlane.f32.xlu0 %v2315
        %v2317 = vpop.xlane.xlu0 %2316
        %v2318 = vsel %vm895, %v2178, 0.0
        %2319 = vadd.xlane.f32.xlu0 %v2318
        %v2320 = vpop.xlane.xlu0 %2319
        %v2321 = vsel %vm895, %v2179, 0.0
        %2322 = vadd.xlane.f32.xlu0 %v2321
        %v2323 = vpop.xlane.xlu0 %2322
        %v2324 = vsel %vm895, %v2180, 0.0
        %2325 = vadd.xlane.f32.xlu0 %v2324
        %v2326 = vpop.xlane.xlu0 %2325
        %v2327 = vsel %vm895, %v2181, 0.0
        %2328 = vadd.xlane.f32.xlu0 %v2327
        %v2329 = vpop.xlane.xlu0 %2328
        %v2330 = vsel %vm895, %v2182, 0.0
        %2331 = vadd.xlane.f32.xlu0 %v2330
        %v2332 = vpop.xlane.xlu0 %2331
        %v2333 = vsel %vm895, %v2183, 0.0
        %2334 = vadd.xlane.f32.xlu0 %v2333
        %v2335 = vpop.xlane.xlu0 %2334
        %v2336 = vsel %vm895, %v2184, 0.0
        %2337 = vadd.xlane.f32.xlu0 %v2336
        %v2338 = vpop.xlane.xlu0 %2337
        %v2339 = vsel %vm895, %v2185, 0.0
        %2340 = vadd.xlane.f32.xlu0 %v2339
        %v2341 = vpop.xlane.xlu0 %2340
        %v2342 = vsel %vm895, %v2186, 0.0
        %2343 = vadd.xlane.f32.xlu0 %v2342
        %v2344 = vpop.xlane.xlu0 %2343
        %v2345 = vsel %vm895, %v2187, 0.0
        %2346 = vadd.xlane.f32.xlu0 %v2345
        %v2347 = vpop.xlane.xlu0 %2346
        %v2348 = vsel %vm895, %v2188, 0.0
        %2349 = vadd.xlane.f32.xlu0 %v2348
        %v2350 = vpop.xlane.xlu0 %2349
        %v2351 = vsel %vm895, %v2189, 0.0
        %2352 = vadd.xlane.f32.xlu0 %v2351
        %v2353 = vpop.xlane.xlu0 %2352
        %v2354 = vsel %vm895, %v2190, 0.0
        %2355 = vadd.xlane.f32.xlu0 %v2354
        %v2356 = vpop.xlane.xlu0 %2355
        %v2357 = vsel %vm895, %v2191, 0.0
        %2358 = vadd.xlane.f32.xlu0 %v2357
        %v2359 = vpop.xlane.xlu0 %2358
        %v2360 = vsel %vm895, %v2192, 0.0
        %2361 = vadd.xlane.f32.xlu0 %v2360
        %v2362 = vpop.xlane.xlu0 %2361
        %v2363 = vsel %vm895, %v2193, 0.0
        %2364 = vadd.xlane.f32.xlu0 %v2363
        %v2365 = vpop.xlane.xlu0 %2364
        %v2366 = vsel %vm895, %v2194, 0.0
        %2367 = vadd.xlane.f32.xlu0 %v2366
        %v2368 = vpop.xlane.xlu0 %2367
        %v2369 = vsel %vm895, %v2195, 0.0
        %2370 = vadd.xlane.f32.xlu0 %v2369
        %v2371 = vpop.xlane.xlu0 %2370
        %v2372 = vsel %vm895, %v2196, 0.0
        %2373 = vadd.xlane.f32.xlu0 %v2372
        %v2374 = vpop.xlane.xlu0 %2373
        %v2375 = vsel %vm895, %v2197, 0.0
        %2376 = vadd.xlane.f32.xlu0 %v2375
        %v2377 = vpop.xlane.xlu0 %2376
        %v2378 = vsel %vm895, %v2198, 0.0
        %2379 = vadd.xlane.f32.xlu0 %v2378
        %v2380 = vpop.xlane.xlu0 %2379
        %v2381 = vsel %vm895, %v2199, 0.0
        %2382 = vadd.xlane.f32.xlu0 %v2381
        %v2383 = vpop.xlane.xlu0 %2382
        %v2384 = vsel %vm895, %v2200, 0.0
        %2385 = vadd.xlane.f32.xlu0 %v2384
        %v2386 = vpop.xlane.xlu0 %2385
        %v2387 = vsel %vm895, %v2201, 0.0
        %2388 = vadd.xlane.f32.xlu0 %v2387
        %v2389 = vpop.xlane.xlu0 %2388
        %v2390 = vsel %vm895, %v2202, 0.0
        %2391 = vadd.xlane.f32.xlu0 %v2390
        %v2392 = vpop.xlane.xlu0 %2391
        %v2393 = vsel %vm895, %v2203, 0.0
        %2394 = vadd.xlane.f32.xlu0 %v2393
        %v2395 = vpop.xlane.xlu0 %2394
        %v2460 = vlaneseq
        %v2461 = vand.u32 %v2460, 127
        %v2462 = vlaneseq
        %v2463 = vshrl.u32 %v2462, 7
        %v2464 = vsub.s32 %v2461, %v2463
        %v2465 = vrot.slane %v898, %v2464
        %v2466 = vadd.s32 %v2461, 4294967288
        %v2467 = vlaneseq
        %v2468 = vshrl.u32 %v2467, 7
        %v2469 = vsub.s32 %v2466, %v2468
        %v2470 = vrot.slane %v901, %v2469
        %vm2471 = vcmask 130112
        %v2472 = vsel %vm2471, %v2470, %v2465
        %v2473 = vadd.s32 %v2461, 4294967280
        %v2474 = vlaneseq
        %v2475 = vshrl.u32 %v2474, 7
        %v2476 = vsub.s32 %v2473, %v2475
        %v2477 = vrot.slane %v904, %v2476
        %vm2478 = vcmask 195712
        %v2479 = vsel %vm2478, %v2477, %v2472
        %v2480 = vadd.s32 %v2461, 4294967272
        %v2481 = vlaneseq
        %v2482 = vshrl.u32 %v2481, 7
        %v2483 = vsub.s32 %v2480, %v2482
        %v2484 = vrot.slane %v907, %v2483
        %vm2485 = vcmask 261312
        %v2486 = vsel %vm2485, %v2484, %v2479
        %v2487 = vlaneseq
        %v2488 = vshrl.u32 %v2487, 7
        %v2489 = vsub.s32 %v2461, %v2488
        %v2490 = vrot.slane %v910, %v2489
        %v2491 = vlaneseq
        %v2492 = vshrl.u32 %v2491, 7
        %v2493 = vsub.s32 %v2466, %v2492
        %v2494 = vrot.slane %v913, %v2493
        %v2495 = vsel %vm2471, %v2494, %v2490
        %v2496 = vlaneseq
        %v2497 = vshrl.u32 %v2496, 7
        %v2498 = vsub.s32 %v2473, %v2497
        %v2499 = vrot.slane %v916, %v2498
        %v2500 = vsel %vm2478, %v2499, %v2495
        %v2501 = vlaneseq
        %v2502 = vshrl.u32 %v2501, 7
        %v2503 = vsub.s32 %v2480, %v2502
        %v2504 = vrot.slane %v919, %v2503
        %v2505 = vsel %vm2485, %v2504, %v2500
        %v2506 = vlaneseq
        %v2507 = vshrl.u32 %v2506, 7
        %v2508 = vsub.s32 %v2461, %v2507
        %v2509 = vrot.slane %v922, %v2508
        %v2510 = vlaneseq
        %v2511 = vshrl.u32 %v2510, 7
        %v2512 = vsub.s32 %v2466, %v2511
        %v2513 = vrot.slane %v925, %v2512
        %v2514 = vsel %vm2471, %v2513, %v2509
        %v2515 = vlaneseq
        %v2516 = vshrl.u32 %v2515, 7
        %v2517 = vsub.s32 %v2473, %v2516
        %v2518 = vrot.slane %v928, %v2517
        %v2519 = vsel %vm2478, %v2518, %v2514
        %v2520 = vlaneseq
        %v2521 = vshrl.u32 %v2520, 7
        %v2522 = vsub.s32 %v2480, %v2521
        %v2523 = vrot.slane %v931, %v2522
        %v2524 = vsel %vm2485, %v2523, %v2519
        %v2525 = vlaneseq
        %v2526 = vshrl.u32 %v2525, 7
        %v2527 = vsub.s32 %v2461, %v2526
        %v2528 = vrot.slane %v934, %v2527
        %v2529 = vlaneseq
        %v2530 = vshrl.u32 %v2529, 7
        %v2531 = vsub.s32 %v2466, %v2530
        %v2532 = vrot.slane %v937, %v2531
        %v2533 = vsel %vm2471, %v2532, %v2528
        %v2534 = vlaneseq
        %v2535 = vshrl.u32 %v2534, 7
        %v2536 = vsub.s32 %v2473, %v2535
        %v2537 = vrot.slane %v940, %v2536
        %v2538 = vsel %vm2478, %v2537, %v2533
        %v2539 = vlaneseq
        %v2540 = vshrl.u32 %v2539, 7
        %v2541 = vsub.s32 %v2480, %v2540
        %v2542 = vrot.slane %v943, %v2541
        %v2543 = vsel %vm2485, %v2542, %v2538
        %v2544 = vlaneseq
        %v2545 = vshrl.u32 %v2544, 7
        %v2546 = vsub.s32 %v2461, %v2545
        %v2547 = vrot.slane %v946, %v2546
        %v2548 = vlaneseq
        %v2549 = vshrl.u32 %v2548, 7
        %v2550 = vsub.s32 %v2466, %v2549
        %v2551 = vrot.slane %v949, %v2550
        %v2552 = vsel %vm2471, %v2551, %v2547
        %v2553 = vlaneseq
        %v2554 = vshrl.u32 %v2553, 7
        %v2555 = vsub.s32 %v2473, %v2554
        %v2556 = vrot.slane %v952, %v2555
        %v2557 = vsel %vm2478, %v2556, %v2552
        %v2558 = vlaneseq
        %v2559 = vshrl.u32 %v2558, 7
        %v2560 = vsub.s32 %v2480, %v2559
        %v2561 = vrot.slane %v955, %v2560
        %v2562 = vsel %vm2485, %v2561, %v2557
        %v2563 = vlaneseq
        %v2564 = vshrl.u32 %v2563, 7
        %v2565 = vsub.s32 %v2461, %v2564
        %v2566 = vrot.slane %v958, %v2565
        %v2567 = vlaneseq
        %v2568 = vshrl.u32 %v2567, 7
        %v2569 = vsub.s32 %v2466, %v2568
        %v2570 = vrot.slane %v961, %v2569
        %v2571 = vsel %vm2471, %v2570, %v2566
        %v2572 = vlaneseq
        %v2573 = vshrl.u32 %v2572, 7
        %v2574 = vsub.s32 %v2473, %v2573
        %v2575 = vrot.slane %v964, %v2574
        %v2576 = vsel %vm2478, %v2575, %v2571
        %v2577 = vlaneseq
        %v2578 = vshrl.u32 %v2577, 7
        %v2579 = vsub.s32 %v2480, %v2578
        %v2580 = vrot.slane %v967, %v2579
        %v2581 = vsel %vm2485, %v2580, %v2576
        %v2582 = vlaneseq
        %v2583 = vshrl.u32 %v2582, 7
        %v2584 = vsub.s32 %v2461, %v2583
        %v2585 = vrot.slane %v970, %v2584
        %v2586 = vlaneseq
        %v2587 = vshrl.u32 %v2586, 7
        %v2588 = vsub.s32 %v2466, %v2587
        %v2589 = vrot.slane %v973, %v2588
        %v2590 = vsel %vm2471, %v2589, %v2585
        %v2591 = vlaneseq
        %v2592 = vshrl.u32 %v2591, 7
        %v2593 = vsub.s32 %v2473, %v2592
        %v2594 = vrot.slane %v976, %v2593
        %v2595 = vsel %vm2478, %v2594, %v2590
        %v2596 = vlaneseq
        %v2597 = vshrl.u32 %v2596, 7
        %v2598 = vsub.s32 %v2480, %v2597
        %v2599 = vrot.slane %v979, %v2598
        %v2600 = vsel %vm2485, %v2599, %v2595
        %v2601 = vlaneseq
        %v2602 = vshrl.u32 %v2601, 7
        %v2603 = vsub.s32 %v2461, %v2602
        %v2604 = vrot.slane %v982, %v2603
        %v2605 = vlaneseq
        %v2606 = vshrl.u32 %v2605, 7
        %v2607 = vsub.s32 %v2466, %v2606
        %v2608 = vrot.slane %v985, %v2607
        %v2609 = vsel %vm2471, %v2608, %v2604
        %v2610 = vlaneseq
        %v2611 = vshrl.u32 %v2610, 7
        %v2612 = vsub.s32 %v2473, %v2611
        %v2613 = vrot.slane %v988, %v2612
        %v2614 = vsel %vm2478, %v2613, %v2609
        %v2615 = vlaneseq
        %v2616 = vshrl.u32 %v2615, 7
        %v2617 = vsub.s32 %v2480, %v2616
        %v2618 = vrot.slane %v991, %v2617
        %v2619 = vsel %vm2485, %v2618, %v2614
        %v2620 = vlaneseq
        %v2621 = vshrl.u32 %v2620, 7
        %v2622 = vsub.s32 %v2461, %v2621
        %v2623 = vrot.slane %v994, %v2622
        %v2624 = vlaneseq
        %v2625 = vshrl.u32 %v2624, 7
        %v2626 = vsub.s32 %v2466, %v2625
        %v2627 = vrot.slane %v997, %v2626
        %v2628 = vsel %vm2471, %v2627, %v2623
        %v2629 = vlaneseq
        %v2630 = vshrl.u32 %v2629, 7
        %v2631 = vsub.s32 %v2473, %v2630
        %v2632 = vrot.slane %v1000, %v2631
        %v2633 = vsel %vm2478, %v2632, %v2628
        %v2634 = vlaneseq
        %v2635 = vshrl.u32 %v2634, 7
        %v2636 = vsub.s32 %v2480, %v2635
        %v2637 = vrot.slane %v1003, %v2636
        %v2638 = vsel %vm2485, %v2637, %v2633
        %v2639 = vlaneseq
        %v2640 = vshrl.u32 %v2639, 7
        %v2641 = vsub.s32 %v2461, %v2640
        %v2642 = vrot.slane %v1006, %v2641
        %v2643 = vlaneseq
        %v2644 = vshrl.u32 %v2643, 7
        %v2645 = vsub.s32 %v2466, %v2644
        %v2646 = vrot.slane %v1009, %v2645
        %v2647 = vsel %vm2471, %v2646, %v2642
        %v2648 = vlaneseq
        %v2649 = vshrl.u32 %v2648, 7
        %v2650 = vsub.s32 %v2473, %v2649
        %v2651 = vrot.slane %v1012, %v2650
        %v2652 = vsel %vm2478, %v2651, %v2647
        %v2653 = vlaneseq
        %v2654 = vshrl.u32 %v2653, 7
        %v2655 = vsub.s32 %v2480, %v2654
        %v2656 = vrot.slane %v1015, %v2655
        %v2657 = vsel %vm2485, %v2656, %v2652
        %v2658 = vlaneseq
        %v2659 = vshrl.u32 %v2658, 7
        %v2660 = vsub.s32 %v2461, %v2659
        %v2661 = vrot.slane %v1018, %v2660
        %v2662 = vlaneseq
        %v2663 = vshrl.u32 %v2662, 7
        %v2664 = vsub.s32 %v2466, %v2663
        %v2665 = vrot.slane %v1021, %v2664
        %v2666 = vsel %vm2471, %v2665, %v2661
        %v2667 = vlaneseq
        %v2668 = vshrl.u32 %v2667, 7
        %v2669 = vsub.s32 %v2473, %v2668
        %v2670 = vrot.slane %v1024, %v2669
        %v2671 = vsel %vm2478, %v2670, %v2666
        %v2672 = vlaneseq
        %v2673 = vshrl.u32 %v2672, 7
        %v2674 = vsub.s32 %v2480, %v2673
        %v2675 = vrot.slane %v1027, %v2674
        %v2676 = vsel %vm2485, %v2675, %v2671
        %v2677 = vlaneseq
        %v2678 = vshrl.u32 %v2677, 7
        %v2679 = vsub.s32 %v2461, %v2678
        %v2680 = vrot.slane %v1030, %v2679
        %v2681 = vlaneseq
        %v2682 = vshrl.u32 %v2681, 7
        %v2683 = vsub.s32 %v2466, %v2682
        %v2684 = vrot.slane %v1033, %v2683
        %v2685 = vsel %vm2471, %v2684, %v2680
        %v2686 = vlaneseq
        %v2687 = vshrl.u32 %v2686, 7
        %v2688 = vsub.s32 %v2473, %v2687
        %v2689 = vrot.slane %v1036, %v2688
        %v2690 = vsel %vm2478, %v2689, %v2685
        %v2691 = vlaneseq
        %v2692 = vshrl.u32 %v2691, 7
        %v2693 = vsub.s32 %v2480, %v2692
        %v2694 = vrot.slane %v1039, %v2693
        %v2695 = vsel %vm2485, %v2694, %v2690
        %v2696 = vlaneseq
        %v2697 = vshrl.u32 %v2696, 7
        %v2698 = vsub.s32 %v2461, %v2697
        %v2699 = vrot.slane %v1042, %v2698
        %v2700 = vlaneseq
        %v2701 = vshrl.u32 %v2700, 7
        %v2702 = vsub.s32 %v2466, %v2701
        %v2703 = vrot.slane %v1045, %v2702
        %v2704 = vsel %vm2471, %v2703, %v2699
        %v2705 = vlaneseq
        %v2706 = vshrl.u32 %v2705, 7
        %v2707 = vsub.s32 %v2473, %v2706
        %v2708 = vrot.slane %v1048, %v2707
        %v2709 = vsel %vm2478, %v2708, %v2704
        %v2710 = vlaneseq
        %v2711 = vshrl.u32 %v2710, 7
        %v2712 = vsub.s32 %v2480, %v2711
        %v2713 = vrot.slane %v1051, %v2712
        %v2714 = vsel %vm2485, %v2713, %v2709
        %v2715 = vlaneseq
        %v2716 = vshrl.u32 %v2715, 7
        %v2717 = vsub.s32 %v2461, %v2716
        %v2718 = vrot.slane %v1054, %v2717
        %v2719 = vlaneseq
        %v2720 = vshrl.u32 %v2719, 7
        %v2721 = vsub.s32 %v2466, %v2720
        %v2722 = vrot.slane %v1057, %v2721
        %v2723 = vsel %vm2471, %v2722, %v2718
        %v2724 = vlaneseq
        %v2725 = vshrl.u32 %v2724, 7
        %v2726 = vsub.s32 %v2473, %v2725
        %v2727 = vrot.slane %v1060, %v2726
        %v2728 = vsel %vm2478, %v2727, %v2723
        %v2729 = vlaneseq
        %v2730 = vshrl.u32 %v2729, 7
        %v2731 = vsub.s32 %v2480, %v2730
        %v2732 = vrot.slane %v1063, %v2731
        %v2733 = vsel %vm2485, %v2732, %v2728
        %v2734 = vlaneseq
        %v2735 = vshrl.u32 %v2734, 7
        %v2736 = vsub.s32 %v2461, %v2735
        %v2737 = vrot.slane %v1066, %v2736
        %v2738 = vlaneseq
        %v2739 = vshrl.u32 %v2738, 7
        %v2740 = vsub.s32 %v2466, %v2739
        %v2741 = vrot.slane %v1069, %v2740
        %v2742 = vsel %vm2471, %v2741, %v2737
        %v2743 = vlaneseq
        %v2744 = vshrl.u32 %v2743, 7
        %v2745 = vsub.s32 %v2473, %v2744
        %v2746 = vrot.slane %v1072, %v2745
        %v2747 = vsel %vm2478, %v2746, %v2742
        %v2748 = vlaneseq
        %v2749 = vshrl.u32 %v2748, 7
        %v2750 = vsub.s32 %v2480, %v2749
        %v2751 = vrot.slane %v1075, %v2750
        %v2752 = vsel %vm2485, %v2751, %v2747
        %v2753 = vlaneseq
        %v2754 = vshrl.u32 %v2753, 7
        %v2755 = vsub.s32 %v2461, %v2754
        %v2756 = vrot.slane %v1078, %v2755
        %v2757 = vlaneseq
        %v2758 = vshrl.u32 %v2757, 7
        %v2759 = vsub.s32 %v2466, %v2758
        %v2760 = vrot.slane %v1081, %v2759
        %v2761 = vsel %vm2471, %v2760, %v2756
        %v2762 = vlaneseq
        %v2763 = vshrl.u32 %v2762, 7
        %v2764 = vsub.s32 %v2473, %v2763
        %v2765 = vrot.slane %v1084, %v2764
        %v2766 = vsel %vm2478, %v2765, %v2761
        %v2767 = vlaneseq
        %v2768 = vshrl.u32 %v2767, 7
        %v2769 = vsub.s32 %v2480, %v2768
        %v2770 = vrot.slane %v1087, %v2769
        %v2771 = vsel %vm2485, %v2770, %v2766
        %vm2772 = vcmask 1041409
        %v2773 = vsel %vm2772, %v2505, %v2486
        %vm2774 = vcmask 1042434
        %v2775 = vsel %vm2774, %v2524, %v2773
        %vm2776 = vcmask 1043459
        %v2777 = vsel %vm2776, %v2543, %v2775
        %vm2778 = vcmask 1044484
        %v2779 = vsel %vm2778, %v2562, %v2777
        %vm2780 = vcmask 1045509
        %v2781 = vsel %vm2780, %v2581, %v2779
        %vm2782 = vcmask 1046534
        %v2783 = vsel %vm2782, %v2600, %v2781
        %vm2784 = vcmask 1047559
        %v2785 = vsel %vm2784, %v2619, %v2783
        %v2786 = vsel %vm2772, %v2657, %v2638
        %v2787 = vsel %vm2774, %v2676, %v2786
        %v2788 = vsel %vm2776, %v2695, %v2787
        %v2789 = vsel %vm2778, %v2714, %v2788
        %v2790 = vsel %vm2780, %v2733, %v2789
        %v2791 = vsel %vm2782, %v2752, %v2790
        %v2792 = vsel %vm2784, %v2771, %v2791
        %v2859 = vadd.s32 %v2461, 4294967264
        %v2860 = vlaneseq
        %v2861 = vshrl.u32 %v2860, 7
        %v2862 = vsub.s32 %v2859, %v2861
        %v2863 = vrot.slane %v1334, %v2862
        %v2864 = vadd.s32 %v2461, 4294967256
        %v2865 = vlaneseq
        %v2866 = vshrl.u32 %v2865, 7
        %v2867 = vsub.s32 %v2864, %v2866
        %v2868 = vrot.slane %v1337, %v2867
        %vm2869 = vcmask 392512
        %v2870 = vsel %vm2869, %v2868, %v2863
        %v2871 = vadd.s32 %v2461, 4294967248
        %v2872 = vlaneseq
        %v2873 = vshrl.u32 %v2872, 7
        %v2874 = vsub.s32 %v2871, %v2873
        %v2875 = vrot.slane %v1340, %v2874
        %vm2876 = vcmask 458112
        %v2877 = vsel %vm2876, %v2875, %v2870
        %v2878 = vadd.s32 %v2461, 4294967240
        %v2879 = vlaneseq
        %v2880 = vshrl.u32 %v2879, 7
        %v2881 = vsub.s32 %v2878, %v2880
        %v2882 = vrot.slane %v1343, %v2881
        %vm2883 = vcmask 523712
        %v2884 = vsel %vm2883, %v2882, %v2877
        %v2885 = vlaneseq
        %v2886 = vshrl.u32 %v2885, 7
        %v2887 = vsub.s32 %v2859, %v2886
        %v2888 = vrot.slane %v1346, %v2887
        %v2889 = vlaneseq
        %v2890 = vshrl.u32 %v2889, 7
        %v2891 = vsub.s32 %v2864, %v2890
        %v2892 = vrot.slane %v1349, %v2891
        %v2893 = vsel %vm2869, %v2892, %v2888
        %v2894 = vlaneseq
        %v2895 = vshrl.u32 %v2894, 7
        %v2896 = vsub.s32 %v2871, %v2895
        %v2897 = vrot.slane %v1352, %v2896
        %v2898 = vsel %vm2876, %v2897, %v2893
        %v2899 = vlaneseq
        %v2900 = vshrl.u32 %v2899, 7
        %v2901 = vsub.s32 %v2878, %v2900
        %v2902 = vrot.slane %v1355, %v2901
        %v2903 = vsel %vm2883, %v2902, %v2898
        %v2904 = vlaneseq
        %v2905 = vshrl.u32 %v2904, 7
        %v2906 = vsub.s32 %v2859, %v2905
        %v2907 = vrot.slane %v1358, %v2906
        %v2908 = vlaneseq
        %v2909 = vshrl.u32 %v2908, 7
        %v2910 = vsub.s32 %v2864, %v2909
        %v2911 = vrot.slane %v1361, %v2910
        %v2912 = vsel %vm2869, %v2911, %v2907
        %v2913 = vlaneseq
        %v2914 = vshrl.u32 %v2913, 7
        %v2915 = vsub.s32 %v2871, %v2914
        %v2916 = vrot.slane %v1364, %v2915
        %v2917 = vsel %vm2876, %v2916, %v2912
        %v2918 = vlaneseq
        %v2919 = vshrl.u32 %v2918, 7
        %v2920 = vsub.s32 %v2878, %v2919
        %v2921 = vrot.slane %v1367, %v2920
        %v2922 = vsel %vm2883, %v2921, %v2917
        %v2923 = vlaneseq
        %v2924 = vshrl.u32 %v2923, 7
        %v2925 = vsub.s32 %v2859, %v2924
        %v2926 = vrot.slane %v1370, %v2925
        %v2927 = vlaneseq
        %v2928 = vshrl.u32 %v2927, 7
        %v2929 = vsub.s32 %v2864, %v2928
        %v2930 = vrot.slane %v1373, %v2929
        %v2931 = vsel %vm2869, %v2930, %v2926
        %v2932 = vlaneseq
        %v2933 = vshrl.u32 %v2932, 7
        %v2934 = vsub.s32 %v2871, %v2933
        %v2935 = vrot.slane %v1376, %v2934
        %v2936 = vsel %vm2876, %v2935, %v2931
        %v2937 = vlaneseq
        %v2938 = vshrl.u32 %v2937, 7
        %v2939 = vsub.s32 %v2878, %v2938
        %v2940 = vrot.slane %v1379, %v2939
        %v2941 = vsel %vm2883, %v2940, %v2936
        %v2942 = vlaneseq
        %v2943 = vshrl.u32 %v2942, 7
        %v2944 = vsub.s32 %v2859, %v2943
        %v2945 = vrot.slane %v1382, %v2944
        %v2946 = vlaneseq
        %v2947 = vshrl.u32 %v2946, 7
        %v2948 = vsub.s32 %v2864, %v2947
        %v2949 = vrot.slane %v1385, %v2948
        %v2950 = vsel %vm2869, %v2949, %v2945
        %v2951 = vlaneseq
        %v2952 = vshrl.u32 %v2951, 7
        %v2953 = vsub.s32 %v2871, %v2952
        %v2954 = vrot.slane %v1388, %v2953
        %v2955 = vsel %vm2876, %v2954, %v2950
        %v2956 = vlaneseq
        %v2957 = vshrl.u32 %v2956, 7
        %v2958 = vsub.s32 %v2878, %v2957
        %v2959 = vrot.slane %v1391, %v2958
        %v2960 = vsel %vm2883, %v2959, %v2955
        %v2961 = vlaneseq
        %v2962 = vshrl.u32 %v2961, 7
        %v2963 = vsub.s32 %v2859, %v2962
        %v2964 = vrot.slane %v1394, %v2963
        %v2965 = vlaneseq
        %v2966 = vshrl.u32 %v2965, 7
        %v2967 = vsub.s32 %v2864, %v2966
        %v2968 = vrot.slane %v1397, %v2967
        %v2969 = vsel %vm2869, %v2968, %v2964
        %v2970 = vlaneseq
        %v2971 = vshrl.u32 %v2970, 7
        %v2972 = vsub.s32 %v2871, %v2971
        %v2973 = vrot.slane %v1400, %v2972
        %v2974 = vsel %vm2876, %v2973, %v2969
        %v2975 = vlaneseq
        %v2976 = vshrl.u32 %v2975, 7
        %v2977 = vsub.s32 %v2878, %v2976
        %v2978 = vrot.slane %v1403, %v2977
        %v2979 = vsel %vm2883, %v2978, %v2974
        %v2980 = vlaneseq
        %v2981 = vshrl.u32 %v2980, 7
        %v2982 = vsub.s32 %v2859, %v2981
        %v2983 = vrot.slane %v1406, %v2982
        %v2984 = vlaneseq
        %v2985 = vshrl.u32 %v2984, 7
        %v2986 = vsub.s32 %v2864, %v2985
        %v2987 = vrot.slane %v1409, %v2986
        %v2988 = vsel %vm2869, %v2987, %v2983
        %v2989 = vlaneseq
        %v2990 = vshrl.u32 %v2989, 7
        %v2991 = vsub.s32 %v2871, %v2990
        %v2992 = vrot.slane %v1412, %v2991
        %v2993 = vsel %vm2876, %v2992, %v2988
        %v2994 = vlaneseq
        %v2995 = vshrl.u32 %v2994, 7
        %v2996 = vsub.s32 %v2878, %v2995
        %v2997 = vrot.slane %v1415, %v2996
        %v2998 = vsel %vm2883, %v2997, %v2993
        %v2999 = vlaneseq
        %v3000 = vshrl.u32 %v2999, 7
        %v3001 = vsub.s32 %v2859, %v3000
        %v3002 = vrot.slane %v1418, %v3001
        %v3003 = vlaneseq
        %v3004 = vshrl.u32 %v3003, 7
        %v3005 = vsub.s32 %v2864, %v3004
        %v3006 = vrot.slane %v1421, %v3005
        %v3007 = vsel %vm2869, %v3006, %v3002
        %v3008 = vlaneseq
        %v3009 = vshrl.u32 %v3008, 7
        %v3010 = vsub.s32 %v2871, %v3009
        %v3011 = vrot.slane %v1424, %v3010
        %v3012 = vsel %vm2876, %v3011, %v3007
        %v3013 = vlaneseq
        %v3014 = vshrl.u32 %v3013, 7
        %v3015 = vsub.s32 %v2878, %v3014
        %v3016 = vrot.slane %v1427, %v3015
        %v3017 = vsel %vm2883, %v3016, %v3012
        %v3018 = vlaneseq
        %v3019 = vshrl.u32 %v3018, 7
        %v3020 = vsub.s32 %v2859, %v3019
        %v3021 = vrot.slane %v1430, %v3020
        %v3022 = vlaneseq
        %v3023 = vshrl.u32 %v3022, 7
        %v3024 = vsub.s32 %v2864, %v3023
        %v3025 = vrot.slane %v1433, %v3024
        %v3026 = vsel %vm2869, %v3025, %v3021
        %v3027 = vlaneseq
        %v3028 = vshrl.u32 %v3027, 7
        %v3029 = vsub.s32 %v2871, %v3028
        %v3030 = vrot.slane %v1436, %v3029
        %v3031 = vsel %vm2876, %v3030, %v3026
        %v3032 = vlaneseq
        %v3033 = vshrl.u32 %v3032, 7
        %v3034 = vsub.s32 %v2878, %v3033
        %v3035 = vrot.slane %v1439, %v3034
        %v3036 = vsel %vm2883, %v3035, %v3031
        %v3037 = vlaneseq
        %v3038 = vshrl.u32 %v3037, 7
        %v3039 = vsub.s32 %v2859, %v3038
        %v3040 = vrot.slane %v1442, %v3039
        %v3041 = vlaneseq
        %v3042 = vshrl.u32 %v3041, 7
        %v3043 = vsub.s32 %v2864, %v3042
        %v3044 = vrot.slane %v1445, %v3043
        %v3045 = vsel %vm2869, %v3044, %v3040
        %v3046 = vlaneseq
        %v3047 = vshrl.u32 %v3046, 7
        %v3048 = vsub.s32 %v2871, %v3047
        %v3049 = vrot.slane %v1448, %v3048
        %v3050 = vsel %vm2876, %v3049, %v3045
        %v3051 = vlaneseq
        %v3052 = vshrl.u32 %v3051, 7
        %v3053 = vsub.s32 %v2878, %v3052
        %v3054 = vrot.slane %v1451, %v3053
        %v3055 = vsel %vm2883, %v3054, %v3050
        %v3056 = vlaneseq
        %v3057 = vshrl.u32 %v3056, 7
        %v3058 = vsub.s32 %v2859, %v3057
        %v3059 = vrot.slane %v1454, %v3058
        %v3060 = vlaneseq
        %v3061 = vshrl.u32 %v3060, 7
        %v3062 = vsub.s32 %v2864, %v3061
        %v3063 = vrot.slane %v1457, %v3062
        %v3064 = vsel %vm2869, %v3063, %v3059
        %v3065 = vlaneseq
        %v3066 = vshrl.u32 %v3065, 7
        %v3067 = vsub.s32 %v2871, %v3066
        %v3068 = vrot.slane %v1460, %v3067
        %v3069 = vsel %vm2876, %v3068, %v3064
        %v3070 = vlaneseq
        %v3071 = vshrl.u32 %v3070, 7
        %v3072 = vsub.s32 %v2878, %v3071
        %v3073 = vrot.slane %v1463, %v3072
        %v3074 = vsel %vm2883, %v3073, %v3069
        %v3075 = vlaneseq
        %v3076 = vshrl.u32 %v3075, 7
        %v3077 = vsub.s32 %v2859, %v3076
        %v3078 = vrot.slane %v1466, %v3077
        %v3079 = vlaneseq
        %v3080 = vshrl.u32 %v3079, 7
        %v3081 = vsub.s32 %v2864, %v3080
        %v3082 = vrot.slane %v1469, %v3081
        %v3083 = vsel %vm2869, %v3082, %v3078
        %v3084 = vlaneseq
        %v3085 = vshrl.u32 %v3084, 7
        %v3086 = vsub.s32 %v2871, %v3085
        %v3087 = vrot.slane %v1472, %v3086
        %v3088 = vsel %vm2876, %v3087, %v3083
        %v3089 = vlaneseq
        %v3090 = vshrl.u32 %v3089, 7
        %v3091 = vsub.s32 %v2878, %v3090
        %v3092 = vrot.slane %v1475, %v3091
        %v3093 = vsel %vm2883, %v3092, %v3088
        %v3094 = vlaneseq
        %v3095 = vshrl.u32 %v3094, 7
        %v3096 = vsub.s32 %v2859, %v3095
        %v3097 = vrot.slane %v1478, %v3096
        %v3098 = vlaneseq
        %v3099 = vshrl.u32 %v3098, 7
        %v3100 = vsub.s32 %v2864, %v3099
        %v3101 = vrot.slane %v1481, %v3100
        %v3102 = vsel %vm2869, %v3101, %v3097
        %v3103 = vlaneseq
        %v3104 = vshrl.u32 %v3103, 7
        %v3105 = vsub.s32 %v2871, %v3104
        %v3106 = vrot.slane %v1484, %v3105
        %v3107 = vsel %vm2876, %v3106, %v3102
        %v3108 = vlaneseq
        %v3109 = vshrl.u32 %v3108, 7
        %v3110 = vsub.s32 %v2878, %v3109
        %v3111 = vrot.slane %v1487, %v3110
        %v3112 = vsel %vm2883, %v3111, %v3107
        %v3113 = vlaneseq
        %v3114 = vshrl.u32 %v3113, 7
        %v3115 = vsub.s32 %v2859, %v3114
        %v3116 = vrot.slane %v1490, %v3115
        %v3117 = vlaneseq
        %v3118 = vshrl.u32 %v3117, 7
        %v3119 = vsub.s32 %v2864, %v3118
        %v3120 = vrot.slane %v1493, %v3119
        %v3121 = vsel %vm2869, %v3120, %v3116
        %v3122 = vlaneseq
        %v3123 = vshrl.u32 %v3122, 7
        %v3124 = vsub.s32 %v2871, %v3123
        %v3125 = vrot.slane %v1496, %v3124
        %v3126 = vsel %vm2876, %v3125, %v3121
        %v3127 = vlaneseq
        %v3128 = vshrl.u32 %v3127, 7
        %v3129 = vsub.s32 %v2878, %v3128
        %v3130 = vrot.slane %v1499, %v3129
        %v3131 = vsel %vm2883, %v3130, %v3126
        %v3132 = vlaneseq
        %v3133 = vshrl.u32 %v3132, 7
        %v3134 = vsub.s32 %v2859, %v3133
        %v3135 = vrot.slane %v1502, %v3134
        %v3136 = vlaneseq
        %v3137 = vshrl.u32 %v3136, 7
        %v3138 = vsub.s32 %v2864, %v3137
        %v3139 = vrot.slane %v1505, %v3138
        %v3140 = vsel %vm2869, %v3139, %v3135
        %v3141 = vlaneseq
        %v3142 = vshrl.u32 %v3141, 7
        %v3143 = vsub.s32 %v2871, %v3142
        %v3144 = vrot.slane %v1508, %v3143
        %v3145 = vsel %vm2876, %v3144, %v3140
        %v3146 = vlaneseq
        %v3147 = vshrl.u32 %v3146, 7
        %v3148 = vsub.s32 %v2878, %v3147
        %v3149 = vrot.slane %v1511, %v3148
        %v3150 = vsel %vm2883, %v3149, %v3145
        %v3151 = vlaneseq
        %v3152 = vshrl.u32 %v3151, 7
        %v3153 = vsub.s32 %v2859, %v3152
        %v3154 = vrot.slane %v1514, %v3153
        %v3155 = vlaneseq
        %v3156 = vshrl.u32 %v3155, 7
        %v3157 = vsub.s32 %v2864, %v3156
        %v3158 = vrot.slane %v1517, %v3157
        %v3159 = vsel %vm2869, %v3158, %v3154
        %v3160 = vlaneseq
        %v3161 = vshrl.u32 %v3160, 7
        %v3162 = vsub.s32 %v2871, %v3161
        %v3163 = vrot.slane %v1520, %v3162
        %v3164 = vsel %vm2876, %v3163, %v3159
        %v3165 = vlaneseq
        %v3166 = vshrl.u32 %v3165, 7
        %v3167 = vsub.s32 %v2878, %v3166
        %v3168 = vrot.slane %v1523, %v3167
        %v3169 = vsel %vm2883, %v3168, %v3164
        %v3170 = vsel %vm2772, %v2903, %v2884
        %v3171 = vsel %vm2774, %v2922, %v3170
        %v3172 = vsel %vm2776, %v2941, %v3171
        %v3173 = vsel %vm2778, %v2960, %v3172
        %v3174 = vsel %vm2780, %v2979, %v3173
        %v3175 = vsel %vm2782, %v2998, %v3174
        %v3176 = vsel %vm2784, %v3017, %v3175
        %v3177 = vsel %vm2772, %v3055, %v3036
        %v3178 = vsel %vm2774, %v3074, %v3177
        %v3179 = vsel %vm2776, %v3093, %v3178
        %v3180 = vsel %vm2778, %v3112, %v3179
        %v3181 = vsel %vm2780, %v3131, %v3180
        %v3182 = vsel %vm2782, %v3150, %v3181
        %v3183 = vsel %vm2784, %v3169, %v3182
        %v3250 = vadd.s32 %v2461, 4294967232
        %v3251 = vlaneseq
        %v3252 = vshrl.u32 %v3251, 7
        %v3253 = vsub.s32 %v3250, %v3252
        %v3254 = vrot.slane %v1770, %v3253
        %v3255 = vadd.s32 %v2461, 4294967224
        %v3256 = vlaneseq
        %v3257 = vshrl.u32 %v3256, 7
        %v3258 = vsub.s32 %v3255, %v3257
        %v3259 = vrot.slane %v1773, %v3258
        %vm3260 = vcmask 654912
        %v3261 = vsel %vm3260, %v3259, %v3254
        %v3262 = vadd.s32 %v2461, 4294967216
        %v3263 = vlaneseq
        %v3264 = vshrl.u32 %v3263, 7
        %v3265 = vsub.s32 %v3262, %v3264
        %v3266 = vrot.slane %v1776, %v3265
        %vm3267 = vcmask 720512
        %v3268 = vsel %vm3267, %v3266, %v3261
        %v3269 = vadd.s32 %v2461, 4294967208
        %v3270 = vlaneseq
        %v3271 = vshrl.u32 %v3270, 7
        %v3272 = vsub.s32 %v3269, %v3271
        %v3273 = vrot.slane %v1779, %v3272
        %vm3274 = vcmask 786112
        %v3275 = vsel %vm3274, %v3273, %v3268
        %v3276 = vlaneseq
        %v3277 = vshrl.u32 %v3276, 7
        %v3278 = vsub.s32 %v3250, %v3277
        %v3279 = vrot.slane %v1782, %v3278
        %v3280 = vlaneseq
        %v3281 = vshrl.u32 %v3280, 7
        %v3282 = vsub.s32 %v3255, %v3281
        %v3283 = vrot.slane %v1785, %v3282
        %v3284 = vsel %vm3260, %v3283, %v3279
        %v3285 = vlaneseq
        %v3286 = vshrl.u32 %v3285, 7
        %v3287 = vsub.s32 %v3262, %v3286
        %v3288 = vrot.slane %v1788, %v3287
        %v3289 = vsel %vm3267, %v3288, %v3284
        %v3290 = vlaneseq
        %v3291 = vshrl.u32 %v3290, 7
        %v3292 = vsub.s32 %v3269, %v3291
        %v3293 = vrot.slane %v1791, %v3292
        %v3294 = vsel %vm3274, %v3293, %v3289
        %v3295 = vlaneseq
        %v3296 = vshrl.u32 %v3295, 7
        %v3297 = vsub.s32 %v3250, %v3296
        %v3298 = vrot.slane %v1794, %v3297
        %v3299 = vlaneseq
        %v3300 = vshrl.u32 %v3299, 7
        %v3301 = vsub.s32 %v3255, %v3300
        %v3302 = vrot.slane %v1797, %v3301
        %v3303 = vsel %vm3260, %v3302, %v3298
        %v3304 = vlaneseq
        %v3305 = vshrl.u32 %v3304, 7
        %v3306 = vsub.s32 %v3262, %v3305
        %v3307 = vrot.slane %v1800, %v3306
        %v3308 = vsel %vm3267, %v3307, %v3303
        %v3309 = vlaneseq
        %v3310 = vshrl.u32 %v3309, 7
        %v3311 = vsub.s32 %v3269, %v3310
        %v3312 = vrot.slane %v1803, %v3311
        %v3313 = vsel %vm3274, %v3312, %v3308
        %v3314 = vlaneseq
        %v3315 = vshrl.u32 %v3314, 7
        %v3316 = vsub.s32 %v3250, %v3315
        %v3317 = vrot.slane %v1806, %v3316
        %v3318 = vlaneseq
        %v3319 = vshrl.u32 %v3318, 7
        %v3320 = vsub.s32 %v3255, %v3319
        %v3321 = vrot.slane %v1809, %v3320
        %v3322 = vsel %vm3260, %v3321, %v3317
        %v3323 = vlaneseq
        %v3324 = vshrl.u32 %v3323, 7
        %v3325 = vsub.s32 %v3262, %v3324
        %v3326 = vrot.slane %v1812, %v3325
        %v3327 = vsel %vm3267, %v3326, %v3322
        %v3328 = vlaneseq
        %v3329 = vshrl.u32 %v3328, 7
        %v3330 = vsub.s32 %v3269, %v3329
        %v3331 = vrot.slane %v1815, %v3330
        %v3332 = vsel %vm3274, %v3331, %v3327
        %v3333 = vlaneseq
        %v3334 = vshrl.u32 %v3333, 7
        %v3335 = vsub.s32 %v3250, %v3334
        %v3336 = vrot.slane %v1818, %v3335
        %v3337 = vlaneseq
        %v3338 = vshrl.u32 %v3337, 7
        %v3339 = vsub.s32 %v3255, %v3338
        %v3340 = vrot.slane %v1821, %v3339
        %v3341 = vsel %vm3260, %v3340, %v3336
        %v3342 = vlaneseq
        %v3343 = vshrl.u32 %v3342, 7
        %v3344 = vsub.s32 %v3262, %v3343
        %v3345 = vrot.slane %v1824, %v3344
        %v3346 = vsel %vm3267, %v3345, %v3341
        %v3347 = vlaneseq
        %v3348 = vshrl.u32 %v3347, 7
        %v3349 = vsub.s32 %v3269, %v3348
        %v3350 = vrot.slane %v1827, %v3349
        %v3351 = vsel %vm3274, %v3350, %v3346
        %v3352 = vlaneseq
        %v3353 = vshrl.u32 %v3352, 7
        %v3354 = vsub.s32 %v3250, %v3353
        %v3355 = vrot.slane %v1830, %v3354
        %v3356 = vlaneseq
        %v3357 = vshrl.u32 %v3356, 7
        %v3358 = vsub.s32 %v3255, %v3357
        %v3359 = vrot.slane %v1833, %v3358
        %v3360 = vsel %vm3260, %v3359, %v3355
        %v3361 = vlaneseq
        %v3362 = vshrl.u32 %v3361, 7
        %v3363 = vsub.s32 %v3262, %v3362
        %v3364 = vrot.slane %v1836, %v3363
        %v3365 = vsel %vm3267, %v3364, %v3360
        %v3366 = vlaneseq
        %v3367 = vshrl.u32 %v3366, 7
        %v3368 = vsub.s32 %v3269, %v3367
        %v3369 = vrot.slane %v1839, %v3368
        %v3370 = vsel %vm3274, %v3369, %v3365
        %v3371 = vlaneseq
        %v3372 = vshrl.u32 %v3371, 7
        %v3373 = vsub.s32 %v3250, %v3372
        %v3374 = vrot.slane %v1842, %v3373
        %v3375 = vlaneseq
        %v3376 = vshrl.u32 %v3375, 7
        %v3377 = vsub.s32 %v3255, %v3376
        %v3378 = vrot.slane %v1845, %v3377
        %v3379 = vsel %vm3260, %v3378, %v3374
        %v3380 = vlaneseq
        %v3381 = vshrl.u32 %v3380, 7
        %v3382 = vsub.s32 %v3262, %v3381
        %v3383 = vrot.slane %v1848, %v3382
        %v3384 = vsel %vm3267, %v3383, %v3379
        %v3385 = vlaneseq
        %v3386 = vshrl.u32 %v3385, 7
        %v3387 = vsub.s32 %v3269, %v3386
        %v3388 = vrot.slane %v1851, %v3387
        %v3389 = vsel %vm3274, %v3388, %v3384
        %v3390 = vlaneseq
        %v3391 = vshrl.u32 %v3390, 7
        %v3392 = vsub.s32 %v3250, %v3391
        %v3393 = vrot.slane %v1854, %v3392
        %v3394 = vlaneseq
        %v3395 = vshrl.u32 %v3394, 7
        %v3396 = vsub.s32 %v3255, %v3395
        %v3397 = vrot.slane %v1857, %v3396
        %v3398 = vsel %vm3260, %v3397, %v3393
        %v3399 = vlaneseq
        %v3400 = vshrl.u32 %v3399, 7
        %v3401 = vsub.s32 %v3262, %v3400
        %v3402 = vrot.slane %v1860, %v3401
        %v3403 = vsel %vm3267, %v3402, %v3398
        %v3404 = vlaneseq
        %v3405 = vshrl.u32 %v3404, 7
        %v3406 = vsub.s32 %v3269, %v3405
        %v3407 = vrot.slane %v1863, %v3406
        %v3408 = vsel %vm3274, %v3407, %v3403
        %v3409 = vlaneseq
        %v3410 = vshrl.u32 %v3409, 7
        %v3411 = vsub.s32 %v3250, %v3410
        %v3412 = vrot.slane %v1866, %v3411
        %v3413 = vlaneseq
        %v3414 = vshrl.u32 %v3413, 7
        %v3415 = vsub.s32 %v3255, %v3414
        %v3416 = vrot.slane %v1869, %v3415
        %v3417 = vsel %vm3260, %v3416, %v3412
        %v3418 = vlaneseq
        %v3419 = vshrl.u32 %v3418, 7
        %v3420 = vsub.s32 %v3262, %v3419
        %v3421 = vrot.slane %v1872, %v3420
        %v3422 = vsel %vm3267, %v3421, %v3417
        %v3423 = vlaneseq
        %v3424 = vshrl.u32 %v3423, 7
        %v3425 = vsub.s32 %v3269, %v3424
        %v3426 = vrot.slane %v1875, %v3425
        %v3427 = vsel %vm3274, %v3426, %v3422
        %v3428 = vlaneseq
        %v3429 = vshrl.u32 %v3428, 7
        %v3430 = vsub.s32 %v3250, %v3429
        %v3431 = vrot.slane %v1878, %v3430
        %v3432 = vlaneseq
        %v3433 = vshrl.u32 %v3432, 7
        %v3434 = vsub.s32 %v3255, %v3433
        %v3435 = vrot.slane %v1881, %v3434
        %v3436 = vsel %vm3260, %v3435, %v3431
        %v3437 = vlaneseq
        %v3438 = vshrl.u32 %v3437, 7
        %v3439 = vsub.s32 %v3262, %v3438
        %v3440 = vrot.slane %v1884, %v3439
        %v3441 = vsel %vm3267, %v3440, %v3436
        %v3442 = vlaneseq
        %v3443 = vshrl.u32 %v3442, 7
        %v3444 = vsub.s32 %v3269, %v3443
        %v3445 = vrot.slane %v1887, %v3444
        %v3446 = vsel %vm3274, %v3445, %v3441
        %v3447 = vlaneseq
        %v3448 = vshrl.u32 %v3447, 7
        %v3449 = vsub.s32 %v3250, %v3448
        %v3450 = vrot.slane %v1890, %v3449
        %v3451 = vlaneseq
        %v3452 = vshrl.u32 %v3451, 7
        %v3453 = vsub.s32 %v3255, %v3452
        %v3454 = vrot.slane %v1893, %v3453
        %v3455 = vsel %vm3260, %v3454, %v3450
        %v3456 = vlaneseq
        %v3457 = vshrl.u32 %v3456, 7
        %v3458 = vsub.s32 %v3262, %v3457
        %v3459 = vrot.slane %v1896, %v3458
        %v3460 = vsel %vm3267, %v3459, %v3455
        %v3461 = vlaneseq
        %v3462 = vshrl.u32 %v3461, 7
        %v3463 = vsub.s32 %v3269, %v3462
        %v3464 = vrot.slane %v1899, %v3463
        %v3465 = vsel %vm3274, %v3464, %v3460
        %v3466 = vlaneseq
        %v3467 = vshrl.u32 %v3466, 7
        %v3468 = vsub.s32 %v3250, %v3467
        %v3469 = vrot.slane %v1902, %v3468
        %v3470 = vlaneseq
        %v3471 = vshrl.u32 %v3470, 7
        %v3472 = vsub.s32 %v3255, %v3471
        %v3473 = vrot.slane %v1905, %v3472
        %v3474 = vsel %vm3260, %v3473, %v3469
        %v3475 = vlaneseq
        %v3476 = vshrl.u32 %v3475, 7
        %v3477 = vsub.s32 %v3262, %v3476
        %v3478 = vrot.slane %v1908, %v3477
        %v3479 = vsel %vm3267, %v3478, %v3474
        %v3480 = vlaneseq
        %v3481 = vshrl.u32 %v3480, 7
        %v3482 = vsub.s32 %v3269, %v3481
        %v3483 = vrot.slane %v1911, %v3482
        %v3484 = vsel %vm3274, %v3483, %v3479
        %v3485 = vlaneseq
        %v3486 = vshrl.u32 %v3485, 7
        %v3487 = vsub.s32 %v3250, %v3486
        %v3488 = vrot.slane %v1914, %v3487
        %v3489 = vlaneseq
        %v3490 = vshrl.u32 %v3489, 7
        %v3491 = vsub.s32 %v3255, %v3490
        %v3492 = vrot.slane %v1917, %v3491
        %v3493 = vsel %vm3260, %v3492, %v3488
        %v3494 = vlaneseq
        %v3495 = vshrl.u32 %v3494, 7
        %v3496 = vsub.s32 %v3262, %v3495
        %v3497 = vrot.slane %v1920, %v3496
        %v3498 = vsel %vm3267, %v3497, %v3493
        %v3499 = vlaneseq
        %v3500 = vshrl.u32 %v3499, 7
        %v3501 = vsub.s32 %v3269, %v3500
        %v3502 = vrot.slane %v1923, %v3501
        %v3503 = vsel %vm3274, %v3502, %v3498
        %v3504 = vlaneseq
        %v3505 = vshrl.u32 %v3504, 7
        %v3506 = vsub.s32 %v3250, %v3505
        %v3507 = vrot.slane %v1926, %v3506
        %v3508 = vlaneseq
        %v3509 = vshrl.u32 %v3508, 7
        %v3510 = vsub.s32 %v3255, %v3509
        %v3511 = vrot.slane %v1929, %v3510
        %v3512 = vsel %vm3260, %v3511, %v3507
        %v3513 = vlaneseq
        %v3514 = vshrl.u32 %v3513, 7
        %v3515 = vsub.s32 %v3262, %v3514
        %v3516 = vrot.slane %v1932, %v3515
        %v3517 = vsel %vm3267, %v3516, %v3512
        %v3518 = vlaneseq
        %v3519 = vshrl.u32 %v3518, 7
        %v3520 = vsub.s32 %v3269, %v3519
        %v3521 = vrot.slane %v1935, %v3520
        %v3522 = vsel %vm3274, %v3521, %v3517
        %v3523 = vlaneseq
        %v3524 = vshrl.u32 %v3523, 7
        %v3525 = vsub.s32 %v3250, %v3524
        %v3526 = vrot.slane %v1938, %v3525
        %v3527 = vlaneseq
        %v3528 = vshrl.u32 %v3527, 7
        %v3529 = vsub.s32 %v3255, %v3528
        %v3530 = vrot.slane %v1941, %v3529
        %v3531 = vsel %vm3260, %v3530, %v3526
        %v3532 = vlaneseq
        %v3533 = vshrl.u32 %v3532, 7
        %v3534 = vsub.s32 %v3262, %v3533
        %v3535 = vrot.slane %v1944, %v3534
        %v3536 = vsel %vm3267, %v3535, %v3531
        %v3537 = vlaneseq
        %v3538 = vshrl.u32 %v3537, 7
        %v3539 = vsub.s32 %v3269, %v3538
        %v3540 = vrot.slane %v1947, %v3539
        %v3541 = vsel %vm3274, %v3540, %v3536
        %v3542 = vlaneseq
        %v3543 = vshrl.u32 %v3542, 7
        %v3544 = vsub.s32 %v3250, %v3543
        %v3545 = vrot.slane %v1950, %v3544
        %v3546 = vlaneseq
        %v3547 = vshrl.u32 %v3546, 7
        %v3548 = vsub.s32 %v3255, %v3547
        %v3549 = vrot.slane %v1953, %v3548
        %v3550 = vsel %vm3260, %v3549, %v3545
        %v3551 = vlaneseq
        %v3552 = vshrl.u32 %v3551, 7
        %v3553 = vsub.s32 %v3262, %v3552
        %v3554 = vrot.slane %v1956, %v3553
        %v3555 = vsel %vm3267, %v3554, %v3550
        %v3556 = vlaneseq
        %v3557 = vshrl.u32 %v3556, 7
        %v3558 = vsub.s32 %v3269, %v3557
        %v3559 = vrot.slane %v1959, %v3558
        %v3560 = vsel %vm3274, %v3559, %v3555
        %v3561 = vsel %vm2772, %v3294, %v3275
        %v3562 = vsel %vm2774, %v3313, %v3561
        %v3563 = vsel %vm2776, %v3332, %v3562
        %v3564 = vsel %vm2778, %v3351, %v3563
        %v3565 = vsel %vm2780, %v3370, %v3564
        %v3566 = vsel %vm2782, %v3389, %v3565
        %v3567 = vsel %vm2784, %v3408, %v3566
        %v3568 = vsel %vm2772, %v3446, %v3427
        %v3569 = vsel %vm2774, %v3465, %v3568
        %v3570 = vsel %vm2776, %v3484, %v3569
        %v3571 = vsel %vm2778, %v3503, %v3570
        %v3572 = vsel %vm2780, %v3522, %v3571
        %v3573 = vsel %vm2782, %v3541, %v3572
        %v3574 = vsel %vm2784, %v3560, %v3573
        %v3641 = vadd.s32 %v2461, 4294967200
        %v3642 = vlaneseq
        %v3643 = vshrl.u32 %v3642, 7
        %v3644 = vsub.s32 %v3641, %v3643
        %v3645 = vrot.slane %v2206, %v3644
        %v3646 = vadd.s32 %v2461, 4294967192
        %v3647 = vlaneseq
        %v3648 = vshrl.u32 %v3647, 7
        %v3649 = vsub.s32 %v3646, %v3648
        %v3650 = vrot.slane %v2209, %v3649
        %vm3651 = vcmask 917312
        %v3652 = vsel %vm3651, %v3650, %v3645
        %v3653 = vadd.s32 %v2461, 4294967184
        %v3654 = vlaneseq
        %v3655 = vshrl.u32 %v3654, 7
        %v3656 = vsub.s32 %v3653, %v3655
        %v3657 = vrot.slane %v2212, %v3656
        %vm3658 = vcmask 982912
        %v3659 = vsel %vm3658, %v3657, %v3652
        %v3660 = vadd.s32 %v2461, 4294967176
        %v3661 = vlaneseq
        %v3662 = vshrl.u32 %v3661, 7
        %v3663 = vsub.s32 %v3660, %v3662
        %v3664 = vrot.slane %v2215, %v3663
        %vm3665 = vcmask 1048512
        %v3666 = vsel %vm3665, %v3664, %v3659
        %v3667 = vlaneseq
        %v3668 = vshrl.u32 %v3667, 7
        %v3669 = vsub.s32 %v3641, %v3668
        %v3670 = vrot.slane %v2218, %v3669
        %v3671 = vlaneseq
        %v3672 = vshrl.u32 %v3671, 7
        %v3673 = vsub.s32 %v3646, %v3672
        %v3674 = vrot.slane %v2221, %v3673
        %v3675 = vsel %vm3651, %v3674, %v3670
        %v3676 = vlaneseq
        %v3677 = vshrl.u32 %v3676, 7
        %v3678 = vsub.s32 %v3653, %v3677
        %v3679 = vrot.slane %v2224, %v3678
        %v3680 = vsel %vm3658, %v3679, %v3675
        %v3681 = vlaneseq
        %v3682 = vshrl.u32 %v3681, 7
        %v3683 = vsub.s32 %v3660, %v3682
        %v3684 = vrot.slane %v2227, %v3683
        %v3685 = vsel %vm3665, %v3684, %v3680
        %v3686 = vlaneseq
        %v3687 = vshrl.u32 %v3686, 7
        %v3688 = vsub.s32 %v3641, %v3687
        %v3689 = vrot.slane %v2230, %v3688
        %v3690 = vlaneseq
        %v3691 = vshrl.u32 %v3690, 7
        %v3692 = vsub.s32 %v3646, %v3691
        %v3693 = vrot.slane %v2233, %v3692
        %v3694 = vsel %vm3651, %v3693, %v3689
        %v3695 = vlaneseq
        %v3696 = vshrl.u32 %v3695, 7
        %v3697 = vsub.s32 %v3653, %v3696
        %v3698 = vrot.slane %v2236, %v3697
        %v3699 = vsel %vm3658, %v3698, %v3694
        %v3700 = vlaneseq
        %v3701 = vshrl.u32 %v3700, 7
        %v3702 = vsub.s32 %v3660, %v3701
        %v3703 = vrot.slane %v2239, %v3702
        %v3704 = vsel %vm3665, %v3703, %v3699
        %v3705 = vlaneseq
        %v3706 = vshrl.u32 %v3705, 7
        %v3707 = vsub.s32 %v3641, %v3706
        %v3708 = vrot.slane %v2242, %v3707
        %v3709 = vlaneseq
        %v3710 = vshrl.u32 %v3709, 7
        %v3711 = vsub.s32 %v3646, %v3710
        %v3712 = vrot.slane %v2245, %v3711
        %v3713 = vsel %vm3651, %v3712, %v3708
        %v3714 = vlaneseq
        %v3715 = vshrl.u32 %v3714, 7
        %v3716 = vsub.s32 %v3653, %v3715
        %v3717 = vrot.slane %v2248, %v3716
        %v3718 = vsel %vm3658, %v3717, %v3713
        %v3719 = vlaneseq
        %v3720 = vshrl.u32 %v3719, 7
        %v3721 = vsub.s32 %v3660, %v3720
        %v3722 = vrot.slane %v2251, %v3721
        %v3723 = vsel %vm3665, %v3722, %v3718
        %v3724 = vlaneseq
        %v3725 = vshrl.u32 %v3724, 7
        %v3726 = vsub.s32 %v3641, %v3725
        %v3727 = vrot.slane %v2254, %v3726
        %v3728 = vlaneseq
        %v3729 = vshrl.u32 %v3728, 7
        %v3730 = vsub.s32 %v3646, %v3729
        %v3731 = vrot.slane %v2257, %v3730
        %v3732 = vsel %vm3651, %v3731, %v3727
        %v3733 = vlaneseq
        %v3734 = vshrl.u32 %v3733, 7
        %v3735 = vsub.s32 %v3653, %v3734
        %v3736 = vrot.slane %v2260, %v3735
        %v3737 = vsel %vm3658, %v3736, %v3732
        %v3738 = vlaneseq
        %v3739 = vshrl.u32 %v3738, 7
        %v3740 = vsub.s32 %v3660, %v3739
        %v3741 = vrot.slane %v2263, %v3740
        %v3742 = vsel %vm3665, %v3741, %v3737
        %v3743 = vlaneseq
        %v3744 = vshrl.u32 %v3743, 7
        %v3745 = vsub.s32 %v3641, %v3744
        %v3746 = vrot.slane %v2266, %v3745
        %v3747 = vlaneseq
        %v3748 = vshrl.u32 %v3747, 7
        %v3749 = vsub.s32 %v3646, %v3748
        %v3750 = vrot.slane %v2269, %v3749
        %v3751 = vsel %vm3651, %v3750, %v3746
        %v3752 = vlaneseq
        %v3753 = vshrl.u32 %v3752, 7
        %v3754 = vsub.s32 %v3653, %v3753
        %v3755 = vrot.slane %v2272, %v3754
        %v3756 = vsel %vm3658, %v3755, %v3751
        %v3757 = vlaneseq
        %v3758 = vshrl.u32 %v3757, 7
        %v3759 = vsub.s32 %v3660, %v3758
        %v3760 = vrot.slane %v2275, %v3759
        %v3761 = vsel %vm3665, %v3760, %v3756
        %v3762 = vlaneseq
        %v3763 = vshrl.u32 %v3762, 7
        %v3764 = vsub.s32 %v3641, %v3763
        %v3765 = vrot.slane %v2278, %v3764
        %v3766 = vlaneseq
        %v3767 = vshrl.u32 %v3766, 7
        %v3768 = vsub.s32 %v3646, %v3767
        %v3769 = vrot.slane %v2281, %v3768
        %v3770 = vsel %vm3651, %v3769, %v3765
        %v3771 = vlaneseq
        %v3772 = vshrl.u32 %v3771, 7
        %v3773 = vsub.s32 %v3653, %v3772
        %v3774 = vrot.slane %v2284, %v3773
        %v3775 = vsel %vm3658, %v3774, %v3770
        %v3776 = vlaneseq
        %v3777 = vshrl.u32 %v3776, 7
        %v3778 = vsub.s32 %v3660, %v3777
        %v3779 = vrot.slane %v2287, %v3778
        %v3780 = vsel %vm3665, %v3779, %v3775
        %v3781 = vlaneseq
        %v3782 = vshrl.u32 %v3781, 7
        %v3783 = vsub.s32 %v3641, %v3782
        %v3784 = vrot.slane %v2290, %v3783
        %v3785 = vlaneseq
        %v3786 = vshrl.u32 %v3785, 7
        %v3787 = vsub.s32 %v3646, %v3786
        %v3788 = vrot.slane %v2293, %v3787
        %v3789 = vsel %vm3651, %v3788, %v3784
        %v3790 = vlaneseq
        %v3791 = vshrl.u32 %v3790, 7
        %v3792 = vsub.s32 %v3653, %v3791
        %v3793 = vrot.slane %v2296, %v3792
        %v3794 = vsel %vm3658, %v3793, %v3789
        %v3795 = vlaneseq
        %v3796 = vshrl.u32 %v3795, 7
        %v3797 = vsub.s32 %v3660, %v3796
        %v3798 = vrot.slane %v2299, %v3797
        %v3799 = vsel %vm3665, %v3798, %v3794
        %v3800 = vlaneseq
        %v3801 = vshrl.u32 %v3800, 7
        %v3802 = vsub.s32 %v3641, %v3801
        %v3803 = vrot.slane %v2302, %v3802
        %v3804 = vlaneseq
        %v3805 = vshrl.u32 %v3804, 7
        %v3806 = vsub.s32 %v3646, %v3805
        %v3807 = vrot.slane %v2305, %v3806
        %v3808 = vsel %vm3651, %v3807, %v3803
        %v3809 = vlaneseq
        %v3810 = vshrl.u32 %v3809, 7
        %v3811 = vsub.s32 %v3653, %v3810
        %v3812 = vrot.slane %v2308, %v3811
        %v3813 = vsel %vm3658, %v3812, %v3808
        %v3814 = vlaneseq
        %v3815 = vshrl.u32 %v3814, 7
        %v3816 = vsub.s32 %v3660, %v3815
        %v3817 = vrot.slane %v2311, %v3816
        %v3818 = vsel %vm3665, %v3817, %v3813
        %v3819 = vlaneseq
        %v3820 = vshrl.u32 %v3819, 7
        %v3821 = vsub.s32 %v3641, %v3820
        %v3822 = vrot.slane %v2314, %v3821
        %v3823 = vlaneseq
        %v3824 = vshrl.u32 %v3823, 7
        %v3825 = vsub.s32 %v3646, %v3824
        %v3826 = vrot.slane %v2317, %v3825
        %v3827 = vsel %vm3651, %v3826, %v3822
        %v3828 = vlaneseq
        %v3829 = vshrl.u32 %v3828, 7
        %v3830 = vsub.s32 %v3653, %v3829
        %v3831 = vrot.slane %v2320, %v3830
        %v3832 = vsel %vm3658, %v3831, %v3827
        %v3833 = vlaneseq
        %v3834 = vshrl.u32 %v3833, 7
        %v3835 = vsub.s32 %v3660, %v3834
        %v3836 = vrot.slane %v2323, %v3835
        %v3837 = vsel %vm3665, %v3836, %v3832
        %v3838 = vlaneseq
        %v3839 = vshrl.u32 %v3838, 7
        %v3840 = vsub.s32 %v3641, %v3839
        %v3841 = vrot.slane %v2326, %v3840
        %v3842 = vlaneseq
        %v3843 = vshrl.u32 %v3842, 7
        %v3844 = vsub.s32 %v3646, %v3843
        %v3845 = vrot.slane %v2329, %v3844
        %v3846 = vsel %vm3651, %v3845, %v3841
        %v3847 = vlaneseq
        %v3848 = vshrl.u32 %v3847, 7
        %v3849 = vsub.s32 %v3653, %v3848
        %v3850 = vrot.slane %v2332, %v3849
        %v3851 = vsel %vm3658, %v3850, %v3846
        %v3852 = vlaneseq
        %v3853 = vshrl.u32 %v3852, 7
        %v3854 = vsub.s32 %v3660, %v3853
        %v3855 = vrot.slane %v2335, %v3854
        %v3856 = vsel %vm3665, %v3855, %v3851
        %v3857 = vlaneseq
        %v3858 = vshrl.u32 %v3857, 7
        %v3859 = vsub.s32 %v3641, %v3858
        %v3860 = vrot.slane %v2338, %v3859
        %v3861 = vlaneseq
        %v3862 = vshrl.u32 %v3861, 7
        %v3863 = vsub.s32 %v3646, %v3862
        %v3864 = vrot.slane %v2341, %v3863
        %v3865 = vsel %vm3651, %v3864, %v3860
        %v3866 = vlaneseq
        %v3867 = vshrl.u32 %v3866, 7
        %v3868 = vsub.s32 %v3653, %v3867
        %v3869 = vrot.slane %v2344, %v3868
        %v3870 = vsel %vm3658, %v3869, %v3865
        %v3871 = vlaneseq
        %v3872 = vshrl.u32 %v3871, 7
        %v3873 = vsub.s32 %v3660, %v3872
        %v3874 = vrot.slane %v2347, %v3873
        %v3875 = vsel %vm3665, %v3874, %v3870
        %v3876 = vlaneseq
        %v3877 = vshrl.u32 %v3876, 7
        %v3878 = vsub.s32 %v3641, %v3877
        %v3879 = vrot.slane %v2350, %v3878
        %v3880 = vlaneseq
        %v3881 = vshrl.u32 %v3880, 7
        %v3882 = vsub.s32 %v3646, %v3881
        %v3883 = vrot.slane %v2353, %v3882
        %v3884 = vsel %vm3651, %v3883, %v3879
        %v3885 = vlaneseq
        %v3886 = vshrl.u32 %v3885, 7
        %v3887 = vsub.s32 %v3653, %v3886
        %v3888 = vrot.slane %v2356, %v3887
        %v3889 = vsel %vm3658, %v3888, %v3884
        %v3890 = vlaneseq
        %v3891 = vshrl.u32 %v3890, 7
        %v3892 = vsub.s32 %v3660, %v3891
        %v3893 = vrot.slane %v2359, %v3892
        %v3894 = vsel %vm3665, %v3893, %v3889
        %v3895 = vlaneseq
        %v3896 = vshrl.u32 %v3895, 7
        %v3897 = vsub.s32 %v3641, %v3896
        %v3898 = vrot.slane %v2362, %v3897
        %v3899 = vlaneseq
        %v3900 = vshrl.u32 %v3899, 7
        %v3901 = vsub.s32 %v3646, %v3900
        %v3902 = vrot.slane %v2365, %v3901
        %v3903 = vsel %vm3651, %v3902, %v3898
        %v3904 = vlaneseq
        %v3905 = vshrl.u32 %v3904, 7
        %v3906 = vsub.s32 %v3653, %v3905
        %v3907 = vrot.slane %v2368, %v3906
        %v3908 = vsel %vm3658, %v3907, %v3903
        %v3909 = vlaneseq
        %v3910 = vshrl.u32 %v3909, 7
        %v3911 = vsub.s32 %v3660, %v3910
        %v3912 = vrot.slane %v2371, %v3911
        %v3913 = vsel %vm3665, %v3912, %v3908
        %v3914 = vlaneseq
        %v3915 = vshrl.u32 %v3914, 7
        %v3916 = vsub.s32 %v3641, %v3915
        %v3917 = vrot.slane %v2374, %v3916
        %v3918 = vlaneseq
        %v3919 = vshrl.u32 %v3918, 7
        %v3920 = vsub.s32 %v3646, %v3919
        %v3921 = vrot.slane %v2377, %v3920
        %v3922 = vsel %vm3651, %v3921, %v3917
        %v3923 = vlaneseq
        %v3924 = vshrl.u32 %v3923, 7
        %v3925 = vsub.s32 %v3653, %v3924
        %v3926 = vrot.slane %v2380, %v3925
        %v3927 = vsel %vm3658, %v3926, %v3922
        %v3928 = vlaneseq
        %v3929 = vshrl.u32 %v3928, 7
        %v3930 = vsub.s32 %v3660, %v3929
        %v3931 = vrot.slane %v2383, %v3930
        %v3932 = vsel %vm3665, %v3931, %v3927
        %v3933 = vlaneseq
        %v3934 = vshrl.u32 %v3933, 7
        %v3935 = vsub.s32 %v3641, %v3934
        %v3936 = vrot.slane %v2386, %v3935
        %v3937 = vlaneseq
        %v3938 = vshrl.u32 %v3937, 7
        %v3939 = vsub.s32 %v3646, %v3938
        %v3940 = vrot.slane %v2389, %v3939
        %v3941 = vsel %vm3651, %v3940, %v3936
        %v3942 = vlaneseq
        %v3943 = vshrl.u32 %v3942, 7
        %v3944 = vsub.s32 %v3653, %v3943
        %v3945 = vrot.slane %v2392, %v3944
        %v3946 = vsel %vm3658, %v3945, %v3941
        %v3947 = vlaneseq
        %v3948 = vshrl.u32 %v3947, 7
        %v3949 = vsub.s32 %v3660, %v3948
        %v3950 = vrot.slane %v2395, %v3949
        %v3951 = vsel %vm3665, %v3950, %v3946
        %v3952 = vsel %vm2772, %v3685, %v3666
        %v3953 = vsel %vm2774, %v3704, %v3952
        %v3954 = vsel %vm2776, %v3723, %v3953
        %v3955 = vsel %vm2778, %v3742, %v3954
        %v3956 = vsel %vm2780, %v3761, %v3955
        %v3957 = vsel %vm2782, %v3780, %v3956
        %v3958 = vsel %vm2784, %v3799, %v3957
        %v3959 = vsel %vm2772, %v3837, %v3818
        %v3960 = vsel %vm2774, %v3856, %v3959
        %v3961 = vsel %vm2776, %v3875, %v3960
        %v3962 = vsel %vm2778, %v3894, %v3961
        %v3963 = vsel %vm2780, %v3913, %v3962
        %v3964 = vsel %vm2782, %v3932, %v3963
        %v3965 = vsel %vm2784, %v3951, %v3964
        %v3968 = vsel %vm895, %v2785, %v3176
        %v3969 = vsel %vm895, %v2792, %v3183
        %vm3970 = vcmask 523264
        %v3971 = vsel %vm3970, %v3968, %v3567
        %v3972 = vsel %vm3970, %v3969, %v3574
        %vm3973 = vcmask 785408
        %v3974 = vsel %vm3973, %v3971, %v3958
        %v3975 = vsel %vm3973, %v3972, %v3965
        %3976 = vst [vmem:[%s383] sm:$0xff] %v3974
        %3977 = vst [vmem:[%s383 + $0x8] sm:$0xff] %v3975
        %s3978 = sand.u32 %s171, 1
        %s3979 = scalar_lea.sflag [#allocation10], %s3978
        %s3980 = sand.u32 %s171, 1
        %s3981 = smul.addr %s3980, 16
        %s3982 = scalar_lea.vmem [#allocation17], %s3981
        // Predicated region
        $region143: #{tpu_custom_call.1} parent=39 // pred_check
          %p3983 = pneg %p181
        $region144: #{tpu_custom_call.1} parent=39 // pred_check_branch
          %3985 = sbr.rel (%p3983) target = $region146
        $region145: #{tpu_custom_call.1} parent=39 // pred_region
          %s3986 = smul.u32 2, %s38
          %s3988 = ssub.s32 256, 256
          %3989 = vsyncadd %s3979, %s3988
          %s3990 = smul.addr %s3986, 128
          %s3991 = scalar_lea.hbm %s7, %s3990
          %s3992 = sshll.u32 %s3982, 4
          %s3993 = int_to_ptr.vmem [resolvable:$true] %s3992
          %3998 = dma.vmem_to_hbm [thread:$0]  %s3993, 256, %s3991, %s3979, 128, 128, 8
        $region146: #{tpu_custom_call.1} parent=39 // pred_fallthru
          _
      $region40: #{tpu_custom_call.1} parent=5 // pred_fallthru
        _
      %p3999 = scmp.le.s32.totalorder 2, %s33
      // Predicated region
      $region147: #{tpu_custom_call.1} parent=5 // pred_check
        %p4000 = pneg %p3999
      $region148: #{tpu_custom_call.1} parent=5 // pred_check_branch
        %4002 = sbr.rel (%p4000) target = $region150
      $region149: #{tpu_custom_call.1} parent=5 // pred_region
        %s4003 = ssub.s32 %s33, 2
        // Predicated region
        $region151: #{tpu_custom_call.1} parent=149 // pred_check
          %p4004 = pneg %p187
        $region152: #{tpu_custom_call.1} parent=149 // pred_check_branch
          %4006 = sbr.rel (%p4004) target = $region154
        $region153: #{tpu_custom_call.1} parent=149 // pred_region
          %s4007 = sand.u32 %s172, 1
          %s4008 = scalar_lea.sflag [#allocation10], %s4007
          %s4009 = sand.u32 %s172, 1
          %s4010 = smul.addr %s4009, 16
          %s4011 = scalar_lea.vmem [#allocation17], %s4010
          %4012 = dma.done %s4008, 256
        $region154: #{tpu_custom_call.1} parent=149 // pred_fallthru
          _
      $region150: #{tpu_custom_call.1} parent=5 // pred_fallthru
        _
    $region6: #{tpu_custom_call.1} parent=1 // loop_footer
      %s37 = sadd.s32 1, %s33
    $region7: #{tpu_custom_call.1} parent=1 // loop_footer_branch
      %32 = sbr.rel target = $region3
    $region8: #{tpu_custom_call.1} parent=1 // loop_exit
      _
    %4013 = vsyncpa [#allocation9], 1
    %s4014 = scalar_lea.sflag [#allocation9], 1
    %4015 = vsyncpa %s4014, 1
    %4016 = vsyncpa [#allocation12], 1
    %s4017 = scalar_lea.sflag [#allocation12], 1
    %4018 = vsyncpa %s4017, 1
    %4019 = vsyncpa [#allocation15], 1
    %s4020 = scalar_lea.sflag [#allocation15], 1
    %4021 = vsyncpa %s4020, 1
    %4022 = vsyncpa [#allocation10], 1
    %s4023 = scalar_lea.sflag [#allocation10], 1
    %4024 = vsyncpa %s4023, 1
  %4025 = vsyncmov [#allocation4]
  %s4026 = vpop.sfrf %4025
  %p4027 = scmp.eq.s32.totalorder %s4026, 0
  %p4028 = pneg %p4027
  %4030 = shalt.err (%p4028)
  %s4031 = scalar_lea.sflag [#allocation4], 1
  %4032 = vsyncmov %s4031
  %s4033 = vpop.sfrf %4032
  %p4034 = scmp.eq.s32.totalorder %s4033, 0
  %p4035 = pneg %p4034
  %4037 = shalt.err (%p4035)

</llo_original>
